<compile_context>
chip_gen: v7x
topology: tpu7x:2x2x1
jax: 0.10.0
libtpu: 0.0.40
codegen_flags: <defaults>
</compile_context>

<pallas_src>
import functools
import math

import jax
import jax.numpy as jnp
from jax import lax
from jax.experimental import pallas as pl
from jax.experimental.pallas import tpu as pltpu

_LN_EPS = 1e-6
_GRN_EPS = 1e-6
_INV_SQRT2 = 1.0 / math.sqrt(2.0)


# ----------------------------------------------------------------------------- helpers
def _itemsize(dt):
    return jnp.dtype(dt).itemsize


def _physical_vmem_bytes():
    """Per-core VMEM capacity (v5e/v6e: 128 MiB, v7x: 64 MiB) with safe fallbacks."""
    try:
        v = getattr(pltpu.get_tpu_info(), "vmem_capacity_bytes", None)
        if v:
            return int(v)
    except Exception:
        pass
    try:
        if "v7" in jax.devices()[0].device_kind.lower():
            return 64 << 20
    except Exception:
        pass
    return 128 << 20


def _const_spec(shape, index_map, single_buffer):
    """BlockSpec for an operand whose block index never changes across the grid.

    pl.Buffered(1) keeps a single VMEM copy (the default double buffering would hold a
    second, never-used copy of w1/w2).  Falls back to a plain BlockSpec if this jax
    version does not support pipeline_mode.
    """
    if single_buffer and hasattr(pl, "Buffered"):
        try:
            return pl.BlockSpec(shape, index_map, pipeline_mode=pl.Buffered(1))
        except TypeError:
            pass
    return pl.BlockSpec(shape, index_map)


def _gelu(h, approx):
    if approx:
        return jax.nn.gelu(h, approximate=True)            # tanh/exp -> EUP slot
    return 0.5 * h * (1.0 + lax.erf(h * jnp.float32(_INV_SQRT2)))  # exact (torch default)


def _matmul(lhs_f32, w_ref):
    """MXU matmul: bf16 x bf16 with f32 accumulation when weights are bf16."""
    prec = lax.Precision.HIGHEST if w_ref.dtype == jnp.float32 else None
    return jnp.dot(lhs_f32.astype(w_ref.dtype), w_ref[...],
                   preferred_element_type=jnp.float32, precision=prec)


def _dwconv_ln(xw, dww_ref, dwb_ref, lng_ref, lnb_ref, *, T, dilation):
    """Depthwise conv (k=7) on a zero-padded window xw (..., T + 6*dilation, dim) + LN."""
    f32 = jnp.float32
    w = dww_ref[...].astype(f32)                            # (7, dim)
    y = None
    for k in range(7):
        off = k * dilation
        tap = w[k] * xw[..., off:off + T, :]
        y = tap if y is None else y + tap
    y = y + dwb_ref[...].astype(f32)
    mu = jnp.mean(y, axis=-1, keepdims=True)
    var = jnp.mean(jnp.square(y - mu), axis=-1, keepdims=True)
    yn = (y - mu) * lax.rsqrt(var + _LN_EPS)
    return yn * lng_ref[...].astype(f32) + lnb_ref[...].astype(f32)


# ------------------------------------------------------------------ fused (whole-seq) path
def _fused_kernel(x_ref, dww_ref, dwb_ref, lng_ref, lnb_ref, w1_ref, b1_ref,
                  grn_g_ref, grn_b_ref, w2_ref, b2_ref, o_ref,
                  *, dilation, gelu_approx):
    f32 = jnp.float32
    Bb, T, dim = x_ref.shape
    inter = w1_ref.shape[1]
    pad = 3 * dilation

    # Depthwise-conv window with the zero halo built in VMEM (no HBM pad round trip).
    x = x_ref[...].astype(f32)                                        # dies after the conv
    zpad = jnp.zeros((Bb, pad, dim), f32)
    xw = jnp.concatenate([zpad, x, zpad], axis=1)                     # (Bb, T+2*pad, dim)
    yn = _dwconv_ln(xw, dww_ref, dwb_ref, lng_ref, lnb_ref, T=T, dilation=dilation)

    # pwconv1 + GELU.  Fold the batch block into the LHS rows to feed the MXU.
    h = _matmul(yn.reshape(Bb * T, dim), w1_ref) + b1_ref[...].astype(f32)
    h = _gelu(h, gelu_approx)                                         # (Bb*T, inter) f32

    # GRN (per batch row): L2 over time, channel-mean denominator.
    h3 = h.reshape(Bb, T, inter)
    gx = jnp.sqrt(jnp.sum(h3 * h3, axis=1, keepdims=True))            # (Bb, 1, inter)
    nx = gx / (jnp.mean(gx, axis=-1, keepdims=True) + _GRN_EPS)
    hg = grn_g_ref[...].astype(f32) * (h3 * nx) + grn_b_ref[...].astype(f32) + h3

    # pwconv2 (cast fused into the GRN epilogue) + residual re-read from the ref.
    out = _matmul(hg.reshape(Bb * T, inter), w2_ref) + b2_ref[...].astype(f32)
    out = out.reshape(Bb, T, dim) + x_ref[...].astype(f32)
    o_ref[...] = out.astype(o_ref.dtype)


def _run_fused(x, p, *, Bb, dilation, gelu_approx, vmem_limit, single_buffer):
    B, T, dim = x.shape
    inter = p["w1"].shape[1]
    kernel = functools.partial(_fused_kernel, dilation=dilation, gelu_approx=gelu_approx)
    c2 = lambda i: (0, 0)
    cs = lambda shape: _const_spec(shape, c2, single_buffer)
    return pl.pallas_call(
        kernel,
        out_shape=jax.ShapeDtypeStruct((B, T, dim), x.dtype),
        grid_spec=pltpu.PrefetchScalarGridSpec(
            num_scalar_prefetch=0,
            grid=(B // Bb,),
            in_specs=[
                pl.BlockSpec((Bb, T, dim), lambda i: (i, 0, 0)),
                cs((7, dim)), cs((1, dim)), cs((1, dim)), cs((1, dim)),
                cs((dim, inter)), cs((1, inter)), cs((1, inter)), cs((1, inter)),
                cs((inter, dim)), cs((1, dim)),
            ],
            out_specs=pl.BlockSpec((Bb, T, dim), lambda i: (i, 0, 0)),
        ),
        compiler_params=pltpu.CompilerParams(
            dimension_semantics=("parallel",),
            vmem_limit_bytes=vmem_limit),
    )(x, p["dw_w"], p["dw_b"], p["ln_g"], p["ln_b"], p["w1"], p["b1"],
      p["grn_g"], p["grn_b"], p["w2"], p["b2"])


# --------------------------------------------------------- seq-tiled two-pass GRN path
def _tiled_pass1_kernel(xp_ref, xc_ref, xn_ref, dww_ref, dwb_ref, lng_ref, lnb_ref,
                        w1_ref, b1_ref, h_ref, ssq_ref, *, dilation, gelu_approx):
    """dwconv + LN + pwconv1 + GELU for one (batch, time-tile); accumulate sum(h^2)."""
    f32 = jnp.float32
    tq, dim = xc_ref.shape[1], xc_ref.shape[2]
    pad = 3 * dilation
    t = pl.program_id(1)
    nt = pl.num_programs(1)

    xc = xc_ref[0].astype(f32)                                        # (tq, dim)
    prev = jnp.where(t > 0, xp_ref[0][tq - pad:, :].astype(f32), 0.0)  # (pad, dim)
    nxt = jnp.where(t + 1 < nt, xn_ref[0][:pad, :].astype(f32), 0.0)   # (pad, dim)
    xw = jnp.concatenate([prev, xc, nxt], axis=0)                      # (tq + 2*pad, dim)

    yn = _dwconv_ln(xw, dww_ref, dwb_ref, lng_ref, lnb_ref, T=tq, dilation=dilation)
    h = _matmul(yn, w1_ref) + b1_ref[...].astype(f32)
    h = _gelu(h, gelu_approx)                                          # (tq, inter) f32

    h_ref[0] = h.astype(h_ref.dtype)

    part = jnp.sum(h * h, axis=0, keepdims=True)                       # (1, inter)

    @pl.when(t == 0)
    def _init():
        ssq_ref[0] = jnp.zeros_like(part)

    ssq_ref[0] = ssq_ref[0] + part


def _tiled_pass2_kernel(h_ref, ssq_ref, x_ref, grn_g_ref, grn_b_ref, w2_ref, b2_ref,
                        o_ref):
    """GRN + pwconv2 + residual for one (batch, time-tile)."""
    f32 = jnp.float32
    h = h_ref[0].astype(f32)                                           # (tq, inter)
    gx = jnp.sqrt(ssq_ref[0].astype(f32))                              # (1, inter)
    nx = gx / (jnp.mean(gx, axis=-1, keepdims=True) + _GRN_EPS)
    hg = grn_g_ref[...].astype(f32) * (h * nx) + grn_b_ref[...].astype(f32) + h
    out = _matmul(hg, w2_ref) + b2_ref[...].astype(f32)
    out = out + x_ref[0].astype(f32)
    o_ref[0] = out.astype(o_ref.dtype)


def _run_tiled(x, p, *, tq, dilation, gelu_approx, vmem_limit, single_buffer):
    B, T, dim = x.shape
    inter = p["w1"].shape[1]
    nt = T // tq
    h_dtype = p["w2"].dtype
    c2 = lambda b, t: (0, 0)
    cs = lambda shape: _const_spec(shape, c2, single_buffer)

    k1 = functools.partial(_tiled_pass1_kernel, dilation=dilation, gelu_approx=gelu_approx)
    h, ssq = pl.pallas_call(
        k1,
        out_shape=(jax.ShapeDtypeStruct((B, T, inter), h_dtype),
                   jax.ShapeDtypeStruct((B, 1, inter), jnp.float32)),
        grid_spec=pltpu.PrefetchScalarGridSpec(
            num_scalar_prefetch=0,
            grid=(B, nt),
            in_specs=[
                # prev / current / next time tiles (clamped at the edges; masked in-kernel)
                pl.BlockSpec((1, tq, dim), lambda b, t: (b, jnp.maximum(t - 1, 0), 0)),
                pl.BlockSpec((1, tq, dim), lambda b, t: (b, t, 0)),
                pl.BlockSpec((1, tq, dim), lambda b, t: (b, jnp.minimum(t + 1, nt - 1), 0)),
                cs((7, dim)), cs((1, dim)), cs((1, dim)), cs((1, dim)),
                cs((dim, inter)), cs((1, inter)),
            ],
            out_specs=[
                pl.BlockSpec((1, tq, inter), lambda b, t: (b, t, 0)),
                pl.BlockSpec((1, 1, inter), lambda b, t: (b, 0, 0)),   # ssq accumulator
            ],
        ),
        compiler_params=pltpu.CompilerParams(
            dimension_semantics=("parallel", "arbitrary"),
            vmem_limit_bytes=vmem_limit),
    )(x, x, x, p["dw_w"], p["dw_b"], p["ln_g"], p["ln_b"], p["w1"], p["b1"])

    return pl.pallas_call(
        _tiled_pass2_kernel,
        out_shape=jax.ShapeDtypeStruct((B, T, dim), x.dtype),
        grid_spec=pltpu.PrefetchScalarGridSpec(
            num_scalar_prefetch=0,
            grid=(B, nt),
            in_specs=[
                pl.BlockSpec((1, tq, inter), lambda b, t: (b, t, 0)),
                pl.BlockSpec((1, 1, inter), lambda b, t: (b, 0, 0)),
                pl.BlockSpec((1, tq, dim), lambda b, t: (b, t, 0)),
                cs((1, inter)), cs((1, inter)),
                cs((inter, dim)), cs((1, dim)),
            ],
            out_specs=pl.BlockSpec((1, tq, dim), lambda b, t: (b, t, 0)),
        ),
        compiler_params=pltpu.CompilerParams(
            dimension_semantics=("parallel", "parallel"),
            vmem_limit_bytes=vmem_limit),
    )(h, ssq, x, p["grn_g"], p["grn_b"], p["w2"], p["b2"])


# -------------------------------------------------------------------- sizing / dispatch
def _est_fused_vmem(Bb, T, dim, inter, pad, x_dtype, mm_dtype, param_bytes, single_w):
    io = 2 * 2 * Bb * T * dim * _itemsize(x_dtype)                    # in + out, 2-buffered
    w = param_bytes * (1 if single_w else 2)
    act = 4 * (Bb * (T + 2 * pad) * dim + 2 * Bb * T * dim + 2 * Bb * T * inter)
    act += _itemsize(mm_dtype) * Bb * T * (dim + inter)                # matmul LHS casts
    return int(1.25 * (io + w + act)) + (2 << 20)


def _est_tiled_vmem(tq, dim, inter, pad, x_dtype, h_dtype, param_bytes, single_w):
    w = param_bytes * (1 if single_w else 2)
    p1 = (2 * 3 * tq * dim * _itemsize(x_dtype) + 2 * tq * inter * _itemsize(h_dtype)
          + 2 * 4 * inter + w
          + 4 * ((tq + 2 * pad) * dim + tq * dim + tq * inter)
          + _itemsize(h_dtype) * tq * dim)
    p2 = (2 * tq * inter * _itemsize(h_dtype) + 2 * 4 * inter
          + 2 * 2 * tq * dim * _itemsize(x_dtype) + w
          + 4 * (2 * tq * inter + tq * dim)
          + _itemsize(h_dtype) * tq * inter)
    return int(1.25 * max(p1, p2)) + (2 << 20)


def _pick_batch_block(B, T, budget, est_fn):
    target = max(1, -(-256 // max(T, 1)))                              # aim for ~256 LHS rows
    for d in sorted((d for d in range(1, B + 1) if B % d == 0), reverse=True):
        if d <= target and est_fn(d) <= budget:
            return d
    return None


def _pick_seq_block(T, pad, target=512):
    best = None
    hi = min(T // 2, target)
    for d in range(8, hi + 1, 8):
        if T % d == 0 and d >= pad:
            best = d
    return best


def _convnext_v2_block_impl(x, params, *, dilation, seq_block, gelu_approx,
                            vmem_limit_bytes, single_buffer_weights):
    B, T, dim = x.shape
    inter = params["w1"].shape[1]
    pad = 3 * dilation
    assert params["w1"].shape == (dim, inter), "w1 must be pre-transposed to (dim, inter)"
    assert params["w2"].shape == (inter, dim), "w2 must be pre-transposed to (inter, dim)"

    budget = int(_physical_vmem_bytes() * 0.75)        # headroom for Mosaic scratch (~48 MiB on v7x)
    param_bytes = sum(int(v.size) * _itemsize(v.dtype) for v in params.values())

    def fused_est(bb):
        return _est_fused_vmem(bb, T, dim, inter, pad, x.dtype, params["w1"].dtype,
                               param_bytes, single_buffer_weights)

    if seq_block is None:
        bb = _pick_batch_block(B, T, budget, fused_est)
        if bb is None:
            seq_block = _pick_seq_block(T, pad)
        if bb is not None or seq_block is None:
            bb = bb if bb is not None else 1
            # TODO(synk): if no 8-aligned seq tile divides T we still run the whole-sequence
            # kernel even when it exceeds the VMEM budget; ragged seq tiling not implemented.
            limit = vmem_limit_bytes or min(budget, max(32 << 20, fused_est(bb)))
            return _run_fused(x, params, Bb=bb, dilation=dilation, gelu_approx=gelu_approx,
                              vmem_limit=limit, single_buffer=single_buffer_weights)

    tq = int(seq_block)
    if T % tq or tq % 8 or tq < pad or T // tq < 2:
        raise ValueError(f"seq_block={tq} must divide T={T}, be a multiple of 8, "
                         f"be >= pad={pad}, and give at least 2 tiles")
    limit = vmem_limit_bytes or min(budget, max(
        32 << 20, _est_tiled_vmem(tq, dim, inter, pad, x.dtype, params["w2"].dtype,
                                  param_bytes, single_buffer_weights)))
    return _run_tiled(x, params, tq=tq, dilation=dilation, gelu_approx=gelu_approx,
                      vmem_limit=limit, single_buffer=single_buffer_weights)


def convnext_v2_block(x, params, *, dilation=1, seq_block=None, gelu_approx=False,
                      vmem_limit_bytes=None, single_buffer_weights=True):
    """x: (batch, seq, dim). params as laid out by init_convnext_v2_block_params."""
    if single_buffer_weights:
        try:
            return _convnext_v2_block_impl(
                x, params, dilation=dilation, seq_block=seq_block, gelu_approx=gelu_approx,
                vmem_limit_bytes=vmem_limit_bytes, single_buffer_weights=True)
        except Exception:
            # Safety net: retry with default (double) weight buffering if this jax/libtpu
            # rejects pl.Buffered(1) on constant-index blocks.
            pass
    return _convnext_v2_block_impl(
        x, params, dilation=dilation, seq_block=seq_block, gelu_approx=gelu_approx,
        vmem_limit_bytes=vmem_limit_bytes, single_buffer_weights=False)


# ------------------------------------------------------------------------- params / ref
def init_convnext_v2_block_params(key, dim, intermediate_dim, dtype=jnp.float32,
                                  matmul_dtype=jnp.bfloat16):
    """Parameters in kernel layout (transposes done once here).  w1/w2 are stored in
    matmul_dtype (bf16 by default) so both pwconvs run on the MXU's bf16 path."""
    ks = jax.random.split(key, 8)
    b_conv = 1.0 / math.sqrt(7.0)
    b_l1 = 1.0 / math.sqrt(dim)
    b_l2 = 1.0 / math.sqrt(intermediate_dim)
    f32 = jnp.float32
    return {
        # depthwise conv: torch weight (dim,1,7) stored tap-major as (7, dim)
        "dw_w": jax.random.uniform(ks[0], (7, dim), dtype, -b_conv, b_conv),
        "dw_b": jax.random.uniform(ks[1], (1, dim), dtype, -b_conv, b_conv),
        "ln_g": jnp.ones((1, dim), dtype),
        "ln_b": jnp.zeros((1, dim), dtype),
        # pwconv1: torch (inter, dim) stored transposed as (dim, inter)
        "w1": jax.random.uniform(ks[2], (dim, intermediate_dim), f32, -b_l1, b_l1
                                 ).astype(matmul_dtype),
        "b1": jax.random.uniform(ks[3], (1, intermediate_dim), dtype, -b_l1, b_l1),
        # GRN params are zeros at torch init; small random values so the test exercises GRN.
        "grn_g": 0.1 * jax.random.normal(ks[4], (1, intermediate_dim), dtype),
        "grn_b": 0.1 * jax.random.normal(ks[5], (1, intermediate_dim), dtype),
        # pwconv2: torch (dim, inter) stored transposed as (inter, dim)
        "w2": jax.random.uniform(ks[6], (intermediate_dim, dim), f32, -b_l2, b_l2
                                 ).astype(matmul_dtype),
        "b2": jax.random.uniform(ks[7], (1, dim), dtype, -b_l2, b_l2),
    }


def convnext_v2_block_ref(x, params, dilation=1):
    """Pure-JAX f32 reference (independent dwconv via lax.conv_general_dilated)."""
    B, T, dim = x.shape
    pad = 3 * dilation
    f32 = jnp.float32
    prec = lax.Precision.HIGHEST
    lhs = jnp.transpose(x, (0, 2, 1)).astype(f32)                                 # (B,C,T)
    rhs = jnp.transpose(params["dw_w"].astype(f32), (1, 0))[:, None, :]           # (C,1,7)
    y = lax.conv_general_dilated(
        lhs, rhs, window_strides=(1,), padding=[(pad, pad)],
        rhs_dilation=(dilation,), feature_group_count=dim,
        dimension_numbers=("NCH", "OIH", "NCH"))
    y = jnp.transpose(y, (0, 2, 1)) + params["dw_b"].astype(f32)                  # (B,T,C)
    mu = y.mean(-1, keepdims=True)
    var = ((y - mu) ** 2).mean(-1, keepdims=True)
    y = (y - mu) / jnp.sqrt(var + _LN_EPS) * params["ln_g"].astype(f32) \
        + params["ln_b"].astype(f32)
    h = jnp.matmul(y, params["w1"].astype(f32), precision=prec) + params["b1"].astype(f32)
    h = 0.5 * h * (1.0 + lax.erf(h * jnp.float32(_INV_SQRT2)))
    gx = jnp.sqrt(jnp.sum(h * h, axis=1, keepdims=True))                          # (B,1,I)
    nx = gx / (gx.mean(-1, keepdims=True) + _GRN_EPS)
    h = params["grn_g"].astype(f32) * (h * nx) + params["grn_b"].astype(f32) + h
    out = jnp.matmul(h, params["w2"].astype(f32), precision=prec) + params["b2"].astype(f32)
    return (x.astype(f32) + out).astype(x.dtype)


# ------------------------------------------------------------------------------- tests
if __name__ == "__main__":
    key = jax.random.PRNGKey(0)
    kx, kp = jax.random.split(key)

    B, dim, inter = 2, 128, 256

    # --- Test A: f32 matmul weights, fused whole-sequence path (batch-blocked MXU LHS) ---
    T = 16
    x = jax.random.normal(kx, (B, T, dim), jnp.float32)
    p32 = init_convnext_v2_block_params(kp, dim, inter, matmul_dtype=jnp.float32)
    y = jax.block_until_ready(convnext_v2_block(x, p32, dilation=1))
    y_ref = convnext_v2_block_ref(x, p32, dilation=1)
    assert y.shape == (B, T, dim)
    err = float(jnp.max(jnp.abs(y.astype(jnp.float32) - y_ref.astype(jnp.float32))))
    assert err < 2e-3, f"fused f32 max abs err = {err}"

    # --- Test B: f32 weights, seq-tiled two-pass GRN path, dilation=2 ---
    T2 = 32
    x2 = jax.random.normal(jax.random.PRNGKey(1), (B, T2, dim), jnp.float32)
    y2 = jax.block_until_ready(convnext_v2_block(x2, p32, dilation=2, seq_block=8))
    y2_ref = convnext_v2_block_ref(x2, p32, dilation=2)
    err2 = float(jnp.max(jnp.abs(y2.astype(jnp.float32) - y2_ref.astype(jnp.float32))))
    assert err2 < 2e-3, f"tiled f32 max abs err = {err2}"

    # --- Test C: bf16 matmul weights (default init), fused path, loose tolerance ---
    pbf = init_convnext_v2_block_params(kp, dim, inter)                # w1/w2 in bf16
    y3 = jax.block_until_ready(convnext_v2_block(x, pbf, dilation=1))
    y3_ref = convnext_v2_block_ref(x, pbf, dilation=1)
    err3 = float(jnp.max(jnp.abs(y3.astype(jnp.float32) - y3_ref.astype(jnp.float32))))
    assert err3 < 1e-1, f"fused bf16 max abs err = {err3}"

    print("KERNEL_OK")
</pallas_src>

<mosaic_0001>
module attributes {stable_mosaic.version = 11 : i64} {
  func.func @_fused_kernel(%arg0: i32, %arg1: memref<2x16x128xf32, #tpu.memory_space<vmem>>, %arg2: memref<7x128xf32, #tpu.memory_space<vmem>>, %arg3: memref<1x128xf32, #tpu.memory_space<vmem>>, %arg4: memref<1x128xf32, #tpu.memory_space<vmem>>, %arg5: memref<1x128xf32, #tpu.memory_space<vmem>>, %arg6: memref<128x256xf32, #tpu.memory_space<vmem>>, %arg7: memref<1x256xf32, #tpu.memory_space<vmem>>, %arg8: memref<1x256xf32, #tpu.memory_space<vmem>>, %arg9: memref<1x256xf32, #tpu.memory_space<vmem>>, %arg10: memref<256x128xf32, #tpu.memory_space<vmem>>, %arg11: memref<1x128xf32, #tpu.memory_space<vmem>>, %arg12: memref<2x16x128xf32, #tpu.memory_space<vmem>>) attributes {dimension_semantics = [#tpu.dimension_semantics<parallel>], iteration_bounds = array<i64: 1>, scalar_prefetch = 0 : i64, scratch_operands = 0 : i64, tpu.core_type = #tpu.core_type<tc>, window_params = [{transform_indices = @transform_0, window_bounds = array<i64: 2, 16, 128>}, {pipeline_mode = #tpu.pipeline_mode<synchronous>, transform_indices = @transform_1, window_bounds = array<i64: 7, 128>}, {pipeline_mode = #tpu.pipeline_mode<synchronous>, transform_indices = @transform_2, window_bounds = array<i64: 1, 128>}, {pipeline_mode = #tpu.pipeline_mode<synchronous>, transform_indices = @transform_3, window_bounds = array<i64: 1, 128>}, {pipeline_mode = #tpu.pipeline_mode<synchronous>, transform_indices = @transform_4, window_bounds = array<i64: 1, 128>}, {pipeline_mode = #tpu.pipeline_mode<synchronous>, transform_indices = @transform_5, window_bounds = array<i64: 128, 256>}, {pipeline_mode = #tpu.pipeline_mode<synchronous>, transform_indices = @transform_6, window_bounds = array<i64: 1, 256>}, {pipeline_mode = #tpu.pipeline_mode<synchronous>, transform_indices = @transform_7, window_bounds = array<i64: 1, 256>}, {pipeline_mode = #tpu.pipeline_mode<synchronous>, transform_indices = @transform_8, window_bounds = array<i64: 1, 256>}, {pipeline_mode = #tpu.pipeline_mode<synchronous>, transform_indices = @transform_9, window_bounds = array<i64: 256, 128>}, {pipeline_mode = #tpu.pipeline_mode<synchronous>, transform_indices = @transform_10, window_bounds = array<i64: 1, 128>}, {transform_indices = @transform_11, window_bounds = array<i64: 2, 16, 128>}]} {
    %c0 = arith.constant 0 : index
    %c0_0 = arith.constant 0 : index
    %c0_1 = arith.constant 0 : index
    %0 = vector.load %arg1[%c0, %c0_0, %c0_1] : memref<2x16x128xf32, #tpu.memory_space<vmem>>, vector<2x16x128xf32>
    %cst = arith.constant 0.000000e+00 : f32
    %1 = vector.broadcast %cst : f32 to vector<2x3x128xf32>
    %2 = tpu.concatenate %1, %0, %1 in 1 : vector<2x3x128xf32>, vector<2x16x128xf32>, vector<2x3x128xf32> -> vector<2x22x128xf32>
    %c0_2 = arith.constant 0 : index
    %c0_3 = arith.constant 0 : index
    %3 = vector.load %arg2[%c0_2, %c0_3] : memref<7x128xf32, #tpu.memory_space<vmem>>, vector<7x128xf32>
    %4 = vector.extract_strided_slice %3 {offsets = [0, 0], sizes = [1, 128], strides = [1, 1]} : vector<7x128xf32> to vector<1x128xf32>
    %5 = vector.shape_cast %4 : vector<1x128xf32> to vector<128xf32>
    %6 = vector.extract_strided_slice %2 {offsets = [0, 0, 0], sizes = [2, 16, 128], strides = [1, 1, 1]} : vector<2x22x128xf32> to vector<2x16x128xf32>
    %7 = vector.shape_cast %5 : vector<128xf32> to vector<1x1x128xf32>
    %8 = vector.broadcast %7 : vector<1x1x128xf32> to vector<2x16x128xf32>
    %9 = arith.mulf %8, %6 : vector<2x16x128xf32>
    %10 = vector.extract_strided_slice %3 {offsets = [1, 0], sizes = [1, 128], strides = [1, 1]} : vector<7x128xf32> to vector<1x128xf32>
    %11 = vector.shape_cast %10 : vector<1x128xf32> to vector<128xf32>
    %12 = vector.extract_strided_slice %2 {offsets = [0, 1, 0], sizes = [2, 16, 128], strides = [1, 1, 1]} : vector<2x22x128xf32> to vector<2x16x128xf32>
    %13 = vector.shape_cast %11 : vector<128xf32> to vector<1x1x128xf32>
    %14 = vector.broadcast %13 : vector<1x1x128xf32> to vector<2x16x128xf32>
    %15 = arith.mulf %14, %12 : vector<2x16x128xf32>
    %16 = arith.addf %9, %15 : vector<2x16x128xf32>
    %17 = vector.extract_strided_slice %3 {offsets = [2, 0], sizes = [1, 128], strides = [1, 1]} : vector<7x128xf32> to vector<1x128xf32>
    %18 = vector.shape_cast %17 : vector<1x128xf32> to vector<128xf32>
    %19 = vector.extract_strided_slice %2 {offsets = [0, 2, 0], sizes = [2, 16, 128], strides = [1, 1, 1]} : vector<2x22x128xf32> to vector<2x16x128xf32>
    %20 = vector.shape_cast %18 : vector<128xf32> to vector<1x1x128xf32>
    %21 = vector.broadcast %20 : vector<1x1x128xf32> to vector<2x16x128xf32>
    %22 = arith.mulf %21, %19 : vector<2x16x128xf32>
    %23 = arith.addf %16, %22 : vector<2x16x128xf32>
    %24 = vector.extract_strided_slice %3 {offsets = [3, 0], sizes = [1, 128], strides = [1, 1]} : vector<7x128xf32> to vector<1x128xf32>
    %25 = vector.shape_cast %24 : vector<1x128xf32> to vector<128xf32>
    %26 = vector.extract_strided_slice %2 {offsets = [0, 3, 0], sizes = [2, 16, 128], strides = [1, 1, 1]} : vector<2x22x128xf32> to vector<2x16x128xf32>
    %27 = vector.shape_cast %25 : vector<128xf32> to vector<1x1x128xf32>
    %28 = vector.broadcast %27 : vector<1x1x128xf32> to vector<2x16x128xf32>
    %29 = arith.mulf %28, %26 : vector<2x16x128xf32>
    %30 = arith.addf %23, %29 : vector<2x16x128xf32>
    %31 = vector.extract_strided_slice %3 {offsets = [4, 0], sizes = [1, 128], strides = [1, 1]} : vector<7x128xf32> to vector<1x128xf32>
    %32 = vector.shape_cast %31 : vector<1x128xf32> to vector<128xf32>
    %33 = vector.extract_strided_slice %2 {offsets = [0, 4, 0], sizes = [2, 16, 128], strides = [1, 1, 1]} : vector<2x22x128xf32> to vector<2x16x128xf32>
    %34 = vector.shape_cast %32 : vector<128xf32> to vector<1x1x128xf32>
    %35 = vector.broadcast %34 : vector<1x1x128xf32> to vector<2x16x128xf32>
    %36 = arith.mulf %35, %33 : vector<2x16x128xf32>
    %37 = arith.addf %30, %36 : vector<2x16x128xf32>
    %38 = vector.extract_strided_slice %3 {offsets = [5, 0], sizes = [1, 128], strides = [1, 1]} : vector<7x128xf32> to vector<1x128xf32>
    %39 = vector.shape_cast %38 : vector<1x128xf32> to vector<128xf32>
    %40 = vector.extract_strided_slice %2 {offsets = [0, 5, 0], sizes = [2, 16, 128], strides = [1, 1, 1]} : vector<2x22x128xf32> to vector<2x16x128xf32>
    %41 = vector.shape_cast %39 : vector<128xf32> to vector<1x1x128xf32>
    %42 = vector.broadcast %41 : vector<1x1x128xf32> to vector<2x16x128xf32>
    %43 = arith.mulf %42, %40 : vector<2x16x128xf32>
    %44 = arith.addf %37, %43 : vector<2x16x128xf32>
    %45 = vector.extract_strided_slice %3 {offsets = [6, 0], sizes = [1, 128], strides = [1, 1]} : vector<7x128xf32> to vector<1x128xf32>
    %46 = vector.shape_cast %45 : vector<1x128xf32> to vector<128xf32>
    %47 = vector.extract_strided_slice %2 {offsets = [0, 6, 0], sizes = [2, 16, 128], strides = [1, 1, 1]} : vector<2x22x128xf32> to vector<2x16x128xf32>
    %48 = vector.shape_cast %46 : vector<128xf32> to vector<1x1x128xf32>
    %49 = vector.broadcast %48 : vector<1x1x128xf32> to vector<2x16x128xf32>
    %50 = arith.mulf %49, %47 : vector<2x16x128xf32>
    %51 = arith.addf %44, %50 : vector<2x16x128xf32>
    %c0_4 = arith.constant 0 : index
    %c0_5 = arith.constant 0 : index
    %52 = vector.load %arg3[%c0_4, %c0_5] : memref<1x128xf32, #tpu.memory_space<vmem>>, vector<1x128xf32>
    %53 = vector.shape_cast %52 : vector<1x128xf32> to vector<1x1x128xf32>
    %54 = vector.broadcast %53 : vector<1x1x128xf32> to vector<2x16x128xf32>
    %55 = arith.addf %51, %54 : vector<2x16x128xf32>
    %cst_6 = arith.constant dense<0.000000e+00> : vector<2x16xf32>
    %56 = vector.multi_reduction <add>, %55, %cst_6 [2] : vector<2x16x128xf32> to vector<2x16xf32>
    %57 = vector.shape_cast %56 : vector<2x16xf32> to vector<2x16x1xf32>
    %cst_7 = arith.constant 1.280000e+02 : f32
    %58 = vector.broadcast %cst_7 : f32 to vector<2x16x1xf32>
    %59 = arith.divf %57, %58 : vector<2x16x1xf32>
    %60 = vector.broadcast %59 : vector<2x16x1xf32> to vector<2x16x128xf32>
    %61 = arith.subf %55, %60 : vector<2x16x128xf32>
    %62 = arith.mulf %61, %61 : vector<2x16x128xf32>
    %cst_8 = arith.constant dense<0.000000e+00> : vector<2x16xf32>
    %63 = vector.multi_reduction <add>, %62, %cst_8 [2] : vector<2x16x128xf32> to vector<2x16xf32>
    %64 = vector.shape_cast %63 : vector<2x16xf32> to vector<2x16x1xf32>
    %cst_9 = arith.constant 1.280000e+02 : f32
    %65 = vector.broadcast %cst_9 : f32 to vector<2x16x1xf32>
    %66 = arith.divf %64, %65 : vector<2x16x1xf32>
    %67 = vector.broadcast %59 : vector<2x16x1xf32> to vector<2x16x128xf32>
    %68 = arith.subf %55, %67 : vector<2x16x128xf32>
    %cst_10 = arith.constant 9.99999997E-7 : f32
    %69 = vector.broadcast %cst_10 : f32 to vector<2x16x1xf32>
    %70 = arith.addf %66, %69 : vector<2x16x1xf32>
    %71 = math.rsqrt %70 : vector<2x16x1xf32>
    %72 = vector.broadcast %71 : vector<2x16x1xf32> to vector<2x16x128xf32>
    %73 = arith.mulf %68, %72 : vector<2x16x128xf32>
    %c0_11 = arith.constant 0 : index
    %c0_12 = arith.constant 0 : index
    %74 = vector.load %arg4[%c0_11, %c0_12] : memref<1x128xf32, #tpu.memory_space<vmem>>, vector<1x128xf32>
    %75 = vector.shape_cast %74 : vector<1x128xf32> to vector<1x1x128xf32>
    %76 = vector.broadcast %75 : vector<1x1x128xf32> to vector<2x16x128xf32>
    %77 = arith.mulf %73, %76 : vector<2x16x128xf32>
    %c0_13 = arith.constant 0 : index
    %c0_14 = arith.constant 0 : index
    %78 = vector.load %arg5[%c0_13, %c0_14] : memref<1x128xf32, #tpu.memory_space<vmem>>, vector<1x128xf32>
    %79 = vector.shape_cast %78 : vector<1x128xf32> to vector<1x1x128xf32>
    %80 = vector.broadcast %79 : vector<1x1x128xf32> to vector<2x16x128xf32>
    %81 = arith.addf %77, %80 : vector<2x16x128xf32>
    %82 = vector.shape_cast %81 : vector<2x16x128xf32> to vector<32x128xf32>
    %c0_15 = arith.constant 0 : index
    %c0_16 = arith.constant 0 : index
    %83 = vector.load %arg6[%c0_15, %c0_16] : memref<128x256xf32, #tpu.memory_space<vmem>>, vector<128x256xf32>
    %cst_17 = arith.constant dense<0.000000e+00> : vector<32x256xf32>
    %84 = tpu.matmul %82, %83, %cst_17 {dimension_numbers = #tpu.dot_dimension_numbers<[1], [0], [0], [1], [0, 0, 1, 1], [], []>, precision = #tpu.contract_precision<fp32>} : vector<32x128xf32>, vector<128x256xf32>, vector<32x256xf32> -> vector<32x256xf32>
    %c0_18 = arith.constant 0 : index
    %c0_19 = arith.constant 0 : index
    %85 = vector.load %arg7[%c0_18, %c0_19] : memref<1x256xf32, #tpu.memory_space<vmem>>, vector<1x256xf32>
    %86 = vector.broadcast %85 : vector<1x256xf32> to vector<32x256xf32>
    %87 = arith.addf %84, %86 : vector<32x256xf32>
    %cst_20 = arith.constant 5.000000e-01 : f32
    %88 = vector.broadcast %cst_20 : f32 to vector<32x256xf32>
    %89 = arith.mulf %88, %87 : vector<32x256xf32>
    %cst_21 = arith.constant 0.707106769 : f32
    %90 = vector.broadcast %cst_21 : f32 to vector<32x256xf32>
    %91 = arith.mulf %87, %90 : vector<32x256xf32>
    %92 = math.erf %91 : vector<32x256xf32>
    %cst_22 = arith.constant 1.000000e+00 : f32
    %93 = vector.broadcast %cst_22 : f32 to vector<32x256xf32>
    %94 = arith.addf %93, %92 : vector<32x256xf32>
    %95 = arith.mulf %89, %94 : vector<32x256xf32>
    %96 = vector.shape_cast %95 : vector<32x256xf32> to vector<2x16x256xf32>
    %97 = arith.mulf %96, %96 : vector<2x16x256xf32>
    %cst_23 = arith.constant dense<0.000000e+00> : vector<2x256xf32>
    %98 = vector.multi_reduction <add>, %97, %cst_23 [1] : vector<2x16x256xf32> to vector<2x256xf32>
    %99 = vector.shape_cast %98 : vector<2x256xf32> to vector<2x1x256xf32>
    %100 = math.sqrt %99 : vector<2x1x256xf32>
    %cst_24 = arith.constant dense<0.000000e+00> : vector<2x1xf32>
    %101 = vector.multi_reduction <add>, %100, %cst_24 [2] : vector<2x1x256xf32> to vector<2x1xf32>
    %102 = vector.shape_cast %101 : vector<2x1xf32> to vector<2x1x1xf32>
    %cst_25 = arith.constant 2.560000e+02 : f32
    %103 = vector.broadcast %cst_25 : f32 to vector<2x1x1xf32>
    %104 = arith.divf %102, %103 : vector<2x1x1xf32>
    %cst_26 = arith.constant 9.99999997E-7 : f32
    %105 = vector.broadcast %cst_26 : f32 to vector<2x1x1xf32>
    %106 = arith.addf %104, %105 : vector<2x1x1xf32>
    %107 = vector.broadcast %106 : vector<2x1x1xf32> to vector<2x1x256xf32>
    %108 = arith.divf %100, %107 : vector<2x1x256xf32>
    %c0_27 = arith.constant 0 : index
    %c0_28 = arith.constant 0 : index
    %109 = vector.load %arg8[%c0_27, %c0_28] : memref<1x256xf32, #tpu.memory_space<vmem>>, vector<1x256xf32>
    %110 = vector.broadcast %108 : vector<2x1x256xf32> to vector<2x16x256xf32>
    %111 = arith.mulf %96, %110 : vector<2x16x256xf32>
    %112 = vector.shape_cast %109 : vector<1x256xf32> to vector<1x1x256xf32>
    %113 = vector.broadcast %112 : vector<1x1x256xf32> to vector<2x16x256xf32>
    %114 = arith.mulf %113, %111 : vector<2x16x256xf32>
    %c0_29 = arith.constant 0 : index
    %c0_30 = arith.constant 0 : index
    %115 = vector.load %arg9[%c0_29, %c0_30] : memref<1x256xf32, #tpu.memory_space<vmem>>, vector<1x256xf32>
    %116 = vector.shape_cast %115 : vector<1x256xf32> to vector<1x1x256xf32>
    %117 = vector.broadcast %116 : vector<1x1x256xf32> to vector<2x16x256xf32>
    %118 = arith.addf %114, %117 : vector<2x16x256xf32>
    %119 = arith.addf %118, %96 : vector<2x16x256xf32>
    %120 = vector.shape_cast %119 : vector<2x16x256xf32> to vector<32x256xf32>
    %c0_31 = arith.constant 0 : index
    %c0_32 = arith.constant 0 : index
    %121 = vector.load %arg10[%c0_31, %c0_32] : memref<256x128xf32, #tpu.memory_space<vmem>>, vector<256x128xf32>
    %cst_33 = arith.constant dense<0.000000e+00> : vector<32x128xf32>
    %122 = tpu.matmul %120, %121, %cst_33 {dimension_numbers = #tpu.dot_dimension_numbers<[1], [0], [0], [1], [0, 0, 1, 1], [], []>, precision = #tpu.contract_precision<fp32>} : vector<32x256xf32>, vector<256x128xf32>, vector<32x128xf32> -> vector<32x128xf32>
    %c0_34 = arith.constant 0 : index
    %c0_35 = arith.constant 0 : index
    %123 = vector.load %arg11[%c0_34, %c0_35] : memref<1x128xf32, #tpu.memory_space<vmem>>, vector<1x128xf32>
    %124 = vector.broadcast %123 : vector<1x128xf32> to vector<32x128xf32>
    %125 = arith.addf %122, %124 : vector<32x128xf32>
    %126 = vector.shape_cast %125 : vector<32x128xf32> to vector<2x16x128xf32>
    %c0_36 = arith.constant 0 : index
    %c0_37 = arith.constant 0 : index
    %c0_38 = arith.constant 0 : index
    %127 = vector.load %arg1[%c0_36, %c0_37, %c0_38] : memref<2x16x128xf32, #tpu.memory_space<vmem>>, vector<2x16x128xf32>
    %128 = arith.addf %126, %127 : vector<2x16x128xf32>
    %c0_39 = arith.constant 0 : index
    %c0_40 = arith.constant 0 : index
    %c0_41 = arith.constant 0 : index
    %129 = vector.load %arg12[%c0_39, %c0_40, %c0_41] : memref<2x16x128xf32, #tpu.memory_space<vmem>>, vector<2x16x128xf32>
    tpu.vector_store %arg12[%c0_39, %c0_40, %c0_41], %128 {strides = array<i32>} : memref<2x16x128xf32, #tpu.memory_space<vmem>>, vector<2x16x128xf32>,
    return
  }
  func.func @transform_0(%arg0: i32) -> (i32, i32, i32) {
    %c0_i32 = arith.constant 0 : i32
    %c0_i32_0 = arith.constant 0 : i32
    %c0_i32_1 = arith.constant 0 : i32
    return %arg0, %c0_i32, %c0_i32_0 : i32, i32, i32
  }
  func.func @transform_1(%arg0: i32) -> (i32, i32) {
    %c0_i32 = arith.constant 0 : i32
    %c0_i32_0 = arith.constant 0 : i32
    %c0_i32_1 = arith.constant 0 : i32
    return %c0_i32, %c0_i32_0 : i32, i32
  }
  func.func @transform_2(%arg0: i32) -> (i32, i32) {
    %c0_i32 = arith.constant 0 : i32
    %c0_i32_0 = arith.constant 0 : i32
    %c0_i32_1 = arith.constant 0 : i32
    return %c0_i32, %c0_i32_0 : i32, i32
  }
  func.func @transform_3(%arg0: i32) -> (i32, i32) {
    %c0_i32 = arith.constant 0 : i32
    %c0_i32_0 = arith.constant 0 : i32
    %c0_i32_1 = arith.constant 0 : i32
    return %c0_i32, %c0_i32_0 : i32, i32
  }
  func.func @transform_4(%arg0: i32) -> (i32, i32) {
    %c0_i32 = arith.constant 0 : i32
    %c0_i32_0 = arith.constant 0 : i32
    %c0_i32_1 = arith.constant 0 : i32
    return %c0_i32, %c0_i32_0 : i32, i32
  }
  func.func @transform_5(%arg0: i32) -> (i32, i32) {
    %c0_i32 = arith.constant 0 : i32
    %c0_i32_0 = arith.constant 0 : i32
    %c0_i32_1 = arith.constant 0 : i32
    return %c0_i32, %c0_i32_0 : i32, i32
  }
  func.func @transform_6(%arg0: i32) -> (i32, i32) {
    %c0_i32 = arith.constant 0 : i32
    %c0_i32_0 = arith.constant 0 : i32
    %c0_i32_1 = arith.constant 0 : i32
    return %c0_i32, %c0_i32_0 : i32, i32
  }
  func.func @transform_7(%arg0: i32) -> (i32, i32) {
    %c0_i32 = arith.constant 0 : i32
    %c0_i32_0 = arith.constant 0 : i32
    %c0_i32_1 = arith.constant 0 : i32
    return %c0_i32, %c0_i32_0 : i32, i32
  }
  func.func @transform_8(%arg0: i32) -> (i32, i32) {
    %c0_i32 = arith.constant 0 : i32
    %c0_i32_0 = arith.constant 0 : i32
    %c0_i32_1 = arith.constant 0 : i32
    return %c0_i32, %c0_i32_0 : i32, i32
  }
  func.func @transform_9(%arg0: i32) -> (i32, i32) {
    %c0_i32 = arith.constant 0 : i32
    %c0_i32_0 = arith.constant 0 : i32
    %c0_i32_1 = arith.constant 0 : i32
    return %c0_i32, %c0_i32_0 : i32, i32
  }
  func.func @transform_10(%arg0: i32) -> (i32, i32) {
    %c0_i32 = arith.constant 0 : i32
    %c0_i32_0 = arith.constant 0 : i32
    %c0_i32_1 = arith.constant 0 : i32
    return %c0_i32, %c0_i32_0 : i32, i32
  }
  func.func @transform_11(%arg0: i32) -> (i32, i32, i32) {
    %c0_i32 = arith.constant 0 : i32
    %c0_i32_0 = arith.constant 0 : i32
    %c0_i32_1 = arith.constant 0 : i32
    return %arg0, %c0_i32, %c0_i32_0 : i32, i32, i32
  }
}

module attributes {stable_mosaic.version = 11 : i64} {
  func.func @_fused_kernel(%arg0: i32, %arg1: memref<2x16x128xf32, #tpu.memory_space<vmem>>, %arg2: memref<7x128xf32, #tpu.memory_space<vmem>>, %arg3: memref<1x128xf32, #tpu.memory_space<vmem>>, %arg4: memref<1x128xf32, #tpu.memory_space<vmem>>, %arg5: memref<1x128xf32, #tpu.memory_space<vmem>>, %arg6: memref<128x256xf32, #tpu.memory_space<vmem>>, %arg7: memref<1x256xf32, #tpu.memory_space<vmem>>, %arg8: memref<1x256xf32, #tpu.memory_space<vmem>>, %arg9: memref<1x256xf32, #tpu.memory_space<vmem>>, %arg10: memref<256x128xf32, #tpu.memory_space<vmem>>, %arg11: memref<1x128xf32, #tpu.memory_space<vmem>>, %arg12: memref<2x16x128xf32, #tpu.memory_space<vmem>>) attributes {dimension_semantics = [#tpu.dimension_semantics<parallel>], iteration_bounds = array<i64: 1>, scalar_prefetch = 0 : i64, scratch_operands = 0 : i64, tpu.core_type = #tpu.core_type<tc>, window_params = [{transform_indices = @transform_0, window_bounds = array<i64: 2, 16, 128>}, {pipeline_mode = #tpu.pipeline_mode<synchronous>, transform_indices = @transform_1, window_bounds = array<i64: 7, 128>}, {pipeline_mode = #tpu.pipeline_mode<synchronous>, transform_indices = @transform_2, window_bounds = array<i64: 1, 128>}, {pipeline_mode = #tpu.pipeline_mode<synchronous>, transform_indices = @transform_3, window_bounds = array<i64: 1, 128>}, {pipeline_mode = #tpu.pipeline_mode<synchronous>, transform_indices = @transform_4, window_bounds = array<i64: 1, 128>}, {pipeline_mode = #tpu.pipeline_mode<synchronous>, transform_indices = @transform_5, window_bounds = array<i64: 128, 256>}, {pipeline_mode = #tpu.pipeline_mode<synchronous>, transform_indices = @transform_6, window_bounds = array<i64: 1, 256>}, {pipeline_mode = #tpu.pipeline_mode<synchronous>, transform_indices = @transform_7, window_bounds = array<i64: 1, 256>}, {pipeline_mode = #tpu.pipeline_mode<synchronous>, transform_indices = @transform_8, window_bounds = array<i64: 1, 256>}, {pipeline_mode = #tpu.pipeline_mode<synchronous>, transform_indices = @transform_9, window_bounds = array<i64: 256, 128>}, {pipeline_mode = #tpu.pipeline_mode<synchronous>, transform_indices = @transform_10, window_bounds = array<i64: 1, 128>}, {transform_indices = @transform_11, window_bounds = array<i64: 2, 16, 128>}]} {
    %c0 = arith.constant 0 : index
    %c0_0 = arith.constant 0 : index
    %c0_1 = arith.constant 0 : index
    %0 = vector.load %arg1[%c0, %c0_0, %c0_1] : memref<2x16x128xf32, #tpu.memory_space<vmem>>, vector<2x16x128xf32>
    %cst = arith.constant 0.000000e+00 : f32
    %1 = vector.broadcast %cst : f32 to vector<2x3x128xf32>
    %2 = tpu.concatenate %1, %0, %1 in 1 : vector<2x3x128xf32>, vector<2x16x128xf32>, vector<2x3x128xf32> -> vector<2x22x128xf32>
    %c0_2 = arith.constant 0 : index
    %c0_3 = arith.constant 0 : index
    %3 = vector.load %arg2[%c0_2, %c0_3] : memref<7x128xf32, #tpu.memory_space<vmem>>, vector<7x128xf32>
    %4 = vector.extract_strided_slice %3 {offsets = [0, 0], sizes = [1, 128], strides = [1, 1]} : vector<7x128xf32> to vector<1x128xf32>
    %5 = vector.shape_cast %4 : vector<1x128xf32> to vector<128xf32>
    %6 = vector.extract_strided_slice %2 {offsets = [0, 0, 0], sizes = [2, 16, 128], strides = [1, 1, 1]} : vector<2x22x128xf32> to vector<2x16x128xf32>
    %7 = vector.shape_cast %5 : vector<128xf32> to vector<1x1x128xf32>
    %8 = vector.broadcast %7 : vector<1x1x128xf32> to vector<2x16x128xf32>
    %9 = arith.mulf %8, %6 : vector<2x16x128xf32>
    %10 = vector.extract_strided_slice %3 {offsets = [1, 0], sizes = [1, 128], strides = [1, 1]} : vector<7x128xf32> to vector<1x128xf32>
    %11 = vector.shape_cast %10 : vector<1x128xf32> to vector<128xf32>
    %12 = vector.extract_strided_slice %2 {offsets = [0, 1, 0], sizes = [2, 16, 128], strides = [1, 1, 1]} : vector<2x22x128xf32> to vector<2x16x128xf32>
    %13 = vector.shape_cast %11 : vector<128xf32> to vector<1x1x128xf32>
    %14 = vector.broadcast %13 : vector<1x1x128xf32> to vector<2x16x128xf32>
    %15 = arith.mulf %14, %12 : vector<2x16x128xf32>
    %16 = arith.addf %9, %15 : vector<2x16x128xf32>
    %17 = vector.extract_strided_slice %3 {offsets = [2, 0], sizes = [1, 128], strides = [1, 1]} : vector<7x128xf32> to vector<1x128xf32>
    %18 = vector.shape_cast %17 : vector<1x128xf32> to vector<128xf32>
    %19 = vector.extract_strided_slice %2 {offsets = [0, 2, 0], sizes = [2, 16, 128], strides = [1, 1, 1]} : vector<2x22x128xf32> to vector<2x16x128xf32>
    %20 = vector.shape_cast %18 : vector<128xf32> to vector<1x1x128xf32>
    %21 = vector.broadcast %20 : vector<1x1x128xf32> to vector<2x16x128xf32>
    %22 = arith.mulf %21, %19 : vector<2x16x128xf32>
    %23 = arith.addf %16, %22 : vector<2x16x128xf32>
    %24 = vector.extract_strided_slice %3 {offsets = [3, 0], sizes = [1, 128], strides = [1, 1]} : vector<7x128xf32> to vector<1x128xf32>
    %25 = vector.shape_cast %24 : vector<1x128xf32> to vector<128xf32>
    %26 = vector.extract_strided_slice %2 {offsets = [0, 3, 0], sizes = [2, 16, 128], strides = [1, 1, 1]} : vector<2x22x128xf32> to vector<2x16x128xf32>
    %27 = vector.shape_cast %25 : vector<128xf32> to vector<1x1x128xf32>
    %28 = vector.broadcast %27 : vector<1x1x128xf32> to vector<2x16x128xf32>
    %29 = arith.mulf %28, %26 : vector<2x16x128xf32>
    %30 = arith.addf %23, %29 : vector<2x16x128xf32>
    %31 = vector.extract_strided_slice %3 {offsets = [4, 0], sizes = [1, 128], strides = [1, 1]} : vector<7x128xf32> to vector<1x128xf32>
    %32 = vector.shape_cast %31 : vector<1x128xf32> to vector<128xf32>
    %33 = vector.extract_strided_slice %2 {offsets = [0, 4, 0], sizes = [2, 16, 128], strides = [1, 1, 1]} : vector<2x22x128xf32> to vector<2x16x128xf32>
    %34 = vector.shape_cast %32 : vector<128xf32> to vector<1x1x128xf32>
    %35 = vector.broadcast %34 : vector<1x1x128xf32> to vector<2x16x128xf32>
    %36 = arith.mulf %35, %33 : vector<2x16x128xf32>
    %37 = arith.addf %30, %36 : vector<2x16x128xf32>
    %38 = vector.extract_strided_slice %3 {offsets = [5, 0], sizes = [1, 128], strides = [1, 1]} : vector<7x128xf32> to vector<1x128xf32>
    %39 = vector.shape_cast %38 : vector<1x128xf32> to vector<128xf32>
    %40 = vector.extract_strided_slice %2 {offsets = [0, 5, 0], sizes = [2, 16, 128], strides = [1, 1, 1]} : vector<2x22x128xf32> to vector<2x16x128xf32>
    %41 = vector.shape_cast %39 : vector<128xf32> to vector<1x1x128xf32>
    %42 = vector.broadcast %41 : vector<1x1x128xf32> to vector<2x16x128xf32>
    %43 = arith.mulf %42, %40 : vector<2x16x128xf32>
    %44 = arith.addf %37, %43 : vector<2x16x128xf32>
    %45 = vector.extract_strided_slice %3 {offsets = [6, 0], sizes = [1, 128], strides = [1, 1]} : vector<7x128xf32> to vector<1x128xf32>
    %46 = vector.shape_cast %45 : vector<1x128xf32> to vector<128xf32>
    %47 = vector.extract_strided_slice %2 {offsets = [0, 6, 0], sizes = [2, 16, 128], strides = [1, 1, 1]} : vector<2x22x128xf32> to vector<2x16x128xf32>
    %48 = vector.shape_cast %46 : vector<128xf32> to vector<1x1x128xf32>
    %49 = vector.broadcast %48 : vector<1x1x128xf32> to vector<2x16x128xf32>
    %50 = arith.mulf %49, %47 : vector<2x16x128xf32>
    %51 = arith.addf %44, %50 : vector<2x16x128xf32>
    %c0_4 = arith.constant 0 : index
    %c0_5 = arith.constant 0 : index
    %52 = vector.load %arg3[%c0_4, %c0_5] : memref<1x128xf32, #tpu.memory_space<vmem>>, vector<1x128xf32>
    %53 = vector.shape_cast %52 : vector<1x128xf32> to vector<1x1x128xf32>
    %54 = vector.broadcast %53 : vector<1x1x128xf32> to vector<2x16x128xf32>
    %55 = arith.addf %51, %54 : vector<2x16x128xf32>
    %cst_6 = arith.constant dense<0.000000e+00> : vector<2x16xf32>
    %56 = vector.multi_reduction <add>, %55, %cst_6 [2] : vector<2x16x128xf32> to vector<2x16xf32>
    %57 = vector.shape_cast %56 : vector<2x16xf32> to vector<2x16x1xf32>
    %cst_7 = arith.constant 1.280000e+02 : f32
    %58 = vector.broadcast %cst_7 : f32 to vector<2x16x1xf32>
    %59 = arith.divf %57, %58 : vector<2x16x1xf32>
    %60 = vector.broadcast %59 : vector<2x16x1xf32> to vector<2x16x128xf32>
    %61 = arith.subf %55, %60 : vector<2x16x128xf32>
    %62 = arith.mulf %61, %61 : vector<2x16x128xf32>
    %cst_8 = arith.constant dense<0.000000e+00> : vector<2x16xf32>
    %63 = vector.multi_reduction <add>, %62, %cst_8 [2] : vector<2x16x128xf32> to vector<2x16xf32>
    %64 = vector.shape_cast %63 : vector<2x16xf32> to vector<2x16x1xf32>
    %cst_9 = arith.constant 1.280000e+02 : f32
    %65 = vector.broadcast %cst_9 : f32 to vector<2x16x1xf32>
    %66 = arith.divf %64, %65 : vector<2x16x1xf32>
    %67 = vector.broadcast %59 : vector<2x16x1xf32> to vector<2x16x128xf32>
    %68 = arith.subf %55, %67 : vector<2x16x128xf32>
    %cst_10 = arith.constant 9.99999997E-7 : f32
    %69 = vector.broadcast %cst_10 : f32 to vector<2x16x1xf32>
    %70 = arith.addf %66, %69 : vector<2x16x1xf32>
    %71 = math.rsqrt %70 : vector<2x16x1xf32>
    %72 = vector.broadcast %71 : vector<2x16x1xf32> to vector<2x16x128xf32>
    %73 = arith.mulf %68, %72 : vector<2x16x128xf32>
    %c0_11 = arith.constant 0 : index
    %c0_12 = arith.constant 0 : index
    %74 = vector.load %arg4[%c0_11, %c0_12] : memref<1x128xf32, #tpu.memory_space<vmem>>, vector<1x128xf32>
    %75 = vector.shape_cast %74 : vector<1x128xf32> to vector<1x1x128xf32>
    %76 = vector.broadcast %75 : vector<1x1x128xf32> to vector<2x16x128xf32>
    %77 = arith.mulf %73, %76 : vector<2x16x128xf32>
    %c0_13 = arith.constant 0 : index
    %c0_14 = arith.constant 0 : index
    %78 = vector.load %arg5[%c0_13, %c0_14] : memref<1x128xf32, #tpu.memory_space<vmem>>, vector<1x128xf32>
    %79 = vector.shape_cast %78 : vector<1x128xf32> to vector<1x1x128xf32>
    %80 = vector.broadcast %79 : vector<1x1x128xf32> to vector<2x16x128xf32>
    %81 = arith.addf %77, %80 : vector<2x16x128xf32>
    %82 = vector.shape_cast %81 : vector<2x16x128xf32> to vector<32x128xf32>
    %c0_15 = arith.constant 0 : index
    %c0_16 = arith.constant 0 : index
    %83 = vector.load %arg6[%c0_15, %c0_16] : memref<128x256xf32, #tpu.memory_space<vmem>>, vector<128x256xf32>
    %cst_17 = arith.constant dense<0.000000e+00> : vector<32x256xf32>
    %84 = tpu.matmul %82, %83, %cst_17 {dimension_numbers = #tpu.dot_dimension_numbers<[1], [0], [0], [1], [0, 0, 1, 1], [], []>, precision = #tpu.contract_precision<fp32>} : vector<32x128xf32>, vector<128x256xf32>, vector<32x256xf32> -> vector<32x256xf32>
    %c0_18 = arith.constant 0 : index
    %c0_19 = arith.constant 0 : index
    %85 = vector.load %arg7[%c0_18, %c0_19] : memref<1x256xf32, #tpu.memory_space<vmem>>, vector<1x256xf32>
    %86 = vector.broadcast %85 : vector<1x256xf32> to vector<32x256xf32>
    %87 = arith.addf %84, %86 : vector<32x256xf32>
    %cst_20 = arith.constant 5.000000e-01 : f32
    %88 = vector.broadcast %cst_20 : f32 to vector<32x256xf32>
    %89 = arith.mulf %88, %87 : vector<32x256xf32>
    %cst_21 = arith.constant 0.707106769 : f32
    %90 = vector.broadcast %cst_21 : f32 to vector<32x256xf32>
    %91 = arith.mulf %87, %90 : vector<32x256xf32>
    %92 = math.erf %91 : vector<32x256xf32>
    %cst_22 = arith.constant 1.000000e+00 : f32
    %93 = vector.broadcast %cst_22 : f32 to vector<32x256xf32>
    %94 = arith.addf %93, %92 : vector<32x256xf32>
    %95 = arith.mulf %89, %94 : vector<32x256xf32>
    %96 = vector.shape_cast %95 : vector<32x256xf32> to vector<2x16x256xf32>
    %97 = arith.mulf %96, %96 : vector<2x16x256xf32>
    %cst_23 = arith.constant dense<0.000000e+00> : vector<2x256xf32>
    %98 = vector.multi_reduction <add>, %97, %cst_23 [1] : vector<2x16x256xf32> to vector<2x256xf32>
    %99 = vector.shape_cast %98 : vector<2x256xf32> to vector<2x1x256xf32>
    %100 = math.sqrt %99 : vector<2x1x256xf32>
    %cst_24 = arith.constant dense<0.000000e+00> : vector<2x1xf32>
    %101 = vector.multi_reduction <add>, %100, %cst_24 [2] : vector<2x1x256xf32> to vector<2x1xf32>
    %102 = vector.shape_cast %101 : vector<2x1xf32> to vector<2x1x1xf32>
    %cst_25 = arith.constant 2.560000e+02 : f32
    %103 = vector.broadcast %cst_25 : f32 to vector<2x1x1xf32>
    %104 = arith.divf %102, %103 : vector<2x1x1xf32>
    %cst_26 = arith.constant 9.99999997E-7 : f32
    %105 = vector.broadcast %cst_26 : f32 to vector<2x1x1xf32>
    %106 = arith.addf %104, %105 : vector<2x1x1xf32>
    %107 = vector.broadcast %106 : vector<2x1x1xf32> to vector<2x1x256xf32>
    %108 = arith.divf %100, %107 : vector<2x1x256xf32>
    %c0_27 = arith.constant 0 : index
    %c0_28 = arith.constant 0 : index
    %109 = vector.load %arg8[%c0_27, %c0_28] : memref<1x256xf32, #tpu.memory_space<vmem>>, vector<1x256xf32>
    %110 = vector.broadcast %108 : vector<2x1x256xf32> to vector<2x16x256xf32>
    %111 = arith.mulf %96, %110 : vector<2x16x256xf32>
    %112 = vector.shape_cast %109 : vector<1x256xf32> to vector<1x1x256xf32>
    %113 = vector.broadcast %112 : vector<1x1x256xf32> to vector<2x16x256xf32>
    %114 = arith.mulf %113, %111 : vector<2x16x256xf32>
    %c0_29 = arith.constant 0 : index
    %c0_30 = arith.constant 0 : index
    %115 = vector.load %arg9[%c0_29, %c0_30] : memref<1x256xf32, #tpu.memory_space<vmem>>, vector<1x256xf32>
    %116 = vector.shape_cast %115 : vector<1x256xf32> to vector<1x1x256xf32>
    %117 = vector.broadcast %116 : vector<1x1x256xf32> to vector<2x16x256xf32>
    %118 = arith.addf %114, %117 : vector<2x16x256xf32>
    %119 = arith.addf %118, %96 : vector<2x16x256xf32>
    %120 = vector.shape_cast %119 : vector<2x16x256xf32> to vector<32x256xf32>
    %c0_31 = arith.constant 0 : index
    %c0_32 = arith.constant 0 : index
    %121 = vector.load %arg10[%c0_31, %c0_32] : memref<256x128xf32, #tpu.memory_space<vmem>>, vector<256x128xf32>
    %cst_33 = arith.constant dense<0.000000e+00> : vector<32x128xf32>
    %122 = tpu.matmul %120, %121, %cst_33 {dimension_numbers = #tpu.dot_dimension_numbers<[1], [0], [0], [1], [0, 0, 1, 1], [], []>, precision = #tpu.contract_precision<fp32>} : vector<32x256xf32>, vector<256x128xf32>, vector<32x128xf32> -> vector<32x128xf32>
    %c0_34 = arith.constant 0 : index
    %c0_35 = arith.constant 0 : index
    %123 = vector.load %arg11[%c0_34, %c0_35] : memref<1x128xf32, #tpu.memory_space<vmem>>, vector<1x128xf32>
    %124 = vector.broadcast %123 : vector<1x128xf32> to vector<32x128xf32>
    %125 = arith.addf %122, %124 : vector<32x128xf32>
    %126 = vector.shape_cast %125 : vector<32x128xf32> to vector<2x16x128xf32>
    %c0_36 = arith.constant 0 : index
    %c0_37 = arith.constant 0 : index
    %c0_38 = arith.constant 0 : index
    %127 = vector.load %arg1[%c0_36, %c0_37, %c0_38] : memref<2x16x128xf32, #tpu.memory_space<vmem>>, vector<2x16x128xf32>
    %128 = arith.addf %126, %127 : vector<2x16x128xf32>
    %c0_39 = arith.constant 0 : index
    %c0_40 = arith.constant 0 : index
    %c0_41 = arith.constant 0 : index
    %129 = vector.load %arg12[%c0_39, %c0_40, %c0_41] : memref<2x16x128xf32, #tpu.memory_space<vmem>>, vector<2x16x128xf32>
    tpu.vector_store %arg12[%c0_39, %c0_40, %c0_41], %128 {strides = array<i32>} : memref<2x16x128xf32, #tpu.memory_space<vmem>>, vector<2x16x128xf32>,
    return
  }
  func.func @transform_0(%arg0: i32) -> (i32, i32, i32) {
    %c0_i32 = arith.constant 0 : i32
    %c0_i32_0 = arith.constant 0 : i32
    %c0_i32_1 = arith.constant 0 : i32
    return %arg0, %c0_i32, %c0_i32_0 : i32, i32, i32
  }
  func.func @transform_1(%arg0: i32) -> (i32, i32) {
    %c0_i32 = arith.constant 0 : i32
    %c0_i32_0 = arith.constant 0 : i32
    %c0_i32_1 = arith.constant 0 : i32
    return %c0_i32, %c0_i32_0 : i32, i32
  }
  func.func @transform_2(%arg0: i32) -> (i32, i32) {
    %c0_i32 = arith.constant 0 : i32
    %c0_i32_0 = arith.constant 0 : i32
    %c0_i32_1 = arith.constant 0 : i32
    return %c0_i32, %c0_i32_0 : i32, i32
  }
  func.func @transform_3(%arg0: i32) -> (i32, i32) {
    %c0_i32 = arith.constant 0 : i32
    %c0_i32_0 = arith.constant 0 : i32
    %c0_i32_1 = arith.constant 0 : i32
    return %c0_i32, %c0_i32_0 : i32, i32
  }
  func.func @transform_4(%arg0: i32) -> (i32, i32) {
    %c0_i32 = arith.constant 0 : i32
    %c0_i32_0 = arith.constant 0 : i32
    %c0_i32_1 = arith.constant 0 : i32
    return %c0_i32, %c0_i32_0 : i32, i32
  }
  func.func @transform_5(%arg0: i32) -> (i32, i32) {
    %c0_i32 = arith.constant 0 : i32
    %c0_i32_0 = arith.constant 0 : i32
    %c0_i32_1 = arith.constant 0 : i32
    return %c0_i32, %c0_i32_0 : i32, i32
  }
  func.func @transform_6(%arg0: i32) -> (i32, i32) {
    %c0_i32 = arith.constant 0 : i32
    %c0_i32_0 = arith.constant 0 : i32
    %c0_i32_1 = arith.constant 0 : i32
    return %c0_i32, %c0_i32_0 : i32, i32
  }
  func.func @transform_7(%arg0: i32) -> (i32, i32) {
    %c0_i32 = arith.constant 0 : i32
    %c0_i32_0 = arith.constant 0 : i32
    %c0_i32_1 = arith.constant 0 : i32
    return %c0_i32, %c0_i32_0 : i32, i32
  }
  func.func @transform_8(%arg0: i32) -> (i32, i32) {
    %c0_i32 = arith.constant 0 : i32
    %c0_i32_0 = arith.constant 0 : i32
    %c0_i32_1 = arith.constant 0 : i32
    return %c0_i32, %c0_i32_0 : i32, i32
  }
  func.func @transform_9(%arg0: i32) -> (i32, i32) {
    %c0_i32 = arith.constant 0 : i32
    %c0_i32_0 = arith.constant 0 : i32
    %c0_i32_1 = arith.constant 0 : i32
    return %c0_i32, %c0_i32_0 : i32, i32
  }
  func.func @transform_10(%arg0: i32) -> (i32, i32) {
    %c0_i32 = arith.constant 0 : i32
    %c0_i32_0 = arith.constant 0 : i32
    %c0_i32_1 = arith.constant 0 : i32
    return %c0_i32, %c0_i32_0 : i32, i32
  }
  func.func @transform_11(%arg0: i32) -> (i32, i32, i32) {
    %c0_i32 = arith.constant 0 : i32
    %c0_i32_0 = arith.constant 0 : i32
    %c0_i32_1 = arith.constant 0 : i32
    return %arg0, %c0_i32, %c0_i32_0 : i32, i32, i32
  }
}

</mosaic_0001>

<llo_original>
// kernel: tpu_custom_call.1
$region0: #{tpu_custom_call.1}
  #allocation0 [shape = 'u32[]', space=smem, size = 0x4, offset = 0x4, fixed_abs, tag = 'smem constant byte address 0x4 - core index']
  #allocation1 [shape = 'u32[144,128]{1,0:T(1,128)}', space=vmem, size = 0x12000, scoped, tag = 'internal scratch']
  %s0 = inlined_call_operand.hbm [shape: f32[2,16,128], index: 0, kind: input, shape index: {}]
  %s1 = inlined_call_operand.hbm [shape: f32[7,128], index: 1, kind: input, shape index: {}]
  %s2 = inlined_call_operand.vmem [shape: f32[1,128], index: 2, kind: input, shape index: {}]
  %s3 = inlined_call_operand.vmem [shape: f32[1,128], index: 3, kind: input, shape index: {}]
  %s4 = inlined_call_operand.vmem [shape: f32[1,128], index: 4, kind: input, shape index: {}]
  %s5 = inlined_call_operand.hbm [shape: f32[128,256], index: 5, kind: input, shape index: {}]
  %s6 = inlined_call_operand.vmem [shape: f32[1,256], index: 6, kind: input, shape index: {}]
  %s7 = inlined_call_operand.vmem [shape: f32[1,256], index: 7, kind: input, shape index: {}]
  %s8 = inlined_call_operand.vmem [shape: f32[1,256], index: 8, kind: input, shape index: {}]
  %s9 = inlined_call_operand.hbm [shape: f32[256,128], index: 9, kind: input, shape index: {}]
  %s10 = inlined_call_operand.vmem [shape: f32[1,128], index: 10, kind: input, shape index: {}]
  %s11 = inlined_call_operand.hbm [shape: f32[2,16,128], index: 11, kind: output, shape index: {}]
  %s12 = sld [smem:[#allocation0]]
  $region70: #{tpu_custom_call.1} parent=0
    _
  %s14 = ssub.s32 1, %s12
  %s15 = scalar_select 0, %s14, %s12
  $region1: #{tpu_custom_call.1} parent=0
    #allocation2 [shape = 'u8[16384]{0}', space=vmem, size = 0x4000, scoped, tag = 'input window, operand 0, single buffered']
    #allocation3 [shape = 's32[1]{0}', space=sflag, size = 0x4, scoped, tag = 'scoped memory for tpu_custom_call.1']
    #allocation4 [shape = 's32[1]{0}', space=sflag, size = 0x4, scoped, tag = 'scoped memory for tpu_custom_call.1']
    #allocation5 [shape = 'u8[4096]{0}', space=vmem, size = 0x1000, scoped, tag = 'input window, operand 1, single buffered']
    #allocation6 [shape = 's32[1]{0}', space=sflag, size = 0x4, scoped, tag = 'scoped memory for tpu_custom_call.1']
    #allocation7 [shape = 'u8[131072]{0}', space=vmem, size = 0x20000, scoped, tag = 'input window, operand 5, single buffered']
    #allocation8 [shape = 'u8[131072]{0}', space=vmem, size = 0x20000, scoped, tag = 'input window, operand 9, single buffered']
    #allocation9 [shape = 's32[1]{0}', space=sflag, size = 0x4, scoped, tag = 'scoped memory for tpu_custom_call.1']
    #allocation10 [shape = 'u8[16384]{0}', space=vmem, size = 0x4000, scoped, tag = 'output window, operand 0, single buffered']
    %16 = vsyncpa [#allocation3], 0
    %17 = vsyncpa [#allocation6], 0
    %18 = vsyncpa [#allocation9], 0
    %19 = vsyncpa [#allocation4], 0
    // Predicated region
    $region2: #{tpu_custom_call.1} parent=1 // pred_check
      _
    $region3: #{tpu_custom_call.1} parent=1 // pred_check_branch
      %21 = sbr.rel (0) target = $region5
    $region4: #{tpu_custom_call.1} parent=1 // pred_region
      %s23 = ssub.s32 512, 512
      %24 = vsyncadd [#allocation3], %s23
      %s25 = sshll.u32 [#allocation2], 4
      %s26 = int_to_ptr.vmem [resolvable:$true] %s25
      %31 = dma.hbm_to_vmem [thread:$0]  %s0, 512, %s26, [#allocation3], 128, 128, 8
    $region5: #{tpu_custom_call.1} parent=1 // pred_fallthru
      _
    // Predicated region
    $region6: #{tpu_custom_call.1} parent=1 // pred_check
      _
    $region7: #{tpu_custom_call.1} parent=1 // pred_check_branch
      %33 = sbr.rel (0) target = $region9
    $region8: #{tpu_custom_call.1} parent=1 // pred_region
      %s35 = ssub.s32 128, 128
      %36 = vsyncadd [#allocation6], %s35
      %s38 = sshll.u32 [#allocation5], 4
      %s39 = int_to_ptr.vmem [resolvable:$true] %s38
      %41 = dma.hbm_to_vmem [thread:$0]  %s1, 128, %s39, [#allocation6]
    $region9: #{tpu_custom_call.1} parent=1 // pred_fallthru
      _
    // Predicated region
    $region10: #{tpu_custom_call.1} parent=1 // pred_check
      _
    $region11: #{tpu_custom_call.1} parent=1 // pred_check_branch
      %43 = sbr.rel (0) target = $region13
    $region12: #{tpu_custom_call.1} parent=1 // pred_region
      _
    $region13: #{tpu_custom_call.1} parent=1 // pred_fallthru
      _
    // Predicated region
    $region14: #{tpu_custom_call.1} parent=1 // pred_check
      _
    $region15: #{tpu_custom_call.1} parent=1 // pred_check_branch
      %45 = sbr.rel (0) target = $region17
    $region16: #{tpu_custom_call.1} parent=1 // pred_region
      _
    $region17: #{tpu_custom_call.1} parent=1 // pred_fallthru
      _
    // Predicated region
    $region18: #{tpu_custom_call.1} parent=1 // pred_check
      _
    $region19: #{tpu_custom_call.1} parent=1 // pred_check_branch
      %47 = sbr.rel (0) target = $region21
    $region20: #{tpu_custom_call.1} parent=1 // pred_region
      _
    $region21: #{tpu_custom_call.1} parent=1 // pred_fallthru
      _
    // Predicated region
    $region22: #{tpu_custom_call.1} parent=1 // pred_check
      _
    $region23: #{tpu_custom_call.1} parent=1 // pred_check_branch
      %49 = sbr.rel (0) target = $region25
    $region24: #{tpu_custom_call.1} parent=1 // pred_region
      %s51 = ssub.s32 4096, 4096
      %52 = vsyncadd [#allocation6], %s51
      %s53 = sshll.u32 [#allocation7], 4
      %s54 = int_to_ptr.vmem [resolvable:$true] %s53
      %59 = dma.hbm_to_vmem [thread:$0]  %s5, 4096, %s54, [#allocation6], 256, 256, 16
    $region25: #{tpu_custom_call.1} parent=1 // pred_fallthru
      _
    // Predicated region
    $region26: #{tpu_custom_call.1} parent=1 // pred_check
      _
    $region27: #{tpu_custom_call.1} parent=1 // pred_check_branch
      %61 = sbr.rel (0) target = $region29
    $region28: #{tpu_custom_call.1} parent=1 // pred_region
      _
    $region29: #{tpu_custom_call.1} parent=1 // pred_fallthru
      _
    // Predicated region
    $region30: #{tpu_custom_call.1} parent=1 // pred_check
      _
    $region31: #{tpu_custom_call.1} parent=1 // pred_check_branch
      %63 = sbr.rel (0) target = $region33
    $region32: #{tpu_custom_call.1} parent=1 // pred_region
      _
    $region33: #{tpu_custom_call.1} parent=1 // pred_fallthru
      _
    // Predicated region
    $region34: #{tpu_custom_call.1} parent=1 // pred_check
      _
    $region35: #{tpu_custom_call.1} parent=1 // pred_check_branch
      %65 = sbr.rel (0) target = $region37
    $region36: #{tpu_custom_call.1} parent=1 // pred_region
      _
    $region37: #{tpu_custom_call.1} parent=1 // pred_fallthru
      _
    // Predicated region
    $region38: #{tpu_custom_call.1} parent=1 // pred_check
      _
    $region39: #{tpu_custom_call.1} parent=1 // pred_check_branch
      %67 = sbr.rel (0) target = $region41
    $region40: #{tpu_custom_call.1} parent=1 // pred_region
      %s69 = ssub.s32 4096, 4096
      %70 = vsyncadd [#allocation9], %s69
      %s71 = sshll.u32 [#allocation8], 4
      %s72 = int_to_ptr.vmem [resolvable:$true] %s71
      %77 = dma.hbm_to_vmem [thread:$0]  %s9, 4096, %s72, [#allocation9], 128, 128, 8
    $region41: #{tpu_custom_call.1} parent=1 // pred_fallthru
      _
    // Predicated region
    $region42: #{tpu_custom_call.1} parent=1 // pred_check
      _
    $region43: #{tpu_custom_call.1} parent=1 // pred_check_branch
      %79 = sbr.rel (0) target = $region45
    $region44: #{tpu_custom_call.1} parent=1 // pred_region
      _
    $region45: #{tpu_custom_call.1} parent=1 // pred_fallthru
      _
    // Predicated region
    $region46: #{tpu_custom_call.1} parent=1 // pred_check
      _
    $region47: #{tpu_custom_call.1} parent=1 // pred_check_branch
      %81 = sbr.rel (0) target = $region49
    $region48: #{tpu_custom_call.1} parent=1 // pred_region
      %82 = dma.done [#allocation3], 512
    $region49: #{tpu_custom_call.1} parent=1 // pred_fallthru
      _
    // Predicated region
    $region50: #{tpu_custom_call.1} parent=1 // pred_check
      _
    $region51: #{tpu_custom_call.1} parent=1 // pred_check_branch
      %84 = sbr.rel (0) target = $region53
    $region52: #{tpu_custom_call.1} parent=1 // pred_region
      %85 = dma.done [#allocation6], 128
    $region53: #{tpu_custom_call.1} parent=1 // pred_fallthru
      _
    // Predicated region
    $region54: #{tpu_custom_call.1} parent=1 // pred_check
      _
    $region55: #{tpu_custom_call.1} parent=1 // pred_check_branch
      %87 = sbr.rel (0) target = $region57
    $region56: #{tpu_custom_call.1} parent=1 // pred_region
      %88 = dma.done [#allocation6], 4096
    $region57: #{tpu_custom_call.1} parent=1 // pred_fallthru
      _
    // Predicated region
    $region58: #{tpu_custom_call.1} parent=1 // pred_check
      _
    $region59: #{tpu_custom_call.1} parent=1 // pred_check_branch
      %90 = sbr.rel (0) target = $region61
    $region60: #{tpu_custom_call.1} parent=1 // pred_region
      %91 = dma.done [#allocation9], 4096
    $region61: #{tpu_custom_call.1} parent=1 // pred_fallthru
      _
    %v92 = vld [vmem:[#allocation2] sm:$0xff]
    %v93 = vld [vmem:[#allocation2 + $0x8] sm:$0xff]
    %v94 = vld [vmem:[#allocation2 + $0x10] sm:$0xff]
    %v95 = vld [vmem:[#allocation2 + $0x18] sm:$0xff]
    %vm100 = vcmask 1042432
    %v101 = vrot.slane %v92, 5
    %v102 = vrot.slane %v93, 5
    %v103 = vsel %vm100, %v101, %v102
    %v104 = vrot.slane %v94, 5
    %v105 = vrot.slane %v95, 5
    %v106 = vsel %vm100, %v104, %v105
    %v113 = vsel %vm100, 0.0, %v101
    %v114 = vsel %vm100, 0.0, %v104
    %v115 = vsel %vm100, %v102, 0.0
    %v116 = vsel %vm100, %v105, 0.0
    %v117 = vld [vmem:[#allocation5] sm:$0x7f]
    %v118 = vlaneseq
    %v119 = vshrl.u32 %v118, 7
    %v120 = vsub.s32 0, %v119
    %v121 = vrot.slane %v117, %v120
    %v122 = vmul.f32 %v121, %v113
    %v123 = vmul.f32 %v121, %v103
    %v124 = vmul.f32 %v121, %v114
    %v125 = vmul.f32 %v121, %v106
    %v126 = vlaneseq
    %v127 = vshrl.u32 %v126, 7
    %v128 = vsub.s32 1, %v127
    %v129 = vrot.slane %v117, %v128
    %v130 = vmul.f32 %v129, %v113
    %v131 = vmul.f32 %v129, %v103
    %v132 = vmul.f32 %v129, %v115
    %v133 = vmul.f32 %v129, %v114
    %v134 = vmul.f32 %v129, %v106
    %v135 = vmul.f32 %v129, %v116
    %vm142 = vcmask 1046528
    %v143 = vrot.slane %v130, 1
    %v144 = vrot.slane %v131, 1
    %v145 = vsel %vm142, %v143, %v144
    %v146 = vrot.slane %v132, 1
    %v147 = vsel %vm142, %v144, %v146
    %v148 = vrot.slane %v133, 1
    %v149 = vrot.slane %v134, 1
    %v150 = vsel %vm142, %v148, %v149
    %v151 = vrot.slane %v135, 1
    %v152 = vsel %vm142, %v149, %v151
    %v157 = vadd.f32 %v122, %v145
    %v158 = vadd.f32 %v123, %v147
    %v159 = vadd.f32 %v124, %v150
    %v160 = vadd.f32 %v125, %v152
    %v161 = vlaneseq
    %v162 = vshrl.u32 %v161, 7
    %v163 = vsub.s32 2, %v162
    %v164 = vrot.slane %v117, %v163
    %v165 = vmul.f32 %v164, %v113
    %v166 = vmul.f32 %v164, %v103
    %v167 = vmul.f32 %v164, %v115
    %v168 = vmul.f32 %v164, %v114
    %v169 = vmul.f32 %v164, %v106
    %v170 = vmul.f32 %v164, %v116
    %vm177 = vcmask 1045504
    %v178 = vrot.slane %v165, 2
    %v179 = vrot.slane %v166, 2
    %v180 = vsel %vm177, %v178, %v179
    %v181 = vrot.slane %v167, 2
    %v182 = vsel %vm177, %v179, %v181
    %v183 = vrot.slane %v168, 2
    %v184 = vrot.slane %v169, 2
    %v185 = vsel %vm177, %v183, %v184
    %v186 = vrot.slane %v170, 2
    %v187 = vsel %vm177, %v184, %v186
    %v192 = vadd.f32 %v157, %v180
    %v193 = vadd.f32 %v158, %v182
    %v194 = vadd.f32 %v159, %v185
    %v195 = vadd.f32 %v160, %v187
    %v196 = vlaneseq
    %v197 = vshrl.u32 %v196, 7
    %v198 = vsub.s32 3, %v197
    %v199 = vrot.slane %v117, %v198
    %v200 = vmul.f32 %v199, %v113
    %v201 = vmul.f32 %v199, %v103
    %v202 = vmul.f32 %v199, %v115
    %v203 = vmul.f32 %v199, %v114
    %v204 = vmul.f32 %v199, %v106
    %v205 = vmul.f32 %v199, %v116
    %vm212 = vcmask 1044480
    %v213 = vrot.slane %v200, 3
    %v214 = vrot.slane %v201, 3
    %v215 = vsel %vm212, %v213, %v214
    %v216 = vrot.slane %v202, 3
    %v217 = vsel %vm212, %v214, %v216
    %v218 = vrot.slane %v203, 3
    %v219 = vrot.slane %v204, 3
    %v220 = vsel %vm212, %v218, %v219
    %v221 = vrot.slane %v205, 3
    %v222 = vsel %vm212, %v219, %v221
    %v227 = vadd.f32 %v192, %v215
    %v228 = vadd.f32 %v193, %v217
    %v229 = vadd.f32 %v194, %v220
    %v230 = vadd.f32 %v195, %v222
    %v231 = vlaneseq
    %v232 = vshrl.u32 %v231, 7
    %v233 = vsub.s32 4, %v232
    %v234 = vrot.slane %v117, %v233
    %v235 = vmul.f32 %v234, %v113
    %v236 = vmul.f32 %v234, %v103
    %v237 = vmul.f32 %v234, %v115
    %v238 = vmul.f32 %v234, %v114
    %v239 = vmul.f32 %v234, %v106
    %v240 = vmul.f32 %v234, %v116
    %vm247 = vcmask 1043456
    %v248 = vrot.slane %v235, 4
    %v249 = vrot.slane %v236, 4
    %v250 = vsel %vm247, %v248, %v249
    %v251 = vrot.slane %v237, 4
    %v252 = vsel %vm247, %v249, %v251
    %v253 = vrot.slane %v238, 4
    %v254 = vrot.slane %v239, 4
    %v255 = vsel %vm247, %v253, %v254
    %v256 = vrot.slane %v240, 4
    %v257 = vsel %vm247, %v254, %v256
    %v262 = vadd.f32 %v227, %v250
    %v263 = vadd.f32 %v228, %v252
    %v264 = vadd.f32 %v229, %v255
    %v265 = vadd.f32 %v230, %v257
    %v266 = vlaneseq
    %v267 = vshrl.u32 %v266, 7
    %v268 = vsub.s32 5, %v267
    %v269 = vrot.slane %v117, %v268
    %v270 = vmul.f32 %v269, %v113
    %v271 = vmul.f32 %v269, %v103
    %v272 = vmul.f32 %v269, %v115
    %v273 = vmul.f32 %v269, %v114
    %v274 = vmul.f32 %v269, %v106
    %v275 = vmul.f32 %v269, %v116
    %v282 = vrot.slane %v270, 5
    %v283 = vrot.slane %v271, 5
    %v284 = vsel %vm100, %v282, %v283
    %v285 = vrot.slane %v272, 5
    %v286 = vsel %vm100, %v283, %v285
    %v287 = vrot.slane %v273, 5
    %v288 = vrot.slane %v274, 5
    %v289 = vsel %vm100, %v287, %v288
    %v290 = vrot.slane %v275, 5
    %v291 = vsel %vm100, %v288, %v290
    %v296 = vadd.f32 %v262, %v284
    %v297 = vadd.f32 %v263, %v286
    %v298 = vadd.f32 %v264, %v289
    %v299 = vadd.f32 %v265, %v291
    %v300 = vlaneseq
    %v301 = vshrl.u32 %v300, 7
    %v302 = vsub.s32 6, %v301
    %v303 = vrot.slane %v117, %v302
    %v304 = vmul.f32 %v303, %v113
    %v305 = vmul.f32 %v303, %v103
    %v306 = vmul.f32 %v303, %v115
    %v307 = vmul.f32 %v303, %v114
    %v308 = vmul.f32 %v303, %v106
    %v309 = vmul.f32 %v303, %v116
    %vm316 = vcmask 1041408
    %v317 = vrot.slane %v304, 6
    %v318 = vrot.slane %v305, 6
    %v319 = vsel %vm316, %v317, %v318
    %v320 = vrot.slane %v306, 6
    %v321 = vsel %vm316, %v318, %v320
    %v322 = vrot.slane %v307, 6
    %v323 = vrot.slane %v308, 6
    %v324 = vsel %vm316, %v322, %v323
    %v325 = vrot.slane %v309, 6
    %v326 = vsel %vm316, %v323, %v325
    %v331 = vadd.f32 %v296, %v319
    %v332 = vadd.f32 %v297, %v321
    %v333 = vadd.f32 %v298, %v324
    %v334 = vadd.f32 %v299, %v326
    %v335 = vld [vmem:[%s2] sm:$0x1]
    %v337 = vlaneseq
    %v338 = vshrl.u32 %v337, 7
    %v339 = vsub.s32 0, %v338
    %v340 = vrot.slane %v335, %v339
    %v342 = vadd.f32 %v331, %v340
    %v343 = vadd.f32 %v332, %v340
    %v344 = vadd.f32 %v333, %v340
    %v345 = vadd.f32 %v334, %v340
    %346 = vadd.xlane.f32.xlu0 %v342
    %v347 = vpop.xlane.xlu0 %346
    %348 = vadd.xlane.f32.xlu0 %v343
    %v349 = vpop.xlane.xlu0 %348
    %350 = vadd.xlane.f32.xlu0 %v344
    %v351 = vpop.xlane.xlu0 %350
    %352 = vadd.xlane.f32.xlu0 %v345
    %v353 = vpop.xlane.xlu0 %352
    %v354 = vrcp.pop 128.0
    %v355 = vmul.f32 %v347, %v354
    %v356 = vmul.f32 %v349, %v354
    %v357 = vmul.f32 %v351, %v354
    %v358 = vmul.f32 %v353, %v354
    %v359 = vsub.f32 %v342, %v355
    %v360 = vsub.f32 %v343, %v356
    %v361 = vsub.f32 %v344, %v357
    %v362 = vsub.f32 %v345, %v358
    %v363 = vmul.f32 %v359, %v359
    %v364 = vmul.f32 %v360, %v360
    %v365 = vmul.f32 %v361, %v361
    %v366 = vmul.f32 %v362, %v362
    %367 = vadd.xlane.f32.xlu0 %v363
    %v368 = vpop.xlane.xlu0 %367
    %369 = vadd.xlane.f32.xlu0 %v364
    %v370 = vpop.xlane.xlu0 %369
    %371 = vadd.xlane.f32.xlu0 %v365
    %v372 = vpop.xlane.xlu0 %371
    %373 = vadd.xlane.f32.xlu0 %v366
    %v374 = vpop.xlane.xlu0 %373
    %v375 = vmul.f32 %v368, %v354
    %v376 = vmul.f32 %v370, %v354
    %v377 = vmul.f32 %v372, %v354
    %v378 = vmul.f32 %v374, %v354
    %v379 = vadd.f32 %v375, 1e-06
    %v380 = vadd.f32 %v376, 1e-06
    %v381 = vadd.f32 %v377, 1e-06
    %v382 = vadd.f32 %v378, 1e-06
    %v383 = vrsqrt.pop %v379
    %v384 = vrsqrt.pop %v380
    %v385 = vrsqrt.pop %v381
    %v386 = vrsqrt.pop %v382
    %v387 = vmul.f32 %v359, %v383
    %v388 = vmul.f32 %v360, %v384
    %v389 = vmul.f32 %v361, %v385
    %v390 = vmul.f32 %v362, %v386
    %v391 = vld [vmem:[%s3] sm:$0x1]
    %v393 = vlaneseq
    %v394 = vshrl.u32 %v393, 7
    %v395 = vsub.s32 0, %v394
    %v396 = vrot.slane %v391, %v395
    %v398 = vmul.f32 %v387, %v396
    %v399 = vmul.f32 %v388, %v396
    %v400 = vmul.f32 %v389, %v396
    %v401 = vmul.f32 %v390, %v396
    %v402 = vld [vmem:[%s4] sm:$0x1]
    %v404 = vlaneseq
    %v405 = vshrl.u32 %v404, 7
    %v406 = vsub.s32 0, %v405
    %v407 = vrot.slane %v402, %v406
    %v409 = vadd.f32 %v398, %v407
    %v410 = vadd.f32 %v399, %v407
    %v411 = vadd.f32 %v400, %v407
    %v412 = vadd.f32 %v401, %v407
    %v413 = vld [vmem:[#allocation7] sm:$0xff]
    %v414 = vld [vmem:[#allocation7 + $0x8] sm:$0xff]
    %v415 = vld [vmem:[#allocation7 + $0x10] sm:$0xff]
    %v416 = vld [vmem:[#allocation7 + $0x18] sm:$0xff]
    %v417 = vld [vmem:[#allocation7 + $0x20] sm:$0xff]
    %v418 = vld [vmem:[#allocation7 + $0x28] sm:$0xff]
    %v419 = vld [vmem:[#allocation7 + $0x30] sm:$0xff]
    %v420 = vld [vmem:[#allocation7 + $0x38] sm:$0xff]
    %v421 = vld [vmem:[#allocation7 + $0x40] sm:$0xff]
    %v422 = vld [vmem:[#allocation7 + $0x48] sm:$0xff]
    %v423 = vld [vmem:[#allocation7 + $0x50] sm:$0xff]
    %v424 = vld [vmem:[#allocation7 + $0x58] sm:$0xff]
    %v425 = vld [vmem:[#allocation7 + $0x60] sm:$0xff]
    %v426 = vld [vmem:[#allocation7 + $0x68] sm:$0xff]
    %v427 = vld [vmem:[#allocation7 + $0x70] sm:$0xff]
    %v428 = vld [vmem:[#allocation7 + $0x78] sm:$0xff]
    %v429 = vld [vmem:[#allocation7 + $0x80] sm:$0xff]
    %v430 = vld [vmem:[#allocation7 + $0x88] sm:$0xff]
    %v431 = vld [vmem:[#allocation7 + $0x90] sm:$0xff]
    %v432 = vld [vmem:[#allocation7 + $0x98] sm:$0xff]
    %v433 = vld [vmem:[#allocation7 + $0xa0] sm:$0xff]
    %v434 = vld [vmem:[#allocation7 + $0xa8] sm:$0xff]
    %v435 = vld [vmem:[#allocation7 + $0xb0] sm:$0xff]
    %v436 = vld [vmem:[#allocation7 + $0xb8] sm:$0xff]
    %v437 = vld [vmem:[#allocation7 + $0xc0] sm:$0xff]
    %v438 = vld [vmem:[#allocation7 + $0xc8] sm:$0xff]
    %v439 = vld [vmem:[#allocation7 + $0xd0] sm:$0xff]
    %v440 = vld [vmem:[#allocation7 + $0xd8] sm:$0xff]
    %v441 = vld [vmem:[#allocation7 + $0xe0] sm:$0xff]
    %v442 = vld [vmem:[#allocation7 + $0xe8] sm:$0xff]
    %v443 = vld [vmem:[#allocation7 + $0xf0] sm:$0xff]
    %v444 = vld [vmem:[#allocation7 + $0xf8] sm:$0xff]
    %v445 = vld [vmem:[%s6] sm:$0x3]
    %v447 = vlaneseq
    %v448 = vshrl.u32 %v447, 7
    %v449 = vsub.s32 0, %v448
    %v450 = vrot.slane %v445, %v449
    %v451 = vlaneseq
    %v452 = vshrl.u32 %v451, 7
    %v453 = vsub.s32 1, %v452
    %v454 = vrot.slane %v445, %v453
    %v457 = vand.u32 %v414, 4294901760
    %458 = vmatprep.subr.mxu0 %v457
    %v459 = vand.u32 %v413, 4294901760
    %460 = vmatpush1.msra.mxu0 %v459
    %v461 = vand.u32 %v416, 4294901760
    %462 = vmatprep.subr.mxu0 %v461
    %v463 = vand.u32 %v415, 4294901760
    %464 = vmatpush1.msra.mxu0 %v463
    %v465 = vand.u32 %v418, 4294901760
    %466 = vmatprep.subr.mxu0 %v465
    %v467 = vand.u32 %v417, 4294901760
    %468 = vmatpush1.msra.mxu0 %v467
    %v469 = vand.u32 %v420, 4294901760
    %470 = vmatprep.subr.mxu0 %v469
    %v471 = vand.u32 %v419, 4294901760
    %472 = vmatpush1.msra.mxu0 %v471
    %v473 = vand.u32 %v422, 4294901760
    %474 = vmatprep.subr.mxu0 %v473
    %v475 = vand.u32 %v421, 4294901760
    %476 = vmatpush1.msra.mxu0 %v475
    %v477 = vand.u32 %v424, 4294901760
    %478 = vmatprep.subr.mxu0 %v477
    %v479 = vand.u32 %v423, 4294901760
    %480 = vmatpush1.msra.mxu0 %v479
    %v481 = vand.u32 %v426, 4294901760
    %482 = vmatprep.subr.mxu0 %v481
    %v483 = vand.u32 %v425, 4294901760
    %484 = vmatpush1.msra.mxu0 %v483
    %v485 = vand.u32 %v428, 4294901760
    %486 = vmatprep.subr.mxu0 %v485
    %v487 = vand.u32 %v427, 4294901760
    %488 = vmatpush1.msra.mxu0 %v487
    %v489 = vand.u32 %v430, 4294901760
    %490 = vmatprep.subr.mxu0 %v489
    %v491 = vand.u32 %v429, 4294901760
    %492 = vmatpush1.msra.mxu0 %v491
    %v493 = vand.u32 %v432, 4294901760
    %494 = vmatprep.subr.mxu0 %v493
    %v495 = vand.u32 %v431, 4294901760
    %496 = vmatpush1.msra.mxu0 %v495
    %v497 = vand.u32 %v434, 4294901760
    %498 = vmatprep.subr.mxu0 %v497
    %v499 = vand.u32 %v433, 4294901760
    %500 = vmatpush1.msra.mxu0 %v499
    %v501 = vand.u32 %v436, 4294901760
    %502 = vmatprep.subr.mxu0 %v501
    %v503 = vand.u32 %v435, 4294901760
    %504 = vmatpush1.msra.mxu0 %v503
    %v505 = vand.u32 %v438, 4294901760
    %506 = vmatprep.subr.mxu0 %v505
    %v507 = vand.u32 %v437, 4294901760
    %508 = vmatpush1.msra.mxu0 %v507
    %v509 = vand.u32 %v440, 4294901760
    %510 = vmatprep.subr.mxu0 %v509
    %v511 = vand.u32 %v439, 4294901760
    %512 = vmatpush1.msra.mxu0 %v511
    %v513 = vand.u32 %v442, 4294901760
    %514 = vmatprep.subr.mxu0 %v513
    %v515 = vand.u32 %v441, 4294901760
    %516 = vmatpush1.msra.mxu0 %v515
    %v517 = vand.u32 %v444, 4294901760
    %518 = vmatprep.subr.mxu0 %v517
    %v519 = vand.u32 %v443, 4294901760
    %520 = vmatpush1.msra.mxu0 %v519
    %521 = vmatprep.subr.mxu0 0.0
    %522 = vmatpush1.msra.mxu0 0.0
    %523 = vmatprep.subr.mxu0 0.0
    %524 = vmatpush1.msra.mxu0 0.0
    %525 = vmatprep.subr.mxu0 0.0
    %526 = vmatpush1.msra.mxu0 0.0
    %527 = vmatprep.subr.mxu0 0.0
    %528 = vmatpush1.msra.mxu0 0.0
    %529 = vmatprep.subr.mxu0 0.0
    %530 = vmatpush1.msra.mxu0 0.0
    %531 = vmatprep.subr.mxu0 0.0
    %532 = vmatpush1.msra.mxu0 0.0
    %533 = vmatprep.subr.mxu0 0.0
    %534 = vmatpush1.msra.mxu0 0.0
    %535 = vmatprep.subr.mxu0 0.0
    %536 = vmatpush1.msra.mxu0 0.0
    %537 = vmatprep.subr.mxu0 0.0
    %538 = vmatpush1.msra.mxu0 0.0
    %539 = vmatprep.subr.mxu0 0.0
    %540 = vmatpush1.msra.mxu0 0.0
    %541 = vmatprep.subr.mxu0 0.0
    %542 = vmatpush1.msra.mxu0 0.0
    %543 = vmatprep.subr.mxu0 0.0
    %544 = vmatpush1.msra.mxu0 0.0
    %545 = vmatprep.subr.mxu0 0.0
    %546 = vmatpush1.msra.mxu0 0.0
    %547 = vmatprep.subr.mxu0 0.0
    %548 = vmatpush1.msra.mxu0 0.0
    %549 = vmatprep.subr.mxu0 0.0
    %550 = vmatpush1.msra.mxu0 0.0
    %551 = vmatprep.subr.mxu0 0.0
    %552 = vmatpush1.msra.mxu0 0.0
    %553 = vmatprep.mubr.f32.mxu0 0.0
    %v554 = vand.u32 %v409, 4294901760
    %v555 = vsub.f32 %v409, %v554
    %v556 = vand.u32 %v555, 4294901760
    %v557 = vsub.f32 %v555, %v556
    %v558 = vand.u32 %v557, 4294901760
    %559 = vmatmul.mubr.f32.gmra.mrb[0].mxu0 %v558
    %v560 = vpop.f32.mrb[0].mxu0
    %v561 = vadd.f32 %v450, %v560
    %v562 = vpop.f32.mrb[0].mxu0
    %v563 = vadd.f32 %v454, %v562
    %564 = vmatprep.mubr.f32.mxu0 0.0
    %v565 = vand.u32 %v410, 4294901760
    %v566 = vsub.f32 %v410, %v565
    %v567 = vand.u32 %v566, 4294901760
    %v568 = vsub.f32 %v566, %v567
    %v569 = vand.u32 %v568, 4294901760
    %570 = vmatmul.mubr.f32.gmra.mrb[0].mxu0 %v569
    %v571 = vpop.f32.mrb[0].mxu0
    %v572 = vadd.f32 %v450, %v571
    %v573 = vpop.f32.mrb[0].mxu0
    %v574 = vadd.f32 %v454, %v573
    %575 = vmatprep.mubr.f32.mxu0 0.0
    %v576 = vand.u32 %v411, 4294901760
    %v577 = vsub.f32 %v411, %v576
    %v578 = vand.u32 %v577, 4294901760
    %v579 = vsub.f32 %v577, %v578
    %v580 = vand.u32 %v579, 4294901760
    %581 = vmatmul.mubr.f32.gmra.mrb[0].mxu0 %v580
    %v582 = vpop.f32.mrb[0].mxu0
    %v583 = vadd.f32 %v450, %v582
    %v584 = vpop.f32.mrb[0].mxu0
    %v585 = vadd.f32 %v454, %v584
    %586 = vmatprep.mubr.f32.mxu0 0.0
    %v587 = vand.u32 %v412, 4294901760
    %v588 = vsub.f32 %v412, %v587
    %v589 = vand.u32 %v588, 4294901760
    %v590 = vsub.f32 %v588, %v589
    %v591 = vand.u32 %v590, 4294901760
    %592 = vmatmul.mubr.f32.gmra.mrb[0].mxu0 %v591
    %v593 = vpop.f32.mrb[0].mxu0
    %v594 = vadd.f32 %v450, %v593
    %v595 = vpop.f32.mrb[0].mxu0
    %v596 = vadd.f32 %v454, %v595
    %597 = vdwg.mxu0
    %v598 = vand.u32 %v414, 4294901760
    %v599 = vsub.f32 %v414, %v598
    %v600 = vand.u32 %v599, 4294901760
    %v601 = vsub.f32 %v599, %v600
    %v602 = vand.u32 %v601, 4294901760
    %603 = vmatprep.subr.mxu0 %v602
    %v604 = vand.u32 %v413, 4294901760
    %v605 = vsub.f32 %v413, %v604
    %v606 = vand.u32 %v605, 4294901760
    %v607 = vsub.f32 %v605, %v606
    %v608 = vand.u32 %v607, 4294901760
    %609 = vmatpush1.msra.mxu0 %v608
    %v610 = vand.u32 %v416, 4294901760
    %v611 = vsub.f32 %v416, %v610
    %v612 = vand.u32 %v611, 4294901760
    %v613 = vsub.f32 %v611, %v612
    %v614 = vand.u32 %v613, 4294901760
    %615 = vmatprep.subr.mxu0 %v614
    %v616 = vand.u32 %v415, 4294901760
    %v617 = vsub.f32 %v415, %v616
    %v618 = vand.u32 %v617, 4294901760
    %v619 = vsub.f32 %v617, %v618
    %v620 = vand.u32 %v619, 4294901760
    %621 = vmatpush1.msra.mxu0 %v620
    %v622 = vand.u32 %v418, 4294901760
    %v623 = vsub.f32 %v418, %v622
    %v624 = vand.u32 %v623, 4294901760
    %v625 = vsub.f32 %v623, %v624
    %v626 = vand.u32 %v625, 4294901760
    %627 = vmatprep.subr.mxu0 %v626
    %v628 = vand.u32 %v417, 4294901760
    %v629 = vsub.f32 %v417, %v628
    %v630 = vand.u32 %v629, 4294901760
    %v631 = vsub.f32 %v629, %v630
    %v632 = vand.u32 %v631, 4294901760
    %633 = vmatpush1.msra.mxu0 %v632
    %v634 = vand.u32 %v420, 4294901760
    %v635 = vsub.f32 %v420, %v634
    %v636 = vand.u32 %v635, 4294901760
    %v637 = vsub.f32 %v635, %v636
    %v638 = vand.u32 %v637, 4294901760
    %639 = vmatprep.subr.mxu0 %v638
    %v640 = vand.u32 %v419, 4294901760
    %v641 = vsub.f32 %v419, %v640
    %v642 = vand.u32 %v641, 4294901760
    %v643 = vsub.f32 %v641, %v642
    %v644 = vand.u32 %v643, 4294901760
    %645 = vmatpush1.msra.mxu0 %v644
    %v646 = vand.u32 %v422, 4294901760
    %v647 = vsub.f32 %v422, %v646
    %v648 = vand.u32 %v647, 4294901760
    %v649 = vsub.f32 %v647, %v648
    %v650 = vand.u32 %v649, 4294901760
    %651 = vmatprep.subr.mxu0 %v650
    %v652 = vand.u32 %v421, 4294901760
    %v653 = vsub.f32 %v421, %v652
    %v654 = vand.u32 %v653, 4294901760
    %v655 = vsub.f32 %v653, %v654
    %v656 = vand.u32 %v655, 4294901760
    %657 = vmatpush1.msra.mxu0 %v656
    %v658 = vand.u32 %v424, 4294901760
    %v659 = vsub.f32 %v424, %v658
    %v660 = vand.u32 %v659, 4294901760
    %v661 = vsub.f32 %v659, %v660
    %v662 = vand.u32 %v661, 4294901760
    %663 = vmatprep.subr.mxu0 %v662
    %v664 = vand.u32 %v423, 4294901760
    %v665 = vsub.f32 %v423, %v664
    %v666 = vand.u32 %v665, 4294901760
    %v667 = vsub.f32 %v665, %v666
    %v668 = vand.u32 %v667, 4294901760
    %669 = vmatpush1.msra.mxu0 %v668
    %v670 = vand.u32 %v426, 4294901760
    %v671 = vsub.f32 %v426, %v670
    %v672 = vand.u32 %v671, 4294901760
    %v673 = vsub.f32 %v671, %v672
    %v674 = vand.u32 %v673, 4294901760
    %675 = vmatprep.subr.mxu0 %v674
    %v676 = vand.u32 %v425, 4294901760
    %v677 = vsub.f32 %v425, %v676
    %v678 = vand.u32 %v677, 4294901760
    %v679 = vsub.f32 %v677, %v678
    %v680 = vand.u32 %v679, 4294901760
    %681 = vmatpush1.msra.mxu0 %v680
    %v682 = vand.u32 %v428, 4294901760
    %v683 = vsub.f32 %v428, %v682
    %v684 = vand.u32 %v683, 4294901760
    %v685 = vsub.f32 %v683, %v684
    %v686 = vand.u32 %v685, 4294901760
    %687 = vmatprep.subr.mxu0 %v686
    %v688 = vand.u32 %v427, 4294901760
    %v689 = vsub.f32 %v427, %v688
    %v690 = vand.u32 %v689, 4294901760
    %v691 = vsub.f32 %v689, %v690
    %v692 = vand.u32 %v691, 4294901760
    %693 = vmatpush1.msra.mxu0 %v692
    %v694 = vand.u32 %v430, 4294901760
    %v695 = vsub.f32 %v430, %v694
    %v696 = vand.u32 %v695, 4294901760
    %v697 = vsub.f32 %v695, %v696
    %v698 = vand.u32 %v697, 4294901760
    %699 = vmatprep.subr.mxu0 %v698
    %v700 = vand.u32 %v429, 4294901760
    %v701 = vsub.f32 %v429, %v700
    %v702 = vand.u32 %v701, 4294901760
    %v703 = vsub.f32 %v701, %v702
    %v704 = vand.u32 %v703, 4294901760
    %705 = vmatpush1.msra.mxu0 %v704
    %v706 = vand.u32 %v432, 4294901760
    %v707 = vsub.f32 %v432, %v706
    %v708 = vand.u32 %v707, 4294901760
    %v709 = vsub.f32 %v707, %v708
    %v710 = vand.u32 %v709, 4294901760
    %711 = vmatprep.subr.mxu0 %v710
    %v712 = vand.u32 %v431, 4294901760
    %v713 = vsub.f32 %v431, %v712
    %v714 = vand.u32 %v713, 4294901760
    %v715 = vsub.f32 %v713, %v714
    %v716 = vand.u32 %v715, 4294901760
    %717 = vmatpush1.msra.mxu0 %v716
    %v718 = vand.u32 %v434, 4294901760
    %v719 = vsub.f32 %v434, %v718
    %v720 = vand.u32 %v719, 4294901760
    %v721 = vsub.f32 %v719, %v720
    %v722 = vand.u32 %v721, 4294901760
    %723 = vmatprep.subr.mxu0 %v722
    %v724 = vand.u32 %v433, 4294901760
    %v725 = vsub.f32 %v433, %v724
    %v726 = vand.u32 %v725, 4294901760
    %v727 = vsub.f32 %v725, %v726
    %v728 = vand.u32 %v727, 4294901760
    %729 = vmatpush1.msra.mxu0 %v728
    %v730 = vand.u32 %v436, 4294901760
    %v731 = vsub.f32 %v436, %v730
    %v732 = vand.u32 %v731, 4294901760
    %v733 = vsub.f32 %v731, %v732
    %v734 = vand.u32 %v733, 4294901760
    %735 = vmatprep.subr.mxu0 %v734
    %v736 = vand.u32 %v435, 4294901760
    %v737 = vsub.f32 %v435, %v736
    %v738 = vand.u32 %v737, 4294901760
    %v739 = vsub.f32 %v737, %v738
    %v740 = vand.u32 %v739, 4294901760
    %741 = vmatpush1.msra.mxu0 %v740
    %v742 = vand.u32 %v438, 4294901760
    %v743 = vsub.f32 %v438, %v742
    %v744 = vand.u32 %v743, 4294901760
    %v745 = vsub.f32 %v743, %v744
    %v746 = vand.u32 %v745, 4294901760
    %747 = vmatprep.subr.mxu0 %v746
    %v748 = vand.u32 %v437, 4294901760
    %v749 = vsub.f32 %v437, %v748
    %v750 = vand.u32 %v749, 4294901760
    %v751 = vsub.f32 %v749, %v750
    %v752 = vand.u32 %v751, 4294901760
    %753 = vmatpush1.msra.mxu0 %v752
    %v754 = vand.u32 %v440, 4294901760
    %v755 = vsub.f32 %v440, %v754
    %v756 = vand.u32 %v755, 4294901760
    %v757 = vsub.f32 %v755, %v756
    %v758 = vand.u32 %v757, 4294901760
    %759 = vmatprep.subr.mxu0 %v758
    %v760 = vand.u32 %v439, 4294901760
    %v761 = vsub.f32 %v439, %v760
    %v762 = vand.u32 %v761, 4294901760
    %v763 = vsub.f32 %v761, %v762
    %v764 = vand.u32 %v763, 4294901760
    %765 = vmatpush1.msra.mxu0 %v764
    %v766 = vand.u32 %v442, 4294901760
    %v767 = vsub.f32 %v442, %v766
    %v768 = vand.u32 %v767, 4294901760
    %v769 = vsub.f32 %v767, %v768
    %v770 = vand.u32 %v769, 4294901760
    %771 = vmatprep.subr.mxu0 %v770
    %v772 = vand.u32 %v441, 4294901760
    %v773 = vsub.f32 %v441, %v772
    %v774 = vand.u32 %v773, 4294901760
    %v775 = vsub.f32 %v773, %v774
    %v776 = vand.u32 %v775, 4294901760
    %777 = vmatpush1.msra.mxu0 %v776
    %v778 = vand.u32 %v444, 4294901760
    %v779 = vsub.f32 %v444, %v778
    %v780 = vand.u32 %v779, 4294901760
    %v781 = vsub.f32 %v779, %v780
    %v782 = vand.u32 %v781, 4294901760
    %783 = vmatprep.subr.mxu0 %v782
    %v784 = vand.u32 %v443, 4294901760
    %v785 = vsub.f32 %v443, %v784
    %v786 = vand.u32 %v785, 4294901760
    %v787 = vsub.f32 %v785, %v786
    %v788 = vand.u32 %v787, 4294901760
    %789 = vmatpush1.msra.mxu0 %v788
    %790 = vmatprep.subr.mxu0 0.0
    %791 = vmatpush1.msra.mxu0 0.0
    %792 = vmatprep.subr.mxu0 0.0
    %793 = vmatpush1.msra.mxu0 0.0
    %794 = vmatprep.subr.mxu0 0.0
    %795 = vmatpush1.msra.mxu0 0.0
    %796 = vmatprep.subr.mxu0 0.0
    %797 = vmatpush1.msra.mxu0 0.0
    %798 = vmatprep.subr.mxu0 0.0
    %799 = vmatpush1.msra.mxu0 0.0
    %800 = vmatprep.subr.mxu0 0.0
    %801 = vmatpush1.msra.mxu0 0.0
    %802 = vmatprep.subr.mxu0 0.0
    %803 = vmatpush1.msra.mxu0 0.0
    %804 = vmatprep.subr.mxu0 0.0
    %805 = vmatpush1.msra.mxu0 0.0
    %806 = vmatprep.subr.mxu0 0.0
    %807 = vmatpush1.msra.mxu0 0.0
    %808 = vmatprep.subr.mxu0 0.0
    %809 = vmatpush1.msra.mxu0 0.0
    %810 = vmatprep.subr.mxu0 0.0
    %811 = vmatpush1.msra.mxu0 0.0
    %812 = vmatprep.subr.mxu0 0.0
    %813 = vmatpush1.msra.mxu0 0.0
    %814 = vmatprep.subr.mxu0 0.0
    %815 = vmatpush1.msra.mxu0 0.0
    %816 = vmatprep.subr.mxu0 0.0
    %817 = vmatpush1.msra.mxu0 0.0
    %818 = vmatprep.subr.mxu0 0.0
    %819 = vmatpush1.msra.mxu0 0.0
    %820 = vmatprep.subr.mxu0 0.0
    %821 = vmatpush1.msra.mxu0 0.0
    %822 = vmatprep.mubr.f32.mxu0 0.0
    %v823 = vand.u32 %v409, 4294901760
    %824 = vmatmul.mubr.f32.gmra.mrb[0].mxu0 %v823
    %v825 = vpop.f32.mrb[0].mxu0
    %v826 = vadd.f32 %v561, %v825
    %v827 = vpop.f32.mrb[0].mxu0
    %v828 = vadd.f32 %v563, %v827
    %829 = vmatprep.mubr.f32.mxu0 0.0
    %v830 = vand.u32 %v410, 4294901760
    %831 = vmatmul.mubr.f32.gmra.mrb[0].mxu0 %v830
    %v832 = vpop.f32.mrb[0].mxu0
    %v833 = vadd.f32 %v572, %v832
    %v834 = vpop.f32.mrb[0].mxu0
    %v835 = vadd.f32 %v574, %v834
    %836 = vmatprep.mubr.f32.mxu0 0.0
    %v837 = vand.u32 %v411, 4294901760
    %838 = vmatmul.mubr.f32.gmra.mrb[0].mxu0 %v837
    %v839 = vpop.f32.mrb[0].mxu0
    %v840 = vadd.f32 %v583, %v839
    %v841 = vpop.f32.mrb[0].mxu0
    %v842 = vadd.f32 %v585, %v841
    %843 = vmatprep.mubr.f32.mxu0 0.0
    %v844 = vand.u32 %v412, 4294901760
    %845 = vmatmul.mubr.f32.gmra.mrb[0].mxu0 %v844
    %v846 = vpop.f32.mrb[0].mxu0
    %v847 = vadd.f32 %v594, %v846
    %v848 = vpop.f32.mrb[0].mxu0
    %v849 = vadd.f32 %v596, %v848
    %850 = vdwg.mxu0
    %v851 = vand.u32 %v414, 4294901760
    %v852 = vsub.f32 %v414, %v851
    %853 = vmatprep.subr.mxu0 %v852
    %v854 = vand.u32 %v413, 4294901760
    %v855 = vsub.f32 %v413, %v854
    %856 = vmatpush1.msra.mxu0 %v855
    %v857 = vand.u32 %v416, 4294901760
    %v858 = vsub.f32 %v416, %v857
    %859 = vmatprep.subr.mxu0 %v858
    %v860 = vand.u32 %v415, 4294901760
    %v861 = vsub.f32 %v415, %v860
    %862 = vmatpush1.msra.mxu0 %v861
    %v863 = vand.u32 %v418, 4294901760
    %v864 = vsub.f32 %v418, %v863
    %865 = vmatprep.subr.mxu0 %v864
    %v866 = vand.u32 %v417, 4294901760
    %v867 = vsub.f32 %v417, %v866
    %868 = vmatpush1.msra.mxu0 %v867
    %v869 = vand.u32 %v420, 4294901760
    %v870 = vsub.f32 %v420, %v869
    %871 = vmatprep.subr.mxu0 %v870
    %v872 = vand.u32 %v419, 4294901760
    %v873 = vsub.f32 %v419, %v872
    %874 = vmatpush1.msra.mxu0 %v873
    %v875 = vand.u32 %v422, 4294901760
    %v876 = vsub.f32 %v422, %v875
    %877 = vmatprep.subr.mxu0 %v876
    %v878 = vand.u32 %v421, 4294901760
    %v879 = vsub.f32 %v421, %v878
    %880 = vmatpush1.msra.mxu0 %v879
    %v881 = vand.u32 %v424, 4294901760
    %v882 = vsub.f32 %v424, %v881
    %883 = vmatprep.subr.mxu0 %v882
    %v884 = vand.u32 %v423, 4294901760
    %v885 = vsub.f32 %v423, %v884
    %886 = vmatpush1.msra.mxu0 %v885
    %v887 = vand.u32 %v426, 4294901760
    %v888 = vsub.f32 %v426, %v887
    %889 = vmatprep.subr.mxu0 %v888
    %v890 = vand.u32 %v425, 4294901760
    %v891 = vsub.f32 %v425, %v890
    %892 = vmatpush1.msra.mxu0 %v891
    %v893 = vand.u32 %v428, 4294901760
    %v894 = vsub.f32 %v428, %v893
    %895 = vmatprep.subr.mxu0 %v894
    %v896 = vand.u32 %v427, 4294901760
    %v897 = vsub.f32 %v427, %v896
    %898 = vmatpush1.msra.mxu0 %v897
    %v899 = vand.u32 %v430, 4294901760
    %v900 = vsub.f32 %v430, %v899
    %901 = vmatprep.subr.mxu0 %v900
    %v902 = vand.u32 %v429, 4294901760
    %v903 = vsub.f32 %v429, %v902
    %904 = vmatpush1.msra.mxu0 %v903
    %v905 = vand.u32 %v432, 4294901760
    %v906 = vsub.f32 %v432, %v905
    %907 = vmatprep.subr.mxu0 %v906
    %v908 = vand.u32 %v431, 4294901760
    %v909 = vsub.f32 %v431, %v908
    %910 = vmatpush1.msra.mxu0 %v909
    %v911 = vand.u32 %v434, 4294901760
    %v912 = vsub.f32 %v434, %v911
    %913 = vmatprep.subr.mxu0 %v912
    %v914 = vand.u32 %v433, 4294901760
    %v915 = vsub.f32 %v433, %v914
    %916 = vmatpush1.msra.mxu0 %v915
    %v917 = vand.u32 %v436, 4294901760
    %v918 = vsub.f32 %v436, %v917
    %919 = vmatprep.subr.mxu0 %v918
    %v920 = vand.u32 %v435, 4294901760
    %v921 = vsub.f32 %v435, %v920
    %922 = vmatpush1.msra.mxu0 %v921
    %v923 = vand.u32 %v438, 4294901760
    %v924 = vsub.f32 %v438, %v923
    %925 = vmatprep.subr.mxu0 %v924
    %v926 = vand.u32 %v437, 4294901760
    %v927 = vsub.f32 %v437, %v926
    %928 = vmatpush1.msra.mxu0 %v927
    %v929 = vand.u32 %v440, 4294901760
    %v930 = vsub.f32 %v440, %v929
    %931 = vmatprep.subr.mxu0 %v930
    %v932 = vand.u32 %v439, 4294901760
    %v933 = vsub.f32 %v439, %v932
    %934 = vmatpush1.msra.mxu0 %v933
    %v935 = vand.u32 %v442, 4294901760
    %v936 = vsub.f32 %v442, %v935
    %937 = vmatprep.subr.mxu0 %v936
    %v938 = vand.u32 %v441, 4294901760
    %v939 = vsub.f32 %v441, %v938
    %940 = vmatpush1.msra.mxu0 %v939
    %v941 = vand.u32 %v444, 4294901760
    %v942 = vsub.f32 %v444, %v941
    %943 = vmatprep.subr.mxu0 %v942
    %v944 = vand.u32 %v443, 4294901760
    %v945 = vsub.f32 %v443, %v944
    %946 = vmatpush1.msra.mxu0 %v945
    %947 = vmatprep.subr.mxu0 0.0
    %948 = vmatpush1.msra.mxu0 0.0
    %949 = vmatprep.subr.mxu0 0.0
    %950 = vmatpush1.msra.mxu0 0.0
    %951 = vmatprep.subr.mxu0 0.0
    %952 = vmatpush1.msra.mxu0 0.0
    %953 = vmatprep.subr.mxu0 0.0
    %954 = vmatpush1.msra.mxu0 0.0
    %955 = vmatprep.subr.mxu0 0.0
    %956 = vmatpush1.msra.mxu0 0.0
    %957 = vmatprep.subr.mxu0 0.0
    %958 = vmatpush1.msra.mxu0 0.0
    %959 = vmatprep.subr.mxu0 0.0
    %960 = vmatpush1.msra.mxu0 0.0
    %961 = vmatprep.subr.mxu0 0.0
    %962 = vmatpush1.msra.mxu0 0.0
    %963 = vmatprep.subr.mxu0 0.0
    %964 = vmatpush1.msra.mxu0 0.0
    %965 = vmatprep.subr.mxu0 0.0
    %966 = vmatpush1.msra.mxu0 0.0
    %967 = vmatprep.subr.mxu0 0.0
    %968 = vmatpush1.msra.mxu0 0.0
    %969 = vmatprep.subr.mxu0 0.0
    %970 = vmatpush1.msra.mxu0 0.0
    %971 = vmatprep.subr.mxu0 0.0
    %972 = vmatpush1.msra.mxu0 0.0
    %973 = vmatprep.subr.mxu0 0.0
    %974 = vmatpush1.msra.mxu0 0.0
    %975 = vmatprep.subr.mxu0 0.0
    %976 = vmatpush1.msra.mxu0 0.0
    %977 = vmatprep.subr.mxu0 0.0
    %978 = vmatpush1.msra.mxu0 0.0
    %979 = vmatprep.mubr.f32.mxu0 0.0
    %v980 = vand.u32 %v409, 4294901760
    %v981 = vsub.f32 %v409, %v980
    %982 = vmatmul.mubr.f32.gmra.mrb[0].mxu0 %v981
    %v983 = vpop.f32.mrb[0].mxu0
    %v984 = vadd.f32 %v826, %v983
    %v985 = vpop.f32.mrb[0].mxu0
    %v986 = vadd.f32 %v828, %v985
    %987 = vmatprep.mubr.f32.mxu0 0.0
    %v988 = vand.u32 %v410, 4294901760
    %v989 = vsub.f32 %v410, %v988
    %990 = vmatmul.mubr.f32.gmra.mrb[0].mxu0 %v989
    %v991 = vpop.f32.mrb[0].mxu0
    %v992 = vadd.f32 %v833, %v991
    %v993 = vpop.f32.mrb[0].mxu0
    %v994 = vadd.f32 %v835, %v993
    %995 = vmatprep.mubr.f32.mxu0 0.0
    %v996 = vand.u32 %v411, 4294901760
    %v997 = vsub.f32 %v411, %v996
    %998 = vmatmul.mubr.f32.gmra.mrb[0].mxu0 %v997
    %v999 = vpop.f32.mrb[0].mxu0
    %v1000 = vadd.f32 %v840, %v999
    %v1001 = vpop.f32.mrb[0].mxu0
    %v1002 = vadd.f32 %v842, %v1001
    %1003 = vmatprep.mubr.f32.mxu0 0.0
    %v1004 = vand.u32 %v412, 4294901760
    %v1005 = vsub.f32 %v412, %v1004
    %1006 = vmatmul.mubr.f32.gmra.mrb[0].mxu0 %v1005
    %v1007 = vpop.f32.mrb[0].mxu0
    %v1008 = vadd.f32 %v847, %v1007
    %v1009 = vpop.f32.mrb[0].mxu0
    %v1010 = vadd.f32 %v849, %v1009
    %1011 = vdwg.mxu0
    %v1012 = vand.u32 %v414, 4294901760
    %1013 = vmatprep.subr.mxu0 %v1012
    %v1014 = vand.u32 %v413, 4294901760
    %1015 = vmatpush1.msra.mxu0 %v1014
    %v1016 = vand.u32 %v416, 4294901760
    %1017 = vmatprep.subr.mxu0 %v1016
    %v1018 = vand.u32 %v415, 4294901760
    %1019 = vmatpush1.msra.mxu0 %v1018
    %v1020 = vand.u32 %v418, 4294901760
    %1021 = vmatprep.subr.mxu0 %v1020
    %v1022 = vand.u32 %v417, 4294901760
    %1023 = vmatpush1.msra.mxu0 %v1022
    %v1024 = vand.u32 %v420, 4294901760
    %1025 = vmatprep.subr.mxu0 %v1024
    %v1026 = vand.u32 %v419, 4294901760
    %1027 = vmatpush1.msra.mxu0 %v1026
    %v1028 = vand.u32 %v422, 4294901760
    %1029 = vmatprep.subr.mxu0 %v1028
    %v1030 = vand.u32 %v421, 4294901760
    %1031 = vmatpush1.msra.mxu0 %v1030
    %v1032 = vand.u32 %v424, 4294901760
    %1033 = vmatprep.subr.mxu0 %v1032
    %v1034 = vand.u32 %v423, 4294901760
    %1035 = vmatpush1.msra.mxu0 %v1034
    %v1036 = vand.u32 %v426, 4294901760
    %1037 = vmatprep.subr.mxu0 %v1036
    %v1038 = vand.u32 %v425, 4294901760
    %1039 = vmatpush1.msra.mxu0 %v1038
    %v1040 = vand.u32 %v428, 4294901760
    %1041 = vmatprep.subr.mxu0 %v1040
    %v1042 = vand.u32 %v427, 4294901760
    %1043 = vmatpush1.msra.mxu0 %v1042
    %v1044 = vand.u32 %v430, 4294901760
    %1045 = vmatprep.subr.mxu0 %v1044
    %v1046 = vand.u32 %v429, 4294901760
    %1047 = vmatpush1.msra.mxu0 %v1046
    %v1048 = vand.u32 %v432, 4294901760
    %1049 = vmatprep.subr.mxu0 %v1048
    %v1050 = vand.u32 %v431, 4294901760
    %1051 = vmatpush1.msra.mxu0 %v1050
    %v1052 = vand.u32 %v434, 4294901760
    %1053 = vmatprep.subr.mxu0 %v1052
    %v1054 = vand.u32 %v433, 4294901760
    %1055 = vmatpush1.msra.mxu0 %v1054
    %v1056 = vand.u32 %v436, 4294901760
    %1057 = vmatprep.subr.mxu0 %v1056
    %v1058 = vand.u32 %v435, 4294901760
    %1059 = vmatpush1.msra.mxu0 %v1058
    %v1060 = vand.u32 %v438, 4294901760
    %1061 = vmatprep.subr.mxu0 %v1060
    %v1062 = vand.u32 %v437, 4294901760
    %1063 = vmatpush1.msra.mxu0 %v1062
    %v1064 = vand.u32 %v440, 4294901760
    %1065 = vmatprep.subr.mxu0 %v1064
    %v1066 = vand.u32 %v439, 4294901760
    %1067 = vmatpush1.msra.mxu0 %v1066
    %v1068 = vand.u32 %v442, 4294901760
    %1069 = vmatprep.subr.mxu0 %v1068
    %v1070 = vand.u32 %v441, 4294901760
    %1071 = vmatpush1.msra.mxu0 %v1070
    %v1072 = vand.u32 %v444, 4294901760
    %1073 = vmatprep.subr.mxu0 %v1072
    %v1074 = vand.u32 %v443, 4294901760
    %1075 = vmatpush1.msra.mxu0 %v1074
    %1076 = vmatprep.subr.mxu0 0.0
    %1077 = vmatpush1.msra.mxu0 0.0
    %1078 = vmatprep.subr.mxu0 0.0
    %1079 = vmatpush1.msra.mxu0 0.0
    %1080 = vmatprep.subr.mxu0 0.0
    %1081 = vmatpush1.msra.mxu0 0.0
    %1082 = vmatprep.subr.mxu0 0.0
    %1083 = vmatpush1.msra.mxu0 0.0
    %1084 = vmatprep.subr.mxu0 0.0
    %1085 = vmatpush1.msra.mxu0 0.0
    %1086 = vmatprep.subr.mxu0 0.0
    %1087 = vmatpush1.msra.mxu0 0.0
    %1088 = vmatprep.subr.mxu0 0.0
    %1089 = vmatpush1.msra.mxu0 0.0
    %1090 = vmatprep.subr.mxu0 0.0
    %1091 = vmatpush1.msra.mxu0 0.0
    %1092 = vmatprep.subr.mxu0 0.0
    %1093 = vmatpush1.msra.mxu0 0.0
    %1094 = vmatprep.subr.mxu0 0.0
    %1095 = vmatpush1.msra.mxu0 0.0
    %1096 = vmatprep.subr.mxu0 0.0
    %1097 = vmatpush1.msra.mxu0 0.0
    %1098 = vmatprep.subr.mxu0 0.0
    %1099 = vmatpush1.msra.mxu0 0.0
    %1100 = vmatprep.subr.mxu0 0.0
    %1101 = vmatpush1.msra.mxu0 0.0
    %1102 = vmatprep.subr.mxu0 0.0
    %1103 = vmatpush1.msra.mxu0 0.0
    %1104 = vmatprep.subr.mxu0 0.0
    %1105 = vmatpush1.msra.mxu0 0.0
    %1106 = vmatprep.subr.mxu0 0.0
    %1107 = vmatpush1.msra.mxu0 0.0
    %1108 = vmatprep.mubr.f32.mxu0 0.0
    %v1109 = vand.u32 %v409, 4294901760
    %v1110 = vsub.f32 %v409, %v1109
    %v1111 = vand.u32 %v1110, 4294901760
    %1112 = vmatmul.mubr.f32.gmra.mrb[0].mxu0 %v1111
    %v1113 = vpop.f32.mrb[0].mxu0
    %v1114 = vadd.f32 %v984, %v1113
    %v1115 = vpop.f32.mrb[0].mxu0
    %v1116 = vadd.f32 %v986, %v1115
    %1117 = vmatprep.mubr.f32.mxu0 0.0
    %v1118 = vand.u32 %v410, 4294901760
    %v1119 = vsub.f32 %v410, %v1118
    %v1120 = vand.u32 %v1119, 4294901760
    %1121 = vmatmul.mubr.f32.gmra.mrb[0].mxu0 %v1120
    %v1122 = vpop.f32.mrb[0].mxu0
    %v1123 = vadd.f32 %v992, %v1122
    %v1124 = vpop.f32.mrb[0].mxu0
    %v1125 = vadd.f32 %v994, %v1124
    %1126 = vmatprep.mubr.f32.mxu0 0.0
    %v1127 = vand.u32 %v411, 4294901760
    %v1128 = vsub.f32 %v411, %v1127
    %v1129 = vand.u32 %v1128, 4294901760
    %1130 = vmatmul.mubr.f32.gmra.mrb[0].mxu0 %v1129
    %v1131 = vpop.f32.mrb[0].mxu0
    %v1132 = vadd.f32 %v1000, %v1131
    %v1133 = vpop.f32.mrb[0].mxu0
    %v1134 = vadd.f32 %v1002, %v1133
    %1135 = vmatprep.mubr.f32.mxu0 0.0
    %v1136 = vand.u32 %v412, 4294901760
    %v1137 = vsub.f32 %v412, %v1136
    %v1138 = vand.u32 %v1137, 4294901760
    %1139 = vmatmul.mubr.f32.gmra.mrb[0].mxu0 %v1138
    %v1140 = vpop.f32.mrb[0].mxu0
    %v1141 = vadd.f32 %v1008, %v1140
    %v1142 = vpop.f32.mrb[0].mxu0
    %v1143 = vadd.f32 %v1010, %v1142
    %1144 = vdwg.mxu0
    %v1145 = vand.u32 %v414, 4294901760
    %v1146 = vsub.f32 %v414, %v1145
    %v1147 = vand.u32 %v1146, 4294901760
    %1148 = vmatprep.subr.mxu0 %v1147
    %v1149 = vand.u32 %v413, 4294901760
    %v1150 = vsub.f32 %v413, %v1149
    %v1151 = vand.u32 %v1150, 4294901760
    %1152 = vmatpush1.msra.mxu0 %v1151
    %v1153 = vand.u32 %v416, 4294901760
    %v1154 = vsub.f32 %v416, %v1153
    %v1155 = vand.u32 %v1154, 4294901760
    %1156 = vmatprep.subr.mxu0 %v1155
    %v1157 = vand.u32 %v415, 4294901760
    %v1158 = vsub.f32 %v415, %v1157
    %v1159 = vand.u32 %v1158, 4294901760
    %1160 = vmatpush1.msra.mxu0 %v1159
    %v1161 = vand.u32 %v418, 4294901760
    %v1162 = vsub.f32 %v418, %v1161
    %v1163 = vand.u32 %v1162, 4294901760
    %1164 = vmatprep.subr.mxu0 %v1163
    %v1165 = vand.u32 %v417, 4294901760
    %v1166 = vsub.f32 %v417, %v1165
    %v1167 = vand.u32 %v1166, 4294901760
    %1168 = vmatpush1.msra.mxu0 %v1167
    %v1169 = vand.u32 %v420, 4294901760
    %v1170 = vsub.f32 %v420, %v1169
    %v1171 = vand.u32 %v1170, 4294901760
    %1172 = vmatprep.subr.mxu0 %v1171
    %v1173 = vand.u32 %v419, 4294901760
    %v1174 = vsub.f32 %v419, %v1173
    %v1175 = vand.u32 %v1174, 4294901760
    %1176 = vmatpush1.msra.mxu0 %v1175
    %v1177 = vand.u32 %v422, 4294901760
    %v1178 = vsub.f32 %v422, %v1177
    %v1179 = vand.u32 %v1178, 4294901760
    %1180 = vmatprep.subr.mxu0 %v1179
    %v1181 = vand.u32 %v421, 4294901760
    %v1182 = vsub.f32 %v421, %v1181
    %v1183 = vand.u32 %v1182, 4294901760
    %1184 = vmatpush1.msra.mxu0 %v1183
    %v1185 = vand.u32 %v424, 4294901760
    %v1186 = vsub.f32 %v424, %v1185
    %v1187 = vand.u32 %v1186, 4294901760
    %1188 = vmatprep.subr.mxu0 %v1187
    %v1189 = vand.u32 %v423, 4294901760
    %v1190 = vsub.f32 %v423, %v1189
    %v1191 = vand.u32 %v1190, 4294901760
    %1192 = vmatpush1.msra.mxu0 %v1191
    %v1193 = vand.u32 %v426, 4294901760
    %v1194 = vsub.f32 %v426, %v1193
    %v1195 = vand.u32 %v1194, 4294901760
    %1196 = vmatprep.subr.mxu0 %v1195
    %v1197 = vand.u32 %v425, 4294901760
    %v1198 = vsub.f32 %v425, %v1197
    %v1199 = vand.u32 %v1198, 4294901760
    %1200 = vmatpush1.msra.mxu0 %v1199
    %v1201 = vand.u32 %v428, 4294901760
    %v1202 = vsub.f32 %v428, %v1201
    %v1203 = vand.u32 %v1202, 4294901760
    %1204 = vmatprep.subr.mxu0 %v1203
    %v1205 = vand.u32 %v427, 4294901760
    %v1206 = vsub.f32 %v427, %v1205
    %v1207 = vand.u32 %v1206, 4294901760
    %1208 = vmatpush1.msra.mxu0 %v1207
    %v1209 = vand.u32 %v430, 4294901760
    %v1210 = vsub.f32 %v430, %v1209
    %v1211 = vand.u32 %v1210, 4294901760
    %1212 = vmatprep.subr.mxu0 %v1211
    %v1213 = vand.u32 %v429, 4294901760
    %v1214 = vsub.f32 %v429, %v1213
    %v1215 = vand.u32 %v1214, 4294901760
    %1216 = vmatpush1.msra.mxu0 %v1215
    %v1217 = vand.u32 %v432, 4294901760
    %v1218 = vsub.f32 %v432, %v1217
    %v1219 = vand.u32 %v1218, 4294901760
    %1220 = vmatprep.subr.mxu0 %v1219
    %v1221 = vand.u32 %v431, 4294901760
    %v1222 = vsub.f32 %v431, %v1221
    %v1223 = vand.u32 %v1222, 4294901760
    %1224 = vmatpush1.msra.mxu0 %v1223
    %v1225 = vand.u32 %v434, 4294901760
    %v1226 = vsub.f32 %v434, %v1225
    %v1227 = vand.u32 %v1226, 4294901760
    %1228 = vmatprep.subr.mxu0 %v1227
    %v1229 = vand.u32 %v433, 4294901760
    %v1230 = vsub.f32 %v433, %v1229
    %v1231 = vand.u32 %v1230, 4294901760
    %1232 = vmatpush1.msra.mxu0 %v1231
    %v1233 = vand.u32 %v436, 4294901760
    %v1234 = vsub.f32 %v436, %v1233
    %v1235 = vand.u32 %v1234, 4294901760
    %1236 = vmatprep.subr.mxu0 %v1235
    %v1237 = vand.u32 %v435, 4294901760
    %v1238 = vsub.f32 %v435, %v1237
    %v1239 = vand.u32 %v1238, 4294901760
    %1240 = vmatpush1.msra.mxu0 %v1239
    %v1241 = vand.u32 %v438, 4294901760
    %v1242 = vsub.f32 %v438, %v1241
    %v1243 = vand.u32 %v1242, 4294901760
    %1244 = vmatprep.subr.mxu0 %v1243
    %v1245 = vand.u32 %v437, 4294901760
    %v1246 = vsub.f32 %v437, %v1245
    %v1247 = vand.u32 %v1246, 4294901760
    %1248 = vmatpush1.msra.mxu0 %v1247
    %v1249 = vand.u32 %v440, 4294901760
    %v1250 = vsub.f32 %v440, %v1249
    %v1251 = vand.u32 %v1250, 4294901760
    %1252 = vmatprep.subr.mxu0 %v1251
    %v1253 = vand.u32 %v439, 4294901760
    %v1254 = vsub.f32 %v439, %v1253
    %v1255 = vand.u32 %v1254, 4294901760
    %1256 = vmatpush1.msra.mxu0 %v1255
    %v1257 = vand.u32 %v442, 4294901760
    %v1258 = vsub.f32 %v442, %v1257
    %v1259 = vand.u32 %v1258, 4294901760
    %1260 = vmatprep.subr.mxu0 %v1259
    %v1261 = vand.u32 %v441, 4294901760
    %v1262 = vsub.f32 %v441, %v1261
    %v1263 = vand.u32 %v1262, 4294901760
    %1264 = vmatpush1.msra.mxu0 %v1263
    %v1265 = vand.u32 %v444, 4294901760
    %v1266 = vsub.f32 %v444, %v1265
    %v1267 = vand.u32 %v1266, 4294901760
    %1268 = vmatprep.subr.mxu0 %v1267
    %v1269 = vand.u32 %v443, 4294901760
    %v1270 = vsub.f32 %v443, %v1269
    %v1271 = vand.u32 %v1270, 4294901760
    %1272 = vmatpush1.msra.mxu0 %v1271
    %1273 = vmatprep.subr.mxu0 0.0
    %1274 = vmatpush1.msra.mxu0 0.0
    %1275 = vmatprep.subr.mxu0 0.0
    %1276 = vmatpush1.msra.mxu0 0.0
    %1277 = vmatprep.subr.mxu0 0.0
    %1278 = vmatpush1.msra.mxu0 0.0
    %1279 = vmatprep.subr.mxu0 0.0
    %1280 = vmatpush1.msra.mxu0 0.0
    %1281 = vmatprep.subr.mxu0 0.0
    %1282 = vmatpush1.msra.mxu0 0.0
    %1283 = vmatprep.subr.mxu0 0.0
    %1284 = vmatpush1.msra.mxu0 0.0
    %1285 = vmatprep.subr.mxu0 0.0
    %1286 = vmatpush1.msra.mxu0 0.0
    %1287 = vmatprep.subr.mxu0 0.0
    %1288 = vmatpush1.msra.mxu0 0.0
    %1289 = vmatprep.subr.mxu0 0.0
    %1290 = vmatpush1.msra.mxu0 0.0
    %1291 = vmatprep.subr.mxu0 0.0
    %1292 = vmatpush1.msra.mxu0 0.0
    %1293 = vmatprep.subr.mxu0 0.0
    %1294 = vmatpush1.msra.mxu0 0.0
    %1295 = vmatprep.subr.mxu0 0.0
    %1296 = vmatpush1.msra.mxu0 0.0
    %1297 = vmatprep.subr.mxu0 0.0
    %1298 = vmatpush1.msra.mxu0 0.0
    %1299 = vmatprep.subr.mxu0 0.0
    %1300 = vmatpush1.msra.mxu0 0.0
    %1301 = vmatprep.subr.mxu0 0.0
    %1302 = vmatpush1.msra.mxu0 0.0
    %1303 = vmatprep.subr.mxu0 0.0
    %1304 = vmatpush1.msra.mxu0 0.0
    %1305 = vmatprep.mubr.f32.mxu0 0.0
    %v1306 = vand.u32 %v409, 4294901760
    %1307 = vmatmul.mubr.f32.gmra.mrb[0].mxu0 %v1306
    %v1308 = vpop.f32.mrb[0].mxu0
    %v1309 = vadd.f32 %v1114, %v1308
    %v1310 = vpop.f32.mrb[0].mxu0
    %v1311 = vadd.f32 %v1116, %v1310
    %1312 = vmatprep.mubr.f32.mxu0 0.0
    %v1313 = vand.u32 %v410, 4294901760
    %1314 = vmatmul.mubr.f32.gmra.mrb[0].mxu0 %v1313
    %v1315 = vpop.f32.mrb[0].mxu0
    %v1316 = vadd.f32 %v1123, %v1315
    %v1317 = vpop.f32.mrb[0].mxu0
    %v1318 = vadd.f32 %v1125, %v1317
    %1319 = vmatprep.mubr.f32.mxu0 0.0
    %v1320 = vand.u32 %v411, 4294901760
    %1321 = vmatmul.mubr.f32.gmra.mrb[0].mxu0 %v1320
    %v1322 = vpop.f32.mrb[0].mxu0
    %v1323 = vadd.f32 %v1132, %v1322
    %v1324 = vpop.f32.mrb[0].mxu0
    %v1325 = vadd.f32 %v1134, %v1324
    %1326 = vmatprep.mubr.f32.mxu0 0.0
    %v1327 = vand.u32 %v412, 4294901760
    %1328 = vmatmul.mubr.f32.gmra.mrb[0].mxu0 %v1327
    %v1329 = vpop.f32.mrb[0].mxu0
    %v1330 = vadd.f32 %v1141, %v1329
    %v1331 = vpop.f32.mrb[0].mxu0
    %v1332 = vadd.f32 %v1143, %v1331
    %1333 = vdwg.mxu0
    %v1334 = vand.u32 %v414, 4294901760
    %1335 = vmatprep.subr.mxu0 %v1334
    %v1336 = vand.u32 %v413, 4294901760
    %1337 = vmatpush1.msra.mxu0 %v1336
    %v1338 = vand.u32 %v416, 4294901760
    %1339 = vmatprep.subr.mxu0 %v1338
    %v1340 = vand.u32 %v415, 4294901760
    %1341 = vmatpush1.msra.mxu0 %v1340
    %v1342 = vand.u32 %v418, 4294901760
    %1343 = vmatprep.subr.mxu0 %v1342
    %v1344 = vand.u32 %v417, 4294901760
    %1345 = vmatpush1.msra.mxu0 %v1344
    %v1346 = vand.u32 %v420, 4294901760
    %1347 = vmatprep.subr.mxu0 %v1346
    %v1348 = vand.u32 %v419, 4294901760
    %1349 = vmatpush1.msra.mxu0 %v1348
    %v1350 = vand.u32 %v422, 4294901760
    %1351 = vmatprep.subr.mxu0 %v1350
    %v1352 = vand.u32 %v421, 4294901760
    %1353 = vmatpush1.msra.mxu0 %v1352
    %v1354 = vand.u32 %v424, 4294901760
    %1355 = vmatprep.subr.mxu0 %v1354
    %v1356 = vand.u32 %v423, 4294901760
    %1357 = vmatpush1.msra.mxu0 %v1356
    %v1358 = vand.u32 %v426, 4294901760
    %1359 = vmatprep.subr.mxu0 %v1358
    %v1360 = vand.u32 %v425, 4294901760
    %1361 = vmatpush1.msra.mxu0 %v1360
    %v1362 = vand.u32 %v428, 4294901760
    %1363 = vmatprep.subr.mxu0 %v1362
    %v1364 = vand.u32 %v427, 4294901760
    %1365 = vmatpush1.msra.mxu0 %v1364
    %v1366 = vand.u32 %v430, 4294901760
    %1367 = vmatprep.subr.mxu0 %v1366
    %v1368 = vand.u32 %v429, 4294901760
    %1369 = vmatpush1.msra.mxu0 %v1368
    %v1370 = vand.u32 %v432, 4294901760
    %1371 = vmatprep.subr.mxu0 %v1370
    %v1372 = vand.u32 %v431, 4294901760
    %1373 = vmatpush1.msra.mxu0 %v1372
    %v1374 = vand.u32 %v434, 4294901760
    %1375 = vmatprep.subr.mxu0 %v1374
    %v1376 = vand.u32 %v433, 4294901760
    %1377 = vmatpush1.msra.mxu0 %v1376
    %v1378 = vand.u32 %v436, 4294901760
    %1379 = vmatprep.subr.mxu0 %v1378
    %v1380 = vand.u32 %v435, 4294901760
    %1381 = vmatpush1.msra.mxu0 %v1380
    %v1382 = vand.u32 %v438, 4294901760
    %1383 = vmatprep.subr.mxu0 %v1382
    %v1384 = vand.u32 %v437, 4294901760
    %1385 = vmatpush1.msra.mxu0 %v1384
    %v1386 = vand.u32 %v440, 4294901760
    %1387 = vmatprep.subr.mxu0 %v1386
    %v1388 = vand.u32 %v439, 4294901760
    %1389 = vmatpush1.msra.mxu0 %v1388
    %v1390 = vand.u32 %v442, 4294901760
    %1391 = vmatprep.subr.mxu0 %v1390
    %v1392 = vand.u32 %v441, 4294901760
    %1393 = vmatpush1.msra.mxu0 %v1392
    %v1394 = vand.u32 %v444, 4294901760
    %1395 = vmatprep.subr.mxu0 %v1394
    %v1396 = vand.u32 %v443, 4294901760
    %1397 = vmatpush1.msra.mxu0 %v1396
    %1398 = vmatprep.subr.mxu0 0.0
    %1399 = vmatpush1.msra.mxu0 0.0
    %1400 = vmatprep.subr.mxu0 0.0
    %1401 = vmatpush1.msra.mxu0 0.0
    %1402 = vmatprep.subr.mxu0 0.0
    %1403 = vmatpush1.msra.mxu0 0.0
    %1404 = vmatprep.subr.mxu0 0.0
    %1405 = vmatpush1.msra.mxu0 0.0
    %1406 = vmatprep.subr.mxu0 0.0
    %1407 = vmatpush1.msra.mxu0 0.0
    %1408 = vmatprep.subr.mxu0 0.0
    %1409 = vmatpush1.msra.mxu0 0.0
    %1410 = vmatprep.subr.mxu0 0.0
    %1411 = vmatpush1.msra.mxu0 0.0
    %1412 = vmatprep.subr.mxu0 0.0
    %1413 = vmatpush1.msra.mxu0 0.0
    %1414 = vmatprep.subr.mxu0 0.0
    %1415 = vmatpush1.msra.mxu0 0.0
    %1416 = vmatprep.subr.mxu0 0.0
    %1417 = vmatpush1.msra.mxu0 0.0
    %1418 = vmatprep.subr.mxu0 0.0
    %1419 = vmatpush1.msra.mxu0 0.0
    %1420 = vmatprep.subr.mxu0 0.0
    %1421 = vmatpush1.msra.mxu0 0.0
    %1422 = vmatprep.subr.mxu0 0.0
    %1423 = vmatpush1.msra.mxu0 0.0
    %1424 = vmatprep.subr.mxu0 0.0
    %1425 = vmatpush1.msra.mxu0 0.0
    %1426 = vmatprep.subr.mxu0 0.0
    %1427 = vmatpush1.msra.mxu0 0.0
    %1428 = vmatprep.subr.mxu0 0.0
    %1429 = vmatpush1.msra.mxu0 0.0
    %1430 = vmatprep.mubr.f32.mxu0 0.0
    %v1431 = vand.u32 %v409, 4294901760
    %1432 = vmatmul.mubr.f32.gmra.mrb[0].mxu0 %v1431
    %v1433 = vpop.f32.mrb[0].mxu0
    %v1434 = vadd.f32 %v1309, %v1433
    %v1435 = vpop.f32.mrb[0].mxu0
    %v1436 = vadd.f32 %v1311, %v1435
    %1437 = vmatprep.mubr.f32.mxu0 0.0
    %v1438 = vand.u32 %v410, 4294901760
    %1439 = vmatmul.mubr.f32.gmra.mrb[0].mxu0 %v1438
    %v1440 = vpop.f32.mrb[0].mxu0
    %v1441 = vadd.f32 %v1316, %v1440
    %v1442 = vpop.f32.mrb[0].mxu0
    %v1443 = vadd.f32 %v1318, %v1442
    %1444 = vmatprep.mubr.f32.mxu0 0.0
    %v1445 = vand.u32 %v411, 4294901760
    %1446 = vmatmul.mubr.f32.gmra.mrb[0].mxu0 %v1445
    %v1447 = vpop.f32.mrb[0].mxu0
    %v1448 = vadd.f32 %v1323, %v1447
    %v1449 = vpop.f32.mrb[0].mxu0
    %v1450 = vadd.f32 %v1325, %v1449
    %1451 = vmatprep.mubr.f32.mxu0 0.0
    %v1452 = vand.u32 %v412, 4294901760
    %1453 = vmatmul.mubr.f32.gmra.mrb[0].mxu0 %v1452
    %v1454 = vpop.f32.mrb[0].mxu0
    %v1455 = vadd.f32 %v1330, %v1454
    %v1456 = vpop.f32.mrb[0].mxu0
    %v1457 = vadd.f32 %v1332, %v1456
    %1458 = vdwg.mxu0
    %v1459 = vmul.f32 %v1434, 0.5
    %v1460 = vmul.f32 %v1436, 0.5
    %v1461 = vmul.f32 %v1441, 0.5
    %v1462 = vmul.f32 %v1443, 0.5
    %v1463 = vmul.f32 %v1448, 0.5
    %v1464 = vmul.f32 %v1450, 0.5
    %v1465 = vmul.f32 %v1455, 0.5
    %v1466 = vmul.f32 %v1457, 0.5
    %v1467 = vmul.f32 %v1434, 0.70710677
    %v1468 = vmul.f32 %v1436, 0.70710677
    %v1469 = vmul.f32 %v1441, 0.70710677
    %v1470 = vmul.f32 %v1443, 0.70710677
    %v1471 = vmul.f32 %v1448, 0.70710677
    %v1472 = vmul.f32 %v1450, 0.70710677
    %v1473 = vmul.f32 %v1455, 0.70710677
    %v1474 = vmul.f32 %v1457, 0.70710677
    %v1475 = verf.f32.pop %v1467
    %v1476 = verf.f32.pop %v1468
    %v1477 = verf.f32.pop %v1469
    %v1478 = verf.f32.pop %v1470
    %v1479 = verf.f32.pop %v1471
    %v1480 = verf.f32.pop %v1472
    %v1481 = verf.f32.pop %v1473
    %v1482 = verf.f32.pop %v1474
    %v1483 = vadd.f32 %v1475, 1.0
    %v1484 = vadd.f32 %v1476, 1.0
    %v1485 = vadd.f32 %v1477, 1.0
    %v1486 = vadd.f32 %v1478, 1.0
    %v1487 = vadd.f32 %v1479, 1.0
    %v1488 = vadd.f32 %v1480, 1.0
    %v1489 = vadd.f32 %v1481, 1.0
    %v1490 = vadd.f32 %v1482, 1.0
    %v1491 = vmul.f32 %v1459, %v1483
    %v1492 = vmul.f32 %v1460, %v1484
    %v1493 = vmul.f32 %v1461, %v1485
    %v1494 = vmul.f32 %v1462, %v1486
    %v1495 = vmul.f32 %v1463, %v1487
    %v1496 = vmul.f32 %v1464, %v1488
    %v1497 = vmul.f32 %v1465, %v1489
    %v1498 = vmul.f32 %v1466, %v1490
    %v1499 = vmul.f32 %v1491, %v1491
    %v1500 = vmul.f32 %v1492, %v1492
    %v1501 = vmul.f32 %v1493, %v1493
    %v1502 = vmul.f32 %v1494, %v1494
    %v1503 = vmul.f32 %v1495, %v1495
    %v1504 = vmul.f32 %v1496, %v1496
    %v1505 = vmul.f32 %v1497, %v1497
    %v1506 = vmul.f32 %v1498, %v1498
    %v1507 = vadd.f32 %v1499, %v1501
    %v1508 = vrot.slane %v1507, 4
    %v1509 = vadd.f32 %v1507, %v1508
    %v1510 = vrot.slane %v1509, 2
    %v1511 = vadd.f32 %v1509, %v1510
    %v1512 = vrot.slane %v1511, 1
    %v1513 = vadd.f32 %v1511, %v1512
    %v1514 = vadd.f32 %v1500, %v1502
    %v1515 = vrot.slane %v1514, 4
    %v1516 = vadd.f32 %v1514, %v1515
    %v1517 = vrot.slane %v1516, 2
    %v1518 = vadd.f32 %v1516, %v1517
    %v1519 = vrot.slane %v1518, 1
    %v1520 = vadd.f32 %v1518, %v1519
    %v1521 = vadd.f32 %v1503, %v1505
    %v1522 = vrot.slane %v1521, 4
    %v1523 = vadd.f32 %v1521, %v1522
    %v1524 = vrot.slane %v1523, 2
    %v1525 = vadd.f32 %v1523, %v1524
    %v1526 = vrot.slane %v1525, 1
    %v1527 = vadd.f32 %v1525, %v1526
    %v1528 = vadd.f32 %v1504, %v1506
    %v1529 = vrot.slane %v1528, 4
    %v1530 = vadd.f32 %v1528, %v1529
    %v1531 = vrot.slane %v1530, 2
    %v1532 = vadd.f32 %v1530, %v1531
    %v1533 = vrot.slane %v1532, 1
    %v1534 = vadd.f32 %v1532, %v1533
    %v1535 = vrsqrt.pop %v1513
    %v1536 = vmul.f32 %v1513, %v1535
    %vm1537 = vcmp.eq.f32.partialorder %v1513, inf
    %v1538 = vsel %vm1537, %v1513, %v1536
    %vm1539 = vcmp.eq.f32.partialorder %v1513, 0.0
    %v1540 = vand.u32 %v1513, 2147483648
    %v1541 = vsel %vm1539, %v1540, %v1538
    %v1542 = vrsqrt.pop %v1520
    %v1543 = vmul.f32 %v1520, %v1542
    %vm1544 = vcmp.eq.f32.partialorder %v1520, inf
    %v1545 = vsel %vm1544, %v1520, %v1543
    %vm1546 = vcmp.eq.f32.partialorder %v1520, 0.0
    %v1547 = vand.u32 %v1520, 2147483648
    %v1548 = vsel %vm1546, %v1547, %v1545
    %v1549 = vrsqrt.pop %v1527
    %v1550 = vmul.f32 %v1527, %v1549
    %vm1551 = vcmp.eq.f32.partialorder %v1527, inf
    %v1552 = vsel %vm1551, %v1527, %v1550
    %vm1553 = vcmp.eq.f32.partialorder %v1527, 0.0
    %v1554 = vand.u32 %v1527, 2147483648
    %v1555 = vsel %vm1553, %v1554, %v1552
    %v1556 = vrsqrt.pop %v1534
    %v1557 = vmul.f32 %v1534, %v1556
    %vm1558 = vcmp.eq.f32.partialorder %v1534, inf
    %v1559 = vsel %vm1558, %v1534, %v1557
    %vm1560 = vcmp.eq.f32.partialorder %v1534, 0.0
    %v1561 = vand.u32 %v1534, 2147483648
    %v1562 = vsel %vm1560, %v1561, %v1559
    %v1563 = vadd.f32 %v1541, %v1548
    %1564 = vadd.xlane.f32.xlu0 %v1563
    %v1565 = vpop.xlane.xlu0 %1564
    %v1566 = vadd.f32 %v1555, %v1562
    %1567 = vadd.xlane.f32.xlu0 %v1566
    %v1568 = vpop.xlane.xlu0 %1567
    %v1569 = vrcp.pop 256.0
    %v1570 = vmul.f32 %v1565, %v1569
    %v1571 = vmul.f32 %v1568, %v1569
    %v1572 = vadd.f32 %v1570, 1e-06
    %v1573 = vadd.f32 %v1571, 1e-06
    %v1574 = vrcp.pop %v1572
    %v1575 = vmul.f32 %v1541, %v1574
    %v1576 = vmul.f32 %v1548, %v1574
    %v1577 = vrcp.pop %v1573
    %v1578 = vmul.f32 %v1555, %v1577
    %v1579 = vmul.f32 %v1562, %v1577
    %v1580 = vld [vmem:[%s7] sm:$0x3]
    %v1581 = vmul.f32 %v1491, %v1575
    %v1582 = vmul.f32 %v1492, %v1576
    %v1583 = vmul.f32 %v1493, %v1575
    %v1584 = vmul.f32 %v1494, %v1576
    %v1585 = vmul.f32 %v1495, %v1578
    %v1586 = vmul.f32 %v1496, %v1579
    %v1587 = vmul.f32 %v1497, %v1578
    %v1588 = vmul.f32 %v1498, %v1579
    %v1590 = vlaneseq
    %v1591 = vshrl.u32 %v1590, 7
    %v1592 = vsub.s32 0, %v1591
    %v1593 = vrot.slane %v1580, %v1592
    %v1594 = vlaneseq
    %v1595 = vshrl.u32 %v1594, 7
    %v1596 = vsub.s32 1, %v1595
    %v1597 = vrot.slane %v1580, %v1596
    %v1600 = vmul.f32 %v1593, %v1581
    %v1601 = vmul.f32 %v1597, %v1582
    %v1602 = vmul.f32 %v1593, %v1583
    %v1603 = vmul.f32 %v1597, %v1584
    %v1604 = vmul.f32 %v1593, %v1585
    %v1605 = vmul.f32 %v1597, %v1586
    %v1606 = vmul.f32 %v1593, %v1587
    %v1607 = vmul.f32 %v1597, %v1588
    %v1608 = vld [vmem:[%s8] sm:$0x3]
    %v1610 = vlaneseq
    %v1611 = vshrl.u32 %v1610, 7
    %v1612 = vsub.s32 0, %v1611
    %v1613 = vrot.slane %v1608, %v1612
    %v1614 = vlaneseq
    %v1615 = vshrl.u32 %v1614, 7
    %v1616 = vsub.s32 1, %v1615
    %v1617 = vrot.slane %v1608, %v1616
    %v1620 = vadd.f32 %v1600, %v1613
    %v1621 = vadd.f32 %v1601, %v1617
    %v1622 = vadd.f32 %v1602, %v1613
    %v1623 = vadd.f32 %v1603, %v1617
    %v1624 = vadd.f32 %v1604, %v1613
    %v1625 = vadd.f32 %v1605, %v1617
    %v1626 = vadd.f32 %v1606, %v1613
    %v1627 = vadd.f32 %v1607, %v1617
    %v1628 = vadd.f32 %v1620, %v1491
    %v1629 = vadd.f32 %v1621, %v1492
    %v1630 = vadd.f32 %v1622, %v1493
    %v1631 = vadd.f32 %v1623, %v1494
    %v1632 = vadd.f32 %v1624, %v1495
    %v1633 = vadd.f32 %v1625, %v1496
    %v1634 = vadd.f32 %v1626, %v1497
    %v1635 = vadd.f32 %v1627, %v1498
    %v1636 = vld [vmem:[#allocation8] sm:$0xff]
    %v1637 = vld [vmem:[#allocation8 + $0x8] sm:$0xff]
    %v1638 = vld [vmem:[#allocation8 + $0x10] sm:$0xff]
    %v1639 = vld [vmem:[#allocation8 + $0x18] sm:$0xff]
    %v1640 = vld [vmem:[#allocation8 + $0x20] sm:$0xff]
    %v1641 = vld [vmem:[#allocation8 + $0x28] sm:$0xff]
    %v1642 = vld [vmem:[#allocation8 + $0x30] sm:$0xff]
    %v1643 = vld [vmem:[#allocation8 + $0x38] sm:$0xff]
    %v1644 = vld [vmem:[#allocation8 + $0x40] sm:$0xff]
    %v1645 = vld [vmem:[#allocation8 + $0x48] sm:$0xff]
    %v1646 = vld [vmem:[#allocation8 + $0x50] sm:$0xff]
    %v1647 = vld [vmem:[#allocation8 + $0x58] sm:$0xff]
    %v1648 = vld [vmem:[#allocation8 + $0x60] sm:$0xff]
    %v1649 = vld [vmem:[#allocation8 + $0x68] sm:$0xff]
    %v1650 = vld [vmem:[#allocation8 + $0x70] sm:$0xff]
    %v1651 = vld [vmem:[#allocation8 + $0x78] sm:$0xff]
    %v1652 = vld [vmem:[#allocation8 + $0x80] sm:$0xff]
    %v1653 = vld [vmem:[#allocation8 + $0x88] sm:$0xff]
    %v1654 = vld [vmem:[#allocation8 + $0x90] sm:$0xff]
    %v1655 = vld [vmem:[#allocation8 + $0x98] sm:$0xff]
    %v1656 = vld [vmem:[#allocation8 + $0xa0] sm:$0xff]
    %v1657 = vld [vmem:[#allocation8 + $0xa8] sm:$0xff]
    %v1658 = vld [vmem:[#allocation8 + $0xb0] sm:$0xff]
    %v1659 = vld [vmem:[#allocation8 + $0xb8] sm:$0xff]
    %v1660 = vld [vmem:[#allocation8 + $0xc0] sm:$0xff]
    %v1661 = vld [vmem:[#allocation8 + $0xc8] sm:$0xff]
    %v1662 = vld [vmem:[#allocation8 + $0xd0] sm:$0xff]
    %v1663 = vld [vmem:[#allocation8 + $0xd8] sm:$0xff]
    %v1664 = vld [vmem:[#allocation8 + $0xe0] sm:$0xff]
    %v1665 = vld [vmem:[#allocation8 + $0xe8] sm:$0xff]
    %v1666 = vld [vmem:[#allocation8 + $0xf0] sm:$0xff]
    %v1667 = vld [vmem:[#allocation8 + $0xf8] sm:$0xff]
    %v1668 = vld [vmem:[%s10] sm:$0x1]
    %v1670 = vlaneseq
    %v1671 = vshrl.u32 %v1670, 7
    %v1672 = vsub.s32 0, %v1671
    %v1673 = vrot.slane %v1668, %v1672
    %1675 = vmatprep.subr.mxu0 0.0
    %v1676 = vand.u32 %v1636, 4294901760
    %1677 = vmatpush1.msra.mxu0 %v1676
    %1678 = vmatprep.subr.mxu0 0.0
    %v1679 = vand.u32 %v1637, 4294901760
    %1680 = vmatpush1.msra.mxu0 %v1679
    %1681 = vmatprep.subr.mxu0 0.0
    %v1682 = vand.u32 %v1638, 4294901760
    %1683 = vmatpush1.msra.mxu0 %v1682
    %1684 = vmatprep.subr.mxu0 0.0
    %v1685 = vand.u32 %v1639, 4294901760
    %1686 = vmatpush1.msra.mxu0 %v1685
    %1687 = vmatprep.subr.mxu0 0.0
    %v1688 = vand.u32 %v1640, 4294901760
    %1689 = vmatpush1.msra.mxu0 %v1688
    %1690 = vmatprep.subr.mxu0 0.0
    %v1691 = vand.u32 %v1641, 4294901760
    %1692 = vmatpush1.msra.mxu0 %v1691
    %1693 = vmatprep.subr.mxu0 0.0
    %v1694 = vand.u32 %v1642, 4294901760
    %1695 = vmatpush1.msra.mxu0 %v1694
    %1696 = vmatprep.subr.mxu0 0.0
    %v1697 = vand.u32 %v1643, 4294901760
    %1698 = vmatpush1.msra.mxu0 %v1697
    %1699 = vmatprep.subr.mxu0 0.0
    %v1700 = vand.u32 %v1644, 4294901760
    %1701 = vmatpush1.msra.mxu0 %v1700
    %1702 = vmatprep.subr.mxu0 0.0
    %v1703 = vand.u32 %v1645, 4294901760
    %1704 = vmatpush1.msra.mxu0 %v1703
    %1705 = vmatprep.subr.mxu0 0.0
    %v1706 = vand.u32 %v1646, 4294901760
    %1707 = vmatpush1.msra.mxu0 %v1706
    %1708 = vmatprep.subr.mxu0 0.0
    %v1709 = vand.u32 %v1647, 4294901760
    %1710 = vmatpush1.msra.mxu0 %v1709
    %1711 = vmatprep.subr.mxu0 0.0
    %v1712 = vand.u32 %v1648, 4294901760
    %1713 = vmatpush1.msra.mxu0 %v1712
    %1714 = vmatprep.subr.mxu0 0.0
    %v1715 = vand.u32 %v1649, 4294901760
    %1716 = vmatpush1.msra.mxu0 %v1715
    %1717 = vmatprep.subr.mxu0 0.0
    %v1718 = vand.u32 %v1650, 4294901760
    %1719 = vmatpush1.msra.mxu0 %v1718
    %1720 = vmatprep.subr.mxu0 0.0
    %v1721 = vand.u32 %v1651, 4294901760
    %1722 = vmatpush1.msra.mxu0 %v1721
    %1723 = vmatprep.subr.mxu0 0.0
    %v1724 = vand.u32 %v1652, 4294901760
    %1725 = vmatpush1.msra.mxu0 %v1724
    %1726 = vmatprep.subr.mxu0 0.0
    %v1727 = vand.u32 %v1653, 4294901760
    %1728 = vmatpush1.msra.mxu0 %v1727
    %1729 = vmatprep.subr.mxu0 0.0
    %v1730 = vand.u32 %v1654, 4294901760
    %1731 = vmatpush1.msra.mxu0 %v1730
    %1732 = vmatprep.subr.mxu0 0.0
    %v1733 = vand.u32 %v1655, 4294901760
    %1734 = vmatpush1.msra.mxu0 %v1733
    %1735 = vmatprep.subr.mxu0 0.0
    %v1736 = vand.u32 %v1656, 4294901760
    %1737 = vmatpush1.msra.mxu0 %v1736
    %1738 = vmatprep.subr.mxu0 0.0
    %v1739 = vand.u32 %v1657, 4294901760
    %1740 = vmatpush1.msra.mxu0 %v1739
    %1741 = vmatprep.subr.mxu0 0.0
    %v1742 = vand.u32 %v1658, 4294901760
    %1743 = vmatpush1.msra.mxu0 %v1742
    %1744 = vmatprep.subr.mxu0 0.0
    %v1745 = vand.u32 %v1659, 4294901760
    %1746 = vmatpush1.msra.mxu0 %v1745
    %1747 = vmatprep.subr.mxu0 0.0
    %v1748 = vand.u32 %v1660, 4294901760
    %1749 = vmatpush1.msra.mxu0 %v1748
    %1750 = vmatprep.subr.mxu0 0.0
    %v1751 = vand.u32 %v1661, 4294901760
    %1752 = vmatpush1.msra.mxu0 %v1751
    %1753 = vmatprep.subr.mxu0 0.0
    %v1754 = vand.u32 %v1662, 4294901760
    %1755 = vmatpush1.msra.mxu0 %v1754
    %1756 = vmatprep.subr.mxu0 0.0
    %v1757 = vand.u32 %v1663, 4294901760
    %1758 = vmatpush1.msra.mxu0 %v1757
    %1759 = vmatprep.subr.mxu0 0.0
    %v1760 = vand.u32 %v1664, 4294901760
    %1761 = vmatpush1.msra.mxu0 %v1760
    %1762 = vmatprep.subr.mxu0 0.0
    %v1763 = vand.u32 %v1665, 4294901760
    %1764 = vmatpush1.msra.mxu0 %v1763
    %1765 = vmatprep.subr.mxu0 0.0
    %v1766 = vand.u32 %v1666, 4294901760
    %1767 = vmatpush1.msra.mxu0 %v1766
    %1768 = vmatprep.subr.mxu0 0.0
    %v1769 = vand.u32 %v1667, 4294901760
    %1770 = vmatpush1.msra.mxu0 %v1769
    %v1771 = vand.u32 %v1629, 4294901760
    %v1772 = vsub.f32 %v1629, %v1771
    %v1773 = vand.u32 %v1772, 4294901760
    %v1774 = vsub.f32 %v1772, %v1773
    %v1775 = vand.u32 %v1774, 4294901760
    %1776 = vmatprep.mubr.f32.mxu0 %v1775
    %v1777 = vand.u32 %v1628, 4294901760
    %v1778 = vsub.f32 %v1628, %v1777
    %v1779 = vand.u32 %v1778, 4294901760
    %v1780 = vsub.f32 %v1778, %v1779
    %v1781 = vand.u32 %v1780, 4294901760
    %1782 = vmatmul.mubr.f32.gmra.mrb[0].mxu0 %v1781
    %v1783 = vpop.f32.mrb[0].mxu0
    %v1784 = vadd.f32 %v1673, %v1783
    %v1785 = vpop.f32.mrb[0].mxu0
    %v1786 = vand.u32 %v1631, 4294901760
    %v1787 = vsub.f32 %v1631, %v1786
    %v1788 = vand.u32 %v1787, 4294901760
    %v1789 = vsub.f32 %v1787, %v1788
    %v1790 = vand.u32 %v1789, 4294901760
    %1791 = vmatprep.mubr.f32.mxu0 %v1790
    %v1792 = vand.u32 %v1630, 4294901760
    %v1793 = vsub.f32 %v1630, %v1792
    %v1794 = vand.u32 %v1793, 4294901760
    %v1795 = vsub.f32 %v1793, %v1794
    %v1796 = vand.u32 %v1795, 4294901760
    %1797 = vmatmul.mubr.f32.gmra.mrb[0].mxu0 %v1796
    %v1798 = vpop.f32.mrb[0].mxu0
    %v1799 = vadd.f32 %v1673, %v1798
    %v1800 = vpop.f32.mrb[0].mxu0
    %v1801 = vand.u32 %v1633, 4294901760
    %v1802 = vsub.f32 %v1633, %v1801
    %v1803 = vand.u32 %v1802, 4294901760
    %v1804 = vsub.f32 %v1802, %v1803
    %v1805 = vand.u32 %v1804, 4294901760
    %1806 = vmatprep.mubr.f32.mxu0 %v1805
    %v1807 = vand.u32 %v1632, 4294901760
    %v1808 = vsub.f32 %v1632, %v1807
    %v1809 = vand.u32 %v1808, 4294901760
    %v1810 = vsub.f32 %v1808, %v1809
    %v1811 = vand.u32 %v1810, 4294901760
    %1812 = vmatmul.mubr.f32.gmra.mrb[0].mxu0 %v1811
    %v1813 = vpop.f32.mrb[0].mxu0
    %v1814 = vadd.f32 %v1673, %v1813
    %v1815 = vpop.f32.mrb[0].mxu0
    %v1816 = vand.u32 %v1635, 4294901760
    %v1817 = vsub.f32 %v1635, %v1816
    %v1818 = vand.u32 %v1817, 4294901760
    %v1819 = vsub.f32 %v1817, %v1818
    %v1820 = vand.u32 %v1819, 4294901760
    %1821 = vmatprep.mubr.f32.mxu0 %v1820
    %v1822 = vand.u32 %v1634, 4294901760
    %v1823 = vsub.f32 %v1634, %v1822
    %v1824 = vand.u32 %v1823, 4294901760
    %v1825 = vsub.f32 %v1823, %v1824
    %v1826 = vand.u32 %v1825, 4294901760
    %1827 = vmatmul.mubr.f32.gmra.mrb[0].mxu0 %v1826
    %v1828 = vpop.f32.mrb[0].mxu0
    %v1829 = vadd.f32 %v1673, %v1828
    %v1830 = vpop.f32.mrb[0].mxu0
    %1831 = vdwg.mxu0
    %1832 = vmatprep.subr.mxu0 0.0
    %v1833 = vand.u32 %v1636, 4294901760
    %v1834 = vsub.f32 %v1636, %v1833
    %v1835 = vand.u32 %v1834, 4294901760
    %v1836 = vsub.f32 %v1834, %v1835
    %v1837 = vand.u32 %v1836, 4294901760
    %1838 = vmatpush1.msra.mxu0 %v1837
    %1839 = vmatprep.subr.mxu0 0.0
    %v1840 = vand.u32 %v1637, 4294901760
    %v1841 = vsub.f32 %v1637, %v1840
    %v1842 = vand.u32 %v1841, 4294901760
    %v1843 = vsub.f32 %v1841, %v1842
    %v1844 = vand.u32 %v1843, 4294901760
    %1845 = vmatpush1.msra.mxu0 %v1844
    %1846 = vmatprep.subr.mxu0 0.0
    %v1847 = vand.u32 %v1638, 4294901760
    %v1848 = vsub.f32 %v1638, %v1847
    %v1849 = vand.u32 %v1848, 4294901760
    %v1850 = vsub.f32 %v1848, %v1849
    %v1851 = vand.u32 %v1850, 4294901760
    %1852 = vmatpush1.msra.mxu0 %v1851
    %1853 = vmatprep.subr.mxu0 0.0
    %v1854 = vand.u32 %v1639, 4294901760
    %v1855 = vsub.f32 %v1639, %v1854
    %v1856 = vand.u32 %v1855, 4294901760
    %v1857 = vsub.f32 %v1855, %v1856
    %v1858 = vand.u32 %v1857, 4294901760
    %1859 = vmatpush1.msra.mxu0 %v1858
    %1860 = vmatprep.subr.mxu0 0.0
    %v1861 = vand.u32 %v1640, 4294901760
    %v1862 = vsub.f32 %v1640, %v1861
    %v1863 = vand.u32 %v1862, 4294901760
    %v1864 = vsub.f32 %v1862, %v1863
    %v1865 = vand.u32 %v1864, 4294901760
    %1866 = vmatpush1.msra.mxu0 %v1865
    %1867 = vmatprep.subr.mxu0 0.0
    %v1868 = vand.u32 %v1641, 4294901760
    %v1869 = vsub.f32 %v1641, %v1868
    %v1870 = vand.u32 %v1869, 4294901760
    %v1871 = vsub.f32 %v1869, %v1870
    %v1872 = vand.u32 %v1871, 4294901760
    %1873 = vmatpush1.msra.mxu0 %v1872
    %1874 = vmatprep.subr.mxu0 0.0
    %v1875 = vand.u32 %v1642, 4294901760
    %v1876 = vsub.f32 %v1642, %v1875
    %v1877 = vand.u32 %v1876, 4294901760
    %v1878 = vsub.f32 %v1876, %v1877
    %v1879 = vand.u32 %v1878, 4294901760
    %1880 = vmatpush1.msra.mxu0 %v1879
    %1881 = vmatprep.subr.mxu0 0.0
    %v1882 = vand.u32 %v1643, 4294901760
    %v1883 = vsub.f32 %v1643, %v1882
    %v1884 = vand.u32 %v1883, 4294901760
    %v1885 = vsub.f32 %v1883, %v1884
    %v1886 = vand.u32 %v1885, 4294901760
    %1887 = vmatpush1.msra.mxu0 %v1886
    %1888 = vmatprep.subr.mxu0 0.0
    %v1889 = vand.u32 %v1644, 4294901760
    %v1890 = vsub.f32 %v1644, %v1889
    %v1891 = vand.u32 %v1890, 4294901760
    %v1892 = vsub.f32 %v1890, %v1891
    %v1893 = vand.u32 %v1892, 4294901760
    %1894 = vmatpush1.msra.mxu0 %v1893
    %1895 = vmatprep.subr.mxu0 0.0
    %v1896 = vand.u32 %v1645, 4294901760
    %v1897 = vsub.f32 %v1645, %v1896
    %v1898 = vand.u32 %v1897, 4294901760
    %v1899 = vsub.f32 %v1897, %v1898
    %v1900 = vand.u32 %v1899, 4294901760
    %1901 = vmatpush1.msra.mxu0 %v1900
    %1902 = vmatprep.subr.mxu0 0.0
    %v1903 = vand.u32 %v1646, 4294901760
    %v1904 = vsub.f32 %v1646, %v1903
    %v1905 = vand.u32 %v1904, 4294901760
    %v1906 = vsub.f32 %v1904, %v1905
    %v1907 = vand.u32 %v1906, 4294901760
    %1908 = vmatpush1.msra.mxu0 %v1907
    %1909 = vmatprep.subr.mxu0 0.0
    %v1910 = vand.u32 %v1647, 4294901760
    %v1911 = vsub.f32 %v1647, %v1910
    %v1912 = vand.u32 %v1911, 4294901760
    %v1913 = vsub.f32 %v1911, %v1912
    %v1914 = vand.u32 %v1913, 4294901760
    %1915 = vmatpush1.msra.mxu0 %v1914
    %1916 = vmatprep.subr.mxu0 0.0
    %v1917 = vand.u32 %v1648, 4294901760
    %v1918 = vsub.f32 %v1648, %v1917
    %v1919 = vand.u32 %v1918, 4294901760
    %v1920 = vsub.f32 %v1918, %v1919
    %v1921 = vand.u32 %v1920, 4294901760
    %1922 = vmatpush1.msra.mxu0 %v1921
    %1923 = vmatprep.subr.mxu0 0.0
    %v1924 = vand.u32 %v1649, 4294901760
    %v1925 = vsub.f32 %v1649, %v1924
    %v1926 = vand.u32 %v1925, 4294901760
    %v1927 = vsub.f32 %v1925, %v1926
    %v1928 = vand.u32 %v1927, 4294901760
    %1929 = vmatpush1.msra.mxu0 %v1928
    %1930 = vmatprep.subr.mxu0 0.0
    %v1931 = vand.u32 %v1650, 4294901760
    %v1932 = vsub.f32 %v1650, %v1931
    %v1933 = vand.u32 %v1932, 4294901760
    %v1934 = vsub.f32 %v1932, %v1933
    %v1935 = vand.u32 %v1934, 4294901760
    %1936 = vmatpush1.msra.mxu0 %v1935
    %1937 = vmatprep.subr.mxu0 0.0
    %v1938 = vand.u32 %v1651, 4294901760
    %v1939 = vsub.f32 %v1651, %v1938
    %v1940 = vand.u32 %v1939, 4294901760
    %v1941 = vsub.f32 %v1939, %v1940
    %v1942 = vand.u32 %v1941, 4294901760
    %1943 = vmatpush1.msra.mxu0 %v1942
    %1944 = vmatprep.subr.mxu0 0.0
    %v1945 = vand.u32 %v1652, 4294901760
    %v1946 = vsub.f32 %v1652, %v1945
    %v1947 = vand.u32 %v1946, 4294901760
    %v1948 = vsub.f32 %v1946, %v1947
    %v1949 = vand.u32 %v1948, 4294901760
    %1950 = vmatpush1.msra.mxu0 %v1949
    %1951 = vmatprep.subr.mxu0 0.0
    %v1952 = vand.u32 %v1653, 4294901760
    %v1953 = vsub.f32 %v1653, %v1952
    %v1954 = vand.u32 %v1953, 4294901760
    %v1955 = vsub.f32 %v1953, %v1954
    %v1956 = vand.u32 %v1955, 4294901760
    %1957 = vmatpush1.msra.mxu0 %v1956
    %1958 = vmatprep.subr.mxu0 0.0
    %v1959 = vand.u32 %v1654, 4294901760
    %v1960 = vsub.f32 %v1654, %v1959
    %v1961 = vand.u32 %v1960, 4294901760
    %v1962 = vsub.f32 %v1960, %v1961
    %v1963 = vand.u32 %v1962, 4294901760
    %1964 = vmatpush1.msra.mxu0 %v1963
    %1965 = vmatprep.subr.mxu0 0.0
    %v1966 = vand.u32 %v1655, 4294901760
    %v1967 = vsub.f32 %v1655, %v1966
    %v1968 = vand.u32 %v1967, 4294901760
    %v1969 = vsub.f32 %v1967, %v1968
    %v1970 = vand.u32 %v1969, 4294901760
    %1971 = vmatpush1.msra.mxu0 %v1970
    %1972 = vmatprep.subr.mxu0 0.0
    %v1973 = vand.u32 %v1656, 4294901760
    %v1974 = vsub.f32 %v1656, %v1973
    %v1975 = vand.u32 %v1974, 4294901760
    %v1976 = vsub.f32 %v1974, %v1975
    %v1977 = vand.u32 %v1976, 4294901760
    %1978 = vmatpush1.msra.mxu0 %v1977
    %1979 = vmatprep.subr.mxu0 0.0
    %v1980 = vand.u32 %v1657, 4294901760
    %v1981 = vsub.f32 %v1657, %v1980
    %v1982 = vand.u32 %v1981, 4294901760
    %v1983 = vsub.f32 %v1981, %v1982
    %v1984 = vand.u32 %v1983, 4294901760
    %1985 = vmatpush1.msra.mxu0 %v1984
    %1986 = vmatprep.subr.mxu0 0.0
    %v1987 = vand.u32 %v1658, 4294901760
    %v1988 = vsub.f32 %v1658, %v1987
    %v1989 = vand.u32 %v1988, 4294901760
    %v1990 = vsub.f32 %v1988, %v1989
    %v1991 = vand.u32 %v1990, 4294901760
    %1992 = vmatpush1.msra.mxu0 %v1991
    %1993 = vmatprep.subr.mxu0 0.0
    %v1994 = vand.u32 %v1659, 4294901760
    %v1995 = vsub.f32 %v1659, %v1994
    %v1996 = vand.u32 %v1995, 4294901760
    %v1997 = vsub.f32 %v1995, %v1996
    %v1998 = vand.u32 %v1997, 4294901760
    %1999 = vmatpush1.msra.mxu0 %v1998
    %2000 = vmatprep.subr.mxu0 0.0
    %v2001 = vand.u32 %v1660, 4294901760
    %v2002 = vsub.f32 %v1660, %v2001
    %v2003 = vand.u32 %v2002, 4294901760
    %v2004 = vsub.f32 %v2002, %v2003
    %v2005 = vand.u32 %v2004, 4294901760
    %2006 = vmatpush1.msra.mxu0 %v2005
    %2007 = vmatprep.subr.mxu0 0.0
    %v2008 = vand.u32 %v1661, 4294901760
    %v2009 = vsub.f32 %v1661, %v2008
    %v2010 = vand.u32 %v2009, 4294901760
    %v2011 = vsub.f32 %v2009, %v2010
    %v2012 = vand.u32 %v2011, 4294901760
    %2013 = vmatpush1.msra.mxu0 %v2012
    %2014 = vmatprep.subr.mxu0 0.0
    %v2015 = vand.u32 %v1662, 4294901760
    %v2016 = vsub.f32 %v1662, %v2015
    %v2017 = vand.u32 %v2016, 4294901760
    %v2018 = vsub.f32 %v2016, %v2017
    %v2019 = vand.u32 %v2018, 4294901760
    %2020 = vmatpush1.msra.mxu0 %v2019
    %2021 = vmatprep.subr.mxu0 0.0
    %v2022 = vand.u32 %v1663, 4294901760
    %v2023 = vsub.f32 %v1663, %v2022
    %v2024 = vand.u32 %v2023, 4294901760
    %v2025 = vsub.f32 %v2023, %v2024
    %v2026 = vand.u32 %v2025, 4294901760
    %2027 = vmatpush1.msra.mxu0 %v2026
    %2028 = vmatprep.subr.mxu0 0.0
    %v2029 = vand.u32 %v1664, 4294901760
    %v2030 = vsub.f32 %v1664, %v2029
    %v2031 = vand.u32 %v2030, 4294901760
    %v2032 = vsub.f32 %v2030, %v2031
    %v2033 = vand.u32 %v2032, 4294901760
    %2034 = vmatpush1.msra.mxu0 %v2033
    %2035 = vmatprep.subr.mxu0 0.0
    %v2036 = vand.u32 %v1665, 4294901760
    %v2037 = vsub.f32 %v1665, %v2036
    %v2038 = vand.u32 %v2037, 4294901760
    %v2039 = vsub.f32 %v2037, %v2038
    %v2040 = vand.u32 %v2039, 4294901760
    %2041 = vmatpush1.msra.mxu0 %v2040
    %2042 = vmatprep.subr.mxu0 0.0
    %v2043 = vand.u32 %v1666, 4294901760
    %v2044 = vsub.f32 %v1666, %v2043
    %v2045 = vand.u32 %v2044, 4294901760
    %v2046 = vsub.f32 %v2044, %v2045
    %v2047 = vand.u32 %v2046, 4294901760
    %2048 = vmatpush1.msra.mxu0 %v2047
    %2049 = vmatprep.subr.mxu0 0.0
    %v2050 = vand.u32 %v1667, 4294901760
    %v2051 = vsub.f32 %v1667, %v2050
    %v2052 = vand.u32 %v2051, 4294901760
    %v2053 = vsub.f32 %v2051, %v2052
    %v2054 = vand.u32 %v2053, 4294901760
    %2055 = vmatpush1.msra.mxu0 %v2054
    %v2056 = vand.u32 %v1629, 4294901760
    %2057 = vmatprep.mubr.f32.mxu0 %v2056
    %v2058 = vand.u32 %v1628, 4294901760
    %2059 = vmatmul.mubr.f32.gmra.mrb[0].mxu0 %v2058
    %v2060 = vpop.f32.mrb[0].mxu0
    %v2061 = vadd.f32 %v1784, %v2060
    %v2062 = vpop.f32.mrb[0].mxu0
    %v2063 = vand.u32 %v1631, 4294901760
    %2064 = vmatprep.mubr.f32.mxu0 %v2063
    %v2065 = vand.u32 %v1630, 4294901760
    %2066 = vmatmul.mubr.f32.gmra.mrb[0].mxu0 %v2065
    %v2067 = vpop.f32.mrb[0].mxu0
    %v2068 = vadd.f32 %v1799, %v2067
    %v2069 = vpop.f32.mrb[0].mxu0
    %v2070 = vand.u32 %v1633, 4294901760
    %2071 = vmatprep.mubr.f32.mxu0 %v2070
    %v2072 = vand.u32 %v1632, 4294901760
    %2073 = vmatmul.mubr.f32.gmra.mrb[0].mxu0 %v2072
    %v2074 = vpop.f32.mrb[0].mxu0
    %v2075 = vadd.f32 %v1814, %v2074
    %v2076 = vpop.f32.mrb[0].mxu0
    %v2077 = vand.u32 %v1635, 4294901760
    %2078 = vmatprep.mubr.f32.mxu0 %v2077
    %v2079 = vand.u32 %v1634, 4294901760
    %2080 = vmatmul.mubr.f32.gmra.mrb[0].mxu0 %v2079
    %v2081 = vpop.f32.mrb[0].mxu0
    %v2082 = vadd.f32 %v1829, %v2081
    %v2083 = vpop.f32.mrb[0].mxu0
    %2084 = vdwg.mxu0
    %2085 = vmatprep.subr.mxu0 0.0
    %v2086 = vand.u32 %v1636, 4294901760
    %v2087 = vsub.f32 %v1636, %v2086
    %2088 = vmatpush1.msra.mxu0 %v2087
    %2089 = vmatprep.subr.mxu0 0.0
    %v2090 = vand.u32 %v1637, 4294901760
    %v2091 = vsub.f32 %v1637, %v2090
    %2092 = vmatpush1.msra.mxu0 %v2091
    %2093 = vmatprep.subr.mxu0 0.0
    %v2094 = vand.u32 %v1638, 4294901760
    %v2095 = vsub.f32 %v1638, %v2094
    %2096 = vmatpush1.msra.mxu0 %v2095
    %2097 = vmatprep.subr.mxu0 0.0
    %v2098 = vand.u32 %v1639, 4294901760
    %v2099 = vsub.f32 %v1639, %v2098
    %2100 = vmatpush1.msra.mxu0 %v2099
    %2101 = vmatprep.subr.mxu0 0.0
    %v2102 = vand.u32 %v1640, 4294901760
    %v2103 = vsub.f32 %v1640, %v2102
    %2104 = vmatpush1.msra.mxu0 %v2103
    %2105 = vmatprep.subr.mxu0 0.0
    %v2106 = vand.u32 %v1641, 4294901760
    %v2107 = vsub.f32 %v1641, %v2106
    %2108 = vmatpush1.msra.mxu0 %v2107
    %2109 = vmatprep.subr.mxu0 0.0
    %v2110 = vand.u32 %v1642, 4294901760
    %v2111 = vsub.f32 %v1642, %v2110
    %2112 = vmatpush1.msra.mxu0 %v2111
    %2113 = vmatprep.subr.mxu0 0.0
    %v2114 = vand.u32 %v1643, 4294901760
    %v2115 = vsub.f32 %v1643, %v2114
    %2116 = vmatpush1.msra.mxu0 %v2115
    %2117 = vmatprep.subr.mxu0 0.0
    %v2118 = vand.u32 %v1644, 4294901760
    %v2119 = vsub.f32 %v1644, %v2118
    %2120 = vmatpush1.msra.mxu0 %v2119
    %2121 = vmatprep.subr.mxu0 0.0
    %v2122 = vand.u32 %v1645, 4294901760
    %v2123 = vsub.f32 %v1645, %v2122
    %2124 = vmatpush1.msra.mxu0 %v2123
    %2125 = vmatprep.subr.mxu0 0.0
    %v2126 = vand.u32 %v1646, 4294901760
    %v2127 = vsub.f32 %v1646, %v2126
    %2128 = vmatpush1.msra.mxu0 %v2127
    %2129 = vmatprep.subr.mxu0 0.0
    %v2130 = vand.u32 %v1647, 4294901760
    %v2131 = vsub.f32 %v1647, %v2130
    %2132 = vmatpush1.msra.mxu0 %v2131
    %2133 = vmatprep.subr.mxu0 0.0
    %v2134 = vand.u32 %v1648, 4294901760
    %v2135 = vsub.f32 %v1648, %v2134
    %2136 = vmatpush1.msra.mxu0 %v2135
    %2137 = vmatprep.subr.mxu0 0.0
    %v2138 = vand.u32 %v1649, 4294901760
    %v2139 = vsub.f32 %v1649, %v2138
    %2140 = vmatpush1.msra.mxu0 %v2139
    %2141 = vmatprep.subr.mxu0 0.0
    %v2142 = vand.u32 %v1650, 4294901760
    %v2143 = vsub.f32 %v1650, %v2142
    %2144 = vmatpush1.msra.mxu0 %v2143
    %2145 = vmatprep.subr.mxu0 0.0
    %v2146 = vand.u32 %v1651, 4294901760
    %v2147 = vsub.f32 %v1651, %v2146
    %2148 = vmatpush1.msra.mxu0 %v2147
    %2149 = vmatprep.subr.mxu0 0.0
    %v2150 = vand.u32 %v1652, 4294901760
    %v2151 = vsub.f32 %v1652, %v2150
    %2152 = vmatpush1.msra.mxu0 %v2151
    %2153 = vmatprep.subr.mxu0 0.0
    %v2154 = vand.u32 %v1653, 4294901760
    %v2155 = vsub.f32 %v1653, %v2154
    %2156 = vmatpush1.msra.mxu0 %v2155
    %2157 = vmatprep.subr.mxu0 0.0
    %v2158 = vand.u32 %v1654, 4294901760
    %v2159 = vsub.f32 %v1654, %v2158
    %2160 = vmatpush1.msra.mxu0 %v2159
    %2161 = vmatprep.subr.mxu0 0.0
    %v2162 = vand.u32 %v1655, 4294901760
    %v2163 = vsub.f32 %v1655, %v2162
    %2164 = vmatpush1.msra.mxu0 %v2163
    %2165 = vmatprep.subr.mxu0 0.0
    %v2166 = vand.u32 %v1656, 4294901760
    %v2167 = vsub.f32 %v1656, %v2166
    %2168 = vmatpush1.msra.mxu0 %v2167
    %2169 = vmatprep.subr.mxu0 0.0
    %v2170 = vand.u32 %v1657, 4294901760
    %v2171 = vsub.f32 %v1657, %v2170
    %2172 = vmatpush1.msra.mxu0 %v2171
    %2173 = vmatprep.subr.mxu0 0.0
    %v2174 = vand.u32 %v1658, 4294901760
    %v2175 = vsub.f32 %v1658, %v2174
    %2176 = vmatpush1.msra.mxu0 %v2175
    %2177 = vmatprep.subr.mxu0 0.0
    %v2178 = vand.u32 %v1659, 4294901760
    %v2179 = vsub.f32 %v1659, %v2178
    %2180 = vmatpush1.msra.mxu0 %v2179
    %2181 = vmatprep.subr.mxu0 0.0
    %v2182 = vand.u32 %v1660, 4294901760
    %v2183 = vsub.f32 %v1660, %v2182
    %2184 = vmatpush1.msra.mxu0 %v2183
    %2185 = vmatprep.subr.mxu0 0.0
    %v2186 = vand.u32 %v1661, 4294901760
    %v2187 = vsub.f32 %v1661, %v2186
    %2188 = vmatpush1.msra.mxu0 %v2187
    %2189 = vmatprep.subr.mxu0 0.0
    %v2190 = vand.u32 %v1662, 4294901760
    %v2191 = vsub.f32 %v1662, %v2190
    %2192 = vmatpush1.msra.mxu0 %v2191
    %2193 = vmatprep.subr.mxu0 0.0
    %v2194 = vand.u32 %v1663, 4294901760
    %v2195 = vsub.f32 %v1663, %v2194
    %2196 = vmatpush1.msra.mxu0 %v2195
    %2197 = vmatprep.subr.mxu0 0.0
    %v2198 = vand.u32 %v1664, 4294901760
    %v2199 = vsub.f32 %v1664, %v2198
    %2200 = vmatpush1.msra.mxu0 %v2199
    %2201 = vmatprep.subr.mxu0 0.0
    %v2202 = vand.u32 %v1665, 4294901760
    %v2203 = vsub.f32 %v1665, %v2202
    %2204 = vmatpush1.msra.mxu0 %v2203
    %2205 = vmatprep.subr.mxu0 0.0
    %v2206 = vand.u32 %v1666, 4294901760
    %v2207 = vsub.f32 %v1666, %v2206
    %2208 = vmatpush1.msra.mxu0 %v2207
    %2209 = vmatprep.subr.mxu0 0.0
    %v2210 = vand.u32 %v1667, 4294901760
    %v2211 = vsub.f32 %v1667, %v2210
    %2212 = vmatpush1.msra.mxu0 %v2211
    %v2213 = vand.u32 %v1629, 4294901760
    %v2214 = vsub.f32 %v1629, %v2213
    %2215 = vmatprep.mubr.f32.mxu0 %v2214
    %v2216 = vand.u32 %v1628, 4294901760
    %v2217 = vsub.f32 %v1628, %v2216
    %2218 = vmatmul.mubr.f32.gmra.mrb[0].mxu0 %v2217
    %v2219 = vpop.f32.mrb[0].mxu0
    %v2220 = vadd.f32 %v2061, %v2219
    %v2221 = vpop.f32.mrb[0].mxu0
    %v2222 = vand.u32 %v1631, 4294901760
    %v2223 = vsub.f32 %v1631, %v2222
    %2224 = vmatprep.mubr.f32.mxu0 %v2223
    %v2225 = vand.u32 %v1630, 4294901760
    %v2226 = vsub.f32 %v1630, %v2225
    %2227 = vmatmul.mubr.f32.gmra.mrb[0].mxu0 %v2226
    %v2228 = vpop.f32.mrb[0].mxu0
    %v2229 = vadd.f32 %v2068, %v2228
    %v2230 = vpop.f32.mrb[0].mxu0
    %v2231 = vand.u32 %v1633, 4294901760
    %v2232 = vsub.f32 %v1633, %v2231
    %2233 = vmatprep.mubr.f32.mxu0 %v2232
    %v2234 = vand.u32 %v1632, 4294901760
    %v2235 = vsub.f32 %v1632, %v2234
    %2236 = vmatmul.mubr.f32.gmra.mrb[0].mxu0 %v2235
    %v2237 = vpop.f32.mrb[0].mxu0
    %v2238 = vadd.f32 %v2075, %v2237
    %v2239 = vpop.f32.mrb[0].mxu0
    %v2240 = vand.u32 %v1635, 4294901760
    %v2241 = vsub.f32 %v1635, %v2240
    %2242 = vmatprep.mubr.f32.mxu0 %v2241
    %v2243 = vand.u32 %v1634, 4294901760
    %v2244 = vsub.f32 %v1634, %v2243
    %2245 = vmatmul.mubr.f32.gmra.mrb[0].mxu0 %v2244
    %v2246 = vpop.f32.mrb[0].mxu0
    %v2247 = vadd.f32 %v2082, %v2246
    %v2248 = vpop.f32.mrb[0].mxu0
    %2249 = vdwg.mxu0
    %2250 = vmatprep.subr.mxu0 0.0
    %v2251 = vand.u32 %v1636, 4294901760
    %2252 = vmatpush1.msra.mxu0 %v2251
    %2253 = vmatprep.subr.mxu0 0.0
    %v2254 = vand.u32 %v1637, 4294901760
    %2255 = vmatpush1.msra.mxu0 %v2254
    %2256 = vmatprep.subr.mxu0 0.0
    %v2257 = vand.u32 %v1638, 4294901760
    %2258 = vmatpush1.msra.mxu0 %v2257
    %2259 = vmatprep.subr.mxu0 0.0
    %v2260 = vand.u32 %v1639, 4294901760
    %2261 = vmatpush1.msra.mxu0 %v2260
    %2262 = vmatprep.subr.mxu0 0.0
    %v2263 = vand.u32 %v1640, 4294901760
    %2264 = vmatpush1.msra.mxu0 %v2263
    %2265 = vmatprep.subr.mxu0 0.0
    %v2266 = vand.u32 %v1641, 4294901760
    %2267 = vmatpush1.msra.mxu0 %v2266
    %2268 = vmatprep.subr.mxu0 0.0
    %v2269 = vand.u32 %v1642, 4294901760
    %2270 = vmatpush1.msra.mxu0 %v2269
    %2271 = vmatprep.subr.mxu0 0.0
    %v2272 = vand.u32 %v1643, 4294901760
    %2273 = vmatpush1.msra.mxu0 %v2272
    %2274 = vmatprep.subr.mxu0 0.0
    %v2275 = vand.u32 %v1644, 4294901760
    %2276 = vmatpush1.msra.mxu0 %v2275
    %2277 = vmatprep.subr.mxu0 0.0
    %v2278 = vand.u32 %v1645, 4294901760
    %2279 = vmatpush1.msra.mxu0 %v2278
    %2280 = vmatprep.subr.mxu0 0.0
    %v2281 = vand.u32 %v1646, 4294901760
    %2282 = vmatpush1.msra.mxu0 %v2281
    %2283 = vmatprep.subr.mxu0 0.0
    %v2284 = vand.u32 %v1647, 4294901760
    %2285 = vmatpush1.msra.mxu0 %v2284
    %2286 = vmatprep.subr.mxu0 0.0
    %v2287 = vand.u32 %v1648, 4294901760
    %2288 = vmatpush1.msra.mxu0 %v2287
    %2289 = vmatprep.subr.mxu0 0.0
    %v2290 = vand.u32 %v1649, 4294901760
    %2291 = vmatpush1.msra.mxu0 %v2290
    %2292 = vmatprep.subr.mxu0 0.0
    %v2293 = vand.u32 %v1650, 4294901760
    %2294 = vmatpush1.msra.mxu0 %v2293
    %2295 = vmatprep.subr.mxu0 0.0
    %v2296 = vand.u32 %v1651, 4294901760
    %2297 = vmatpush1.msra.mxu0 %v2296
    %2298 = vmatprep.subr.mxu0 0.0
    %v2299 = vand.u32 %v1652, 4294901760
    %2300 = vmatpush1.msra.mxu0 %v2299
    %2301 = vmatprep.subr.mxu0 0.0
    %v2302 = vand.u32 %v1653, 4294901760
    %2303 = vmatpush1.msra.mxu0 %v2302
    %2304 = vmatprep.subr.mxu0 0.0
    %v2305 = vand.u32 %v1654, 4294901760
    %2306 = vmatpush1.msra.mxu0 %v2305
    %2307 = vmatprep.subr.mxu0 0.0
    %v2308 = vand.u32 %v1655, 4294901760
    %2309 = vmatpush1.msra.mxu0 %v2308
    %2310 = vmatprep.subr.mxu0 0.0
    %v2311 = vand.u32 %v1656, 4294901760
    %2312 = vmatpush1.msra.mxu0 %v2311
    %2313 = vmatprep.subr.mxu0 0.0
    %v2314 = vand.u32 %v1657, 4294901760
    %2315 = vmatpush1.msra.mxu0 %v2314
    %2316 = vmatprep.subr.mxu0 0.0
    %v2317 = vand.u32 %v1658, 4294901760
    %2318 = vmatpush1.msra.mxu0 %v2317
    %2319 = vmatprep.subr.mxu0 0.0
    %v2320 = vand.u32 %v1659, 4294901760
    %2321 = vmatpush1.msra.mxu0 %v2320
    %2322 = vmatprep.subr.mxu0 0.0
    %v2323 = vand.u32 %v1660, 4294901760
    %2324 = vmatpush1.msra.mxu0 %v2323
    %2325 = vmatprep.subr.mxu0 0.0
    %v2326 = vand.u32 %v1661, 4294901760
    %2327 = vmatpush1.msra.mxu0 %v2326
    %2328 = vmatprep.subr.mxu0 0.0
    %v2329 = vand.u32 %v1662, 4294901760
    %2330 = vmatpush1.msra.mxu0 %v2329
    %2331 = vmatprep.subr.mxu0 0.0
    %v2332 = vand.u32 %v1663, 4294901760
    %2333 = vmatpush1.msra.mxu0 %v2332
    %2334 = vmatprep.subr.mxu0 0.0
    %v2335 = vand.u32 %v1664, 4294901760
    %2336 = vmatpush1.msra.mxu0 %v2335
    %2337 = vmatprep.subr.mxu0 0.0
    %v2338 = vand.u32 %v1665, 4294901760
    %2339 = vmatpush1.msra.mxu0 %v2338
    %2340 = vmatprep.subr.mxu0 0.0
    %v2341 = vand.u32 %v1666, 4294901760
    %2342 = vmatpush1.msra.mxu0 %v2341
    %2343 = vmatprep.subr.mxu0 0.0
    %v2344 = vand.u32 %v1667, 4294901760
    %2345 = vmatpush1.msra.mxu0 %v2344
    %v2346 = vand.u32 %v1629, 4294901760
    %v2347 = vsub.f32 %v1629, %v2346
    %v2348 = vand.u32 %v2347, 4294901760
    %2349 = vmatprep.mubr.f32.mxu0 %v2348
    %v2350 = vand.u32 %v1628, 4294901760
    %v2351 = vsub.f32 %v1628, %v2350
    %v2352 = vand.u32 %v2351, 4294901760
    %2353 = vmatmul.mubr.f32.gmra.mrb[0].mxu0 %v2352
    %v2354 = vpop.f32.mrb[0].mxu0
    %v2355 = vadd.f32 %v2220, %v2354
    %v2356 = vpop.f32.mrb[0].mxu0
    %v2357 = vand.u32 %v1631, 4294901760
    %v2358 = vsub.f32 %v1631, %v2357
    %v2359 = vand.u32 %v2358, 4294901760
    %2360 = vmatprep.mubr.f32.mxu0 %v2359
    %v2361 = vand.u32 %v1630, 4294901760
    %v2362 = vsub.f32 %v1630, %v2361
    %v2363 = vand.u32 %v2362, 4294901760
    %2364 = vmatmul.mubr.f32.gmra.mrb[0].mxu0 %v2363
    %v2365 = vpop.f32.mrb[0].mxu0
    %v2366 = vadd.f32 %v2229, %v2365
    %v2367 = vpop.f32.mrb[0].mxu0
    %v2368 = vand.u32 %v1633, 4294901760
    %v2369 = vsub.f32 %v1633, %v2368
    %v2370 = vand.u32 %v2369, 4294901760
    %2371 = vmatprep.mubr.f32.mxu0 %v2370
    %v2372 = vand.u32 %v1632, 4294901760
    %v2373 = vsub.f32 %v1632, %v2372
    %v2374 = vand.u32 %v2373, 4294901760
    %2375 = vmatmul.mubr.f32.gmra.mrb[0].mxu0 %v2374
    %v2376 = vpop.f32.mrb[0].mxu0
    %v2377 = vadd.f32 %v2238, %v2376
    %v2378 = vpop.f32.mrb[0].mxu0
    %v2379 = vand.u32 %v1635, 4294901760
    %v2380 = vsub.f32 %v1635, %v2379
    %v2381 = vand.u32 %v2380, 4294901760
    %2382 = vmatprep.mubr.f32.mxu0 %v2381
    %v2383 = vand.u32 %v1634, 4294901760
    %v2384 = vsub.f32 %v1634, %v2383
    %v2385 = vand.u32 %v2384, 4294901760
    %2386 = vmatmul.mubr.f32.gmra.mrb[0].mxu0 %v2385
    %v2387 = vpop.f32.mrb[0].mxu0
    %v2388 = vadd.f32 %v2247, %v2387
    %v2389 = vpop.f32.mrb[0].mxu0
    %2390 = vdwg.mxu0
    %2391 = vmatprep.subr.mxu0 0.0
    %v2392 = vand.u32 %v1636, 4294901760
    %v2393 = vsub.f32 %v1636, %v2392
    %v2394 = vand.u32 %v2393, 4294901760
    %2395 = vmatpush1.msra.mxu0 %v2394
    %2396 = vmatprep.subr.mxu0 0.0
    %v2397 = vand.u32 %v1637, 4294901760
    %v2398 = vsub.f32 %v1637, %v2397
    %v2399 = vand.u32 %v2398, 4294901760
    %2400 = vmatpush1.msra.mxu0 %v2399
    %2401 = vmatprep.subr.mxu0 0.0
    %v2402 = vand.u32 %v1638, 4294901760
    %v2403 = vsub.f32 %v1638, %v2402
    %v2404 = vand.u32 %v2403, 4294901760
    %2405 = vmatpush1.msra.mxu0 %v2404
    %2406 = vmatprep.subr.mxu0 0.0
    %v2407 = vand.u32 %v1639, 4294901760
    %v2408 = vsub.f32 %v1639, %v2407
    %v2409 = vand.u32 %v2408, 4294901760
    %2410 = vmatpush1.msra.mxu0 %v2409
    %2411 = vmatprep.subr.mxu0 0.0
    %v2412 = vand.u32 %v1640, 4294901760
    %v2413 = vsub.f32 %v1640, %v2412
    %v2414 = vand.u32 %v2413, 4294901760
    %2415 = vmatpush1.msra.mxu0 %v2414
    %2416 = vmatprep.subr.mxu0 0.0
    %v2417 = vand.u32 %v1641, 4294901760
    %v2418 = vsub.f32 %v1641, %v2417
    %v2419 = vand.u32 %v2418, 4294901760
    %2420 = vmatpush1.msra.mxu0 %v2419
    %2421 = vmatprep.subr.mxu0 0.0
    %v2422 = vand.u32 %v1642, 4294901760
    %v2423 = vsub.f32 %v1642, %v2422
    %v2424 = vand.u32 %v2423, 4294901760
    %2425 = vmatpush1.msra.mxu0 %v2424
    %2426 = vmatprep.subr.mxu0 0.0
    %v2427 = vand.u32 %v1643, 4294901760
    %v2428 = vsub.f32 %v1643, %v2427
    %v2429 = vand.u32 %v2428, 4294901760
    %2430 = vmatpush1.msra.mxu0 %v2429
    %2431 = vmatprep.subr.mxu0 0.0
    %v2432 = vand.u32 %v1644, 4294901760
    %v2433 = vsub.f32 %v1644, %v2432
    %v2434 = vand.u32 %v2433, 4294901760
    %2435 = vmatpush1.msra.mxu0 %v2434
    %2436 = vmatprep.subr.mxu0 0.0
    %v2437 = vand.u32 %v1645, 4294901760
    %v2438 = vsub.f32 %v1645, %v2437
    %v2439 = vand.u32 %v2438, 4294901760
    %2440 = vmatpush1.msra.mxu0 %v2439
    %2441 = vmatprep.subr.mxu0 0.0
    %v2442 = vand.u32 %v1646, 4294901760
    %v2443 = vsub.f32 %v1646, %v2442
    %v2444 = vand.u32 %v2443, 4294901760
    %2445 = vmatpush1.msra.mxu0 %v2444
    %2446 = vmatprep.subr.mxu0 0.0
    %v2447 = vand.u32 %v1647, 4294901760
    %v2448 = vsub.f32 %v1647, %v2447
    %v2449 = vand.u32 %v2448, 4294901760
    %2450 = vmatpush1.msra.mxu0 %v2449
    %2451 = vmatprep.subr.mxu0 0.0
    %v2452 = vand.u32 %v1648, 4294901760
    %v2453 = vsub.f32 %v1648, %v2452
    %v2454 = vand.u32 %v2453, 4294901760
    %2455 = vmatpush1.msra.mxu0 %v2454
    %2456 = vmatprep.subr.mxu0 0.0
    %v2457 = vand.u32 %v1649, 4294901760
    %v2458 = vsub.f32 %v1649, %v2457
    %v2459 = vand.u32 %v2458, 4294901760
    %2460 = vmatpush1.msra.mxu0 %v2459
    %2461 = vmatprep.subr.mxu0 0.0
    %v2462 = vand.u32 %v1650, 4294901760
    %v2463 = vsub.f32 %v1650, %v2462
    %v2464 = vand.u32 %v2463, 4294901760
    %2465 = vmatpush1.msra.mxu0 %v2464
    %2466 = vmatprep.subr.mxu0 0.0
    %v2467 = vand.u32 %v1651, 4294901760
    %v2468 = vsub.f32 %v1651, %v2467
    %v2469 = vand.u32 %v2468, 4294901760
    %2470 = vmatpush1.msra.mxu0 %v2469
    %2471 = vmatprep.subr.mxu0 0.0
    %v2472 = vand.u32 %v1652, 4294901760
    %v2473 = vsub.f32 %v1652, %v2472
    %v2474 = vand.u32 %v2473, 4294901760
    %2475 = vmatpush1.msra.mxu0 %v2474
    %2476 = vmatprep.subr.mxu0 0.0
    %v2477 = vand.u32 %v1653, 4294901760
    %v2478 = vsub.f32 %v1653, %v2477
    %v2479 = vand.u32 %v2478, 4294901760
    %2480 = vmatpush1.msra.mxu0 %v2479
    %2481 = vmatprep.subr.mxu0 0.0
    %v2482 = vand.u32 %v1654, 4294901760
    %v2483 = vsub.f32 %v1654, %v2482
    %v2484 = vand.u32 %v2483, 4294901760
    %2485 = vmatpush1.msra.mxu0 %v2484
    %2486 = vmatprep.subr.mxu0 0.0
    %v2487 = vand.u32 %v1655, 4294901760
    %v2488 = vsub.f32 %v1655, %v2487
    %v2489 = vand.u32 %v2488, 4294901760
    %2490 = vmatpush1.msra.mxu0 %v2489
    %2491 = vmatprep.subr.mxu0 0.0
    %v2492 = vand.u32 %v1656, 4294901760
    %v2493 = vsub.f32 %v1656, %v2492
    %v2494 = vand.u32 %v2493, 4294901760
    %2495 = vmatpush1.msra.mxu0 %v2494
    %2496 = vmatprep.subr.mxu0 0.0
    %v2497 = vand.u32 %v1657, 4294901760
    %v2498 = vsub.f32 %v1657, %v2497
    %v2499 = vand.u32 %v2498, 4294901760
    %2500 = vmatpush1.msra.mxu0 %v2499
    %2501 = vmatprep.subr.mxu0 0.0
    %v2502 = vand.u32 %v1658, 4294901760
    %v2503 = vsub.f32 %v1658, %v2502
    %v2504 = vand.u32 %v2503, 4294901760
    %2505 = vmatpush1.msra.mxu0 %v2504
    %2506 = vmatprep.subr.mxu0 0.0
    %v2507 = vand.u32 %v1659, 4294901760
    %v2508 = vsub.f32 %v1659, %v2507
    %v2509 = vand.u32 %v2508, 4294901760
    %2510 = vmatpush1.msra.mxu0 %v2509
    %2511 = vmatprep.subr.mxu0 0.0
    %v2512 = vand.u32 %v1660, 4294901760
    %v2513 = vsub.f32 %v1660, %v2512
    %v2514 = vand.u32 %v2513, 4294901760
    %2515 = vmatpush1.msra.mxu0 %v2514
    %2516 = vmatprep.subr.mxu0 0.0
    %v2517 = vand.u32 %v1661, 4294901760
    %v2518 = vsub.f32 %v1661, %v2517
    %v2519 = vand.u32 %v2518, 4294901760
    %2520 = vmatpush1.msra.mxu0 %v2519
    %2521 = vmatprep.subr.mxu0 0.0
    %v2522 = vand.u32 %v1662, 4294901760
    %v2523 = vsub.f32 %v1662, %v2522
    %v2524 = vand.u32 %v2523, 4294901760
    %2525 = vmatpush1.msra.mxu0 %v2524
    %2526 = vmatprep.subr.mxu0 0.0
    %v2527 = vand.u32 %v1663, 4294901760
    %v2528 = vsub.f32 %v1663, %v2527
    %v2529 = vand.u32 %v2528, 4294901760
    %2530 = vmatpush1.msra.mxu0 %v2529
    %2531 = vmatprep.subr.mxu0 0.0
    %v2532 = vand.u32 %v1664, 4294901760
    %v2533 = vsub.f32 %v1664, %v2532
    %v2534 = vand.u32 %v2533, 4294901760
    %2535 = vmatpush1.msra.mxu0 %v2534
    %2536 = vmatprep.subr.mxu0 0.0
    %v2537 = vand.u32 %v1665, 4294901760
    %v2538 = vsub.f32 %v1665, %v2537
    %v2539 = vand.u32 %v2538, 4294901760
    %2540 = vmatpush1.msra.mxu0 %v2539
    %2541 = vmatprep.subr.mxu0 0.0
    %v2542 = vand.u32 %v1666, 4294901760
    %v2543 = vsub.f32 %v1666, %v2542
    %v2544 = vand.u32 %v2543, 4294901760
    %2545 = vmatpush1.msra.mxu0 %v2544
    %2546 = vmatprep.subr.mxu0 0.0
    %v2547 = vand.u32 %v1667, 4294901760
    %v2548 = vsub.f32 %v1667, %v2547
    %v2549 = vand.u32 %v2548, 4294901760
    %2550 = vmatpush1.msra.mxu0 %v2549
    %v2551 = vand.u32 %v1629, 4294901760
    %2552 = vmatprep.mubr.f32.mxu0 %v2551
    %v2553 = vand.u32 %v1628, 4294901760
    %2554 = vmatmul.mubr.f32.gmra.mrb[0].mxu0 %v2553
    %v2555 = vpop.f32.mrb[0].mxu0
    %v2556 = vadd.f32 %v2355, %v2555
    %v2557 = vpop.f32.mrb[0].mxu0
    %v2558 = vand.u32 %v1631, 4294901760
    %2559 = vmatprep.mubr.f32.mxu0 %v2558
    %v2560 = vand.u32 %v1630, 4294901760
    %2561 = vmatmul.mubr.f32.gmra.mrb[0].mxu0 %v2560
    %v2562 = vpop.f32.mrb[0].mxu0
    %v2563 = vadd.f32 %v2366, %v2562
    %v2564 = vpop.f32.mrb[0].mxu0
    %v2565 = vand.u32 %v1633, 4294901760
    %2566 = vmatprep.mubr.f32.mxu0 %v2565
    %v2567 = vand.u32 %v1632, 4294901760
    %2568 = vmatmul.mubr.f32.gmra.mrb[0].mxu0 %v2567
    %v2569 = vpop.f32.mrb[0].mxu0
    %v2570 = vadd.f32 %v2377, %v2569
    %v2571 = vpop.f32.mrb[0].mxu0
    %v2572 = vand.u32 %v1635, 4294901760
    %2573 = vmatprep.mubr.f32.mxu0 %v2572
    %v2574 = vand.u32 %v1634, 4294901760
    %2575 = vmatmul.mubr.f32.gmra.mrb[0].mxu0 %v2574
    %v2576 = vpop.f32.mrb[0].mxu0
    %v2577 = vadd.f32 %v2388, %v2576
    %v2578 = vpop.f32.mrb[0].mxu0
    %2579 = vdwg.mxu0
    %2580 = vmatprep.subr.mxu0 0.0
    %v2581 = vand.u32 %v1636, 4294901760
    %2582 = vmatpush1.msra.mxu0 %v2581
    %2583 = vmatprep.subr.mxu0 0.0
    %v2584 = vand.u32 %v1637, 4294901760
    %2585 = vmatpush1.msra.mxu0 %v2584
    %2586 = vmatprep.subr.mxu0 0.0
    %v2587 = vand.u32 %v1638, 4294901760
    %2588 = vmatpush1.msra.mxu0 %v2587
    %2589 = vmatprep.subr.mxu0 0.0
    %v2590 = vand.u32 %v1639, 4294901760
    %2591 = vmatpush1.msra.mxu0 %v2590
    %2592 = vmatprep.subr.mxu0 0.0
    %v2593 = vand.u32 %v1640, 4294901760
    %2594 = vmatpush1.msra.mxu0 %v2593
    %2595 = vmatprep.subr.mxu0 0.0
    %v2596 = vand.u32 %v1641, 4294901760
    %2597 = vmatpush1.msra.mxu0 %v2596
    %2598 = vmatprep.subr.mxu0 0.0
    %v2599 = vand.u32 %v1642, 4294901760
    %2600 = vmatpush1.msra.mxu0 %v2599
    %2601 = vmatprep.subr.mxu0 0.0
    %v2602 = vand.u32 %v1643, 4294901760
    %2603 = vmatpush1.msra.mxu0 %v2602
    %2604 = vmatprep.subr.mxu0 0.0
    %v2605 = vand.u32 %v1644, 4294901760
    %2606 = vmatpush1.msra.mxu0 %v2605
    %2607 = vmatprep.subr.mxu0 0.0
    %v2608 = vand.u32 %v1645, 4294901760
    %2609 = vmatpush1.msra.mxu0 %v2608
    %2610 = vmatprep.subr.mxu0 0.0
    %v2611 = vand.u32 %v1646, 4294901760
    %2612 = vmatpush1.msra.mxu0 %v2611
    %2613 = vmatprep.subr.mxu0 0.0
    %v2614 = vand.u32 %v1647, 4294901760
    %2615 = vmatpush1.msra.mxu0 %v2614
    %2616 = vmatprep.subr.mxu0 0.0
    %v2617 = vand.u32 %v1648, 4294901760
    %2618 = vmatpush1.msra.mxu0 %v2617
    %2619 = vmatprep.subr.mxu0 0.0
    %v2620 = vand.u32 %v1649, 4294901760
    %2621 = vmatpush1.msra.mxu0 %v2620
    %2622 = vmatprep.subr.mxu0 0.0
    %v2623 = vand.u32 %v1650, 4294901760
    %2624 = vmatpush1.msra.mxu0 %v2623
    %2625 = vmatprep.subr.mxu0 0.0
    %v2626 = vand.u32 %v1651, 4294901760
    %2627 = vmatpush1.msra.mxu0 %v2626
    %2628 = vmatprep.subr.mxu0 0.0
    %v2629 = vand.u32 %v1652, 4294901760
    %2630 = vmatpush1.msra.mxu0 %v2629
    %2631 = vmatprep.subr.mxu0 0.0
    %v2632 = vand.u32 %v1653, 4294901760
    %2633 = vmatpush1.msra.mxu0 %v2632
    %2634 = vmatprep.subr.mxu0 0.0
    %v2635 = vand.u32 %v1654, 4294901760
    %2636 = vmatpush1.msra.mxu0 %v2635
    %2637 = vmatprep.subr.mxu0 0.0
    %v2638 = vand.u32 %v1655, 4294901760
    %2639 = vmatpush1.msra.mxu0 %v2638
    %2640 = vmatprep.subr.mxu0 0.0
    %v2641 = vand.u32 %v1656, 4294901760
    %2642 = vmatpush1.msra.mxu0 %v2641
    %2643 = vmatprep.subr.mxu0 0.0
    %v2644 = vand.u32 %v1657, 4294901760
    %2645 = vmatpush1.msra.mxu0 %v2644
    %2646 = vmatprep.subr.mxu0 0.0
    %v2647 = vand.u32 %v1658, 4294901760
    %2648 = vmatpush1.msra.mxu0 %v2647
    %2649 = vmatprep.subr.mxu0 0.0
    %v2650 = vand.u32 %v1659, 4294901760
    %2651 = vmatpush1.msra.mxu0 %v2650
    %2652 = vmatprep.subr.mxu0 0.0
    %v2653 = vand.u32 %v1660, 4294901760
    %2654 = vmatpush1.msra.mxu0 %v2653
    %2655 = vmatprep.subr.mxu0 0.0
    %v2656 = vand.u32 %v1661, 4294901760
    %2657 = vmatpush1.msra.mxu0 %v2656
    %2658 = vmatprep.subr.mxu0 0.0
    %v2659 = vand.u32 %v1662, 4294901760
    %2660 = vmatpush1.msra.mxu0 %v2659
    %2661 = vmatprep.subr.mxu0 0.0
    %v2662 = vand.u32 %v1663, 4294901760
    %2663 = vmatpush1.msra.mxu0 %v2662
    %2664 = vmatprep.subr.mxu0 0.0
    %v2665 = vand.u32 %v1664, 4294901760
    %2666 = vmatpush1.msra.mxu0 %v2665
    %2667 = vmatprep.subr.mxu0 0.0
    %v2668 = vand.u32 %v1665, 4294901760
    %2669 = vmatpush1.msra.mxu0 %v2668
    %2670 = vmatprep.subr.mxu0 0.0
    %v2671 = vand.u32 %v1666, 4294901760
    %2672 = vmatpush1.msra.mxu0 %v2671
    %2673 = vmatprep.subr.mxu0 0.0
    %v2674 = vand.u32 %v1667, 4294901760
    %2675 = vmatpush1.msra.mxu0 %v2674
    %v2676 = vand.u32 %v1629, 4294901760
    %2677 = vmatprep.mubr.f32.mxu0 %v2676
    %v2678 = vand.u32 %v1628, 4294901760
    %2679 = vmatmul.mubr.f32.gmra.mrb[0].mxu0 %v2678
    %v2680 = vpop.f32.mrb[0].mxu0
    %v2681 = vadd.f32 %v2556, %v2680
    %v2682 = vpop.f32.mrb[0].mxu0
    %v2683 = vand.u32 %v1631, 4294901760
    %2684 = vmatprep.mubr.f32.mxu0 %v2683
    %v2685 = vand.u32 %v1630, 4294901760
    %2686 = vmatmul.mubr.f32.gmra.mrb[0].mxu0 %v2685
    %v2687 = vpop.f32.mrb[0].mxu0
    %v2688 = vadd.f32 %v2563, %v2687
    %v2689 = vpop.f32.mrb[0].mxu0
    %v2690 = vand.u32 %v1633, 4294901760
    %2691 = vmatprep.mubr.f32.mxu0 %v2690
    %v2692 = vand.u32 %v1632, 4294901760
    %2693 = vmatmul.mubr.f32.gmra.mrb[0].mxu0 %v2692
    %v2694 = vpop.f32.mrb[0].mxu0
    %v2695 = vadd.f32 %v2570, %v2694
    %v2696 = vpop.f32.mrb[0].mxu0
    %v2697 = vand.u32 %v1635, 4294901760
    %2698 = vmatprep.mubr.f32.mxu0 %v2697
    %v2699 = vand.u32 %v1634, 4294901760
    %2700 = vmatmul.mubr.f32.gmra.mrb[0].mxu0 %v2699
    %v2701 = vpop.f32.mrb[0].mxu0
    %v2702 = vadd.f32 %v2577, %v2701
    %v2703 = vpop.f32.mrb[0].mxu0
    %2704 = vdwg.mxu0
    %v2705 = vadd.f32 %v2681, %v92
    %v2706 = vadd.f32 %v2688, %v93
    %v2707 = vadd.f32 %v2695, %v94
    %v2708 = vadd.f32 %v2702, %v95
    %2709 = vst [vmem:[#allocation10] sm:$0xff] %v2705
    %2710 = vst [vmem:[#allocation10 + $0x8] sm:$0xff] %v2706
    %2711 = vst [vmem:[#allocation10 + $0x10] sm:$0xff] %v2707
    %2712 = vst [vmem:[#allocation10 + $0x18] sm:$0xff] %v2708
    // Predicated region
    $region62: #{tpu_custom_call.1} parent=1 // pred_check
      _
    $region63: #{tpu_custom_call.1} parent=1 // pred_check_branch
      %2714 = sbr.rel (0) target = $region65
    $region64: #{tpu_custom_call.1} parent=1 // pred_region
      %s2716 = ssub.s32 512, 512
      %2717 = vsyncadd [#allocation4], %s2716
      %s2718 = sshll.u32 [#allocation10], 4
      %s2719 = int_to_ptr.vmem [resolvable:$true] %s2718
      %2724 = dma.vmem_to_hbm [thread:$0]  %s2719, 512, %s11, [#allocation4], 128, 128, 8
    $region65: #{tpu_custom_call.1} parent=1 // pred_fallthru
      _
    // Predicated region
    $region66: #{tpu_custom_call.1} parent=1 // pred_check
      _
    $region67: #{tpu_custom_call.1} parent=1 // pred_check_branch
      %2726 = sbr.rel (0) target = $region69
    $region68: #{tpu_custom_call.1} parent=1 // pred_region
      %2727 = dma.done [#allocation4], 512
    $region69: #{tpu_custom_call.1} parent=1 // pred_fallthru
      _
    %2728 = vsyncpa [#allocation3], 1
    %2729 = vsyncpa [#allocation6], 1
    %2730 = vsyncpa [#allocation9], 1
    %2731 = vsyncpa [#allocation4], 1

// kernel: tpu_custom_call.1
$region0: #{tpu_custom_call.1}
  #allocation0 [shape = 'u32[]', space=smem, size = 0x4, offset = 0x4, fixed_abs, tag = 'smem constant byte address 0x4 - core index']
  #allocation1 [shape = 'u32[144,128]{1,0:T(1,128)}', space=vmem, size = 0x12000, scoped, tag = 'internal scratch']
  %s0 = inlined_call_operand.hbm [shape: f32[2,16,128], index: 0, kind: input, shape index: {}]
  %s1 = inlined_call_operand.hbm [shape: f32[7,128], index: 1, kind: input, shape index: {}]
  %s2 = inlined_call_operand.vmem [shape: f32[1,128], index: 2, kind: input, shape index: {}]
  %s3 = inlined_call_operand.vmem [shape: f32[1,128], index: 3, kind: input, shape index: {}]
  %s4 = inlined_call_operand.vmem [shape: f32[1,128], index: 4, kind: input, shape index: {}]
  %s5 = inlined_call_operand.hbm [shape: f32[128,256], index: 5, kind: input, shape index: {}]
  %s6 = inlined_call_operand.vmem [shape: f32[1,256], index: 6, kind: input, shape index: {}]
  %s7 = inlined_call_operand.vmem [shape: f32[1,256], index: 7, kind: input, shape index: {}]
  %s8 = inlined_call_operand.vmem [shape: f32[1,256], index: 8, kind: input, shape index: {}]
  %s9 = inlined_call_operand.hbm [shape: f32[256,128], index: 9, kind: input, shape index: {}]
  %s10 = inlined_call_operand.vmem [shape: f32[1,128], index: 10, kind: input, shape index: {}]
  %s11 = inlined_call_operand.hbm [shape: f32[2,16,128], index: 11, kind: output, shape index: {}]
  %s12 = sld [smem:[#allocation0]]
  $region70: #{tpu_custom_call.1} parent=0
    _
  %s14 = ssub.s32 1, %s12
  %s15 = scalar_select 0, %s14, %s12
  $region1: #{tpu_custom_call.1} parent=0
    #allocation2 [shape = 'u8[16384]{0}', space=vmem, size = 0x4000, scoped, tag = 'input window, operand 0, single buffered']
    #allocation3 [shape = 's32[1]{0}', space=sflag, size = 0x4, scoped, tag = 'scoped memory for tpu_custom_call.1']
    #allocation4 [shape = 's32[1]{0}', space=sflag, size = 0x4, scoped, tag = 'scoped memory for tpu_custom_call.1']
    #allocation5 [shape = 'u8[4096]{0}', space=vmem, size = 0x1000, scoped, tag = 'input window, operand 1, single buffered']
    #allocation6 [shape = 's32[1]{0}', space=sflag, size = 0x4, scoped, tag = 'scoped memory for tpu_custom_call.1']
    #allocation7 [shape = 'u8[131072]{0}', space=vmem, size = 0x20000, scoped, tag = 'input window, operand 5, single buffered']
    #allocation8 [shape = 'u8[131072]{0}', space=vmem, size = 0x20000, scoped, tag = 'input window, operand 9, single buffered']
    #allocation9 [shape = 's32[1]{0}', space=sflag, size = 0x4, scoped, tag = 'scoped memory for tpu_custom_call.1']
    #allocation10 [shape = 'u8[16384]{0}', space=vmem, size = 0x4000, scoped, tag = 'output window, operand 0, single buffered']
    %16 = vsyncpa [#allocation3], 0
    %17 = vsyncpa [#allocation6], 0
    %18 = vsyncpa [#allocation9], 0
    %19 = vsyncpa [#allocation4], 0
    // Predicated region
    $region2: #{tpu_custom_call.1} parent=1 // pred_check
      _
    $region3: #{tpu_custom_call.1} parent=1 // pred_check_branch
      %21 = sbr.rel (0) target = $region5
    $region4: #{tpu_custom_call.1} parent=1 // pred_region
      %s23 = ssub.s32 512, 512
      %24 = vsyncadd [#allocation3], %s23
      %s25 = sshll.u32 [#allocation2], 4
      %s26 = int_to_ptr.vmem [resolvable:$true] %s25
      %31 = dma.hbm_to_vmem [thread:$0]  %s0, 512, %s26, [#allocation3], 128, 128, 8
    $region5: #{tpu_custom_call.1} parent=1 // pred_fallthru
      _
    // Predicated region
    $region6: #{tpu_custom_call.1} parent=1 // pred_check
      _
    $region7: #{tpu_custom_call.1} parent=1 // pred_check_branch
      %33 = sbr.rel (0) target = $region9
    $region8: #{tpu_custom_call.1} parent=1 // pred_region
      %s35 = ssub.s32 128, 128
      %36 = vsyncadd [#allocation6], %s35
      %s38 = sshll.u32 [#allocation5], 4
      %s39 = int_to_ptr.vmem [resolvable:$true] %s38
      %41 = dma.hbm_to_vmem [thread:$0]  %s1, 128, %s39, [#allocation6]
    $region9: #{tpu_custom_call.1} parent=1 // pred_fallthru
      _
    // Predicated region
    $region10: #{tpu_custom_call.1} parent=1 // pred_check
      _
    $region11: #{tpu_custom_call.1} parent=1 // pred_check_branch
      %43 = sbr.rel (0) target = $region13
    $region12: #{tpu_custom_call.1} parent=1 // pred_region
      _
    $region13: #{tpu_custom_call.1} parent=1 // pred_fallthru
      _
    // Predicated region
    $region14: #{tpu_custom_call.1} parent=1 // pred_check
      _
    $region15: #{tpu_custom_call.1} parent=1 // pred_check_branch
      %45 = sbr.rel (0) target = $region17
    $region16: #{tpu_custom_call.1} parent=1 // pred_region
      _
    $region17: #{tpu_custom_call.1} parent=1 // pred_fallthru
      _
    // Predicated region
    $region18: #{tpu_custom_call.1} parent=1 // pred_check
      _
    $region19: #{tpu_custom_call.1} parent=1 // pred_check_branch
      %47 = sbr.rel (0) target = $region21
    $region20: #{tpu_custom_call.1} parent=1 // pred_region
      _
    $region21: #{tpu_custom_call.1} parent=1 // pred_fallthru
      _
    // Predicated region
    $region22: #{tpu_custom_call.1} parent=1 // pred_check
      _
    $region23: #{tpu_custom_call.1} parent=1 // pred_check_branch
      %49 = sbr.rel (0) target = $region25
    $region24: #{tpu_custom_call.1} parent=1 // pred_region
      %s51 = ssub.s32 4096, 4096
      %52 = vsyncadd [#allocation6], %s51
      %s53 = sshll.u32 [#allocation7], 4
      %s54 = int_to_ptr.vmem [resolvable:$true] %s53
      %59 = dma.hbm_to_vmem [thread:$0]  %s5, 4096, %s54, [#allocation6], 256, 256, 16
    $region25: #{tpu_custom_call.1} parent=1 // pred_fallthru
      _
    // Predicated region
    $region26: #{tpu_custom_call.1} parent=1 // pred_check
      _
    $region27: #{tpu_custom_call.1} parent=1 // pred_check_branch
      %61 = sbr.rel (0) target = $region29
    $region28: #{tpu_custom_call.1} parent=1 // pred_region
      _
    $region29: #{tpu_custom_call.1} parent=1 // pred_fallthru
      _
    // Predicated region
    $region30: #{tpu_custom_call.1} parent=1 // pred_check
      _
    $region31: #{tpu_custom_call.1} parent=1 // pred_check_branch
      %63 = sbr.rel (0) target = $region33
    $region32: #{tpu_custom_call.1} parent=1 // pred_region
      _
    $region33: #{tpu_custom_call.1} parent=1 // pred_fallthru
      _
    // Predicated region
    $region34: #{tpu_custom_call.1} parent=1 // pred_check
      _
    $region35: #{tpu_custom_call.1} parent=1 // pred_check_branch
      %65 = sbr.rel (0) target = $region37
    $region36: #{tpu_custom_call.1} parent=1 // pred_region
      _
    $region37: #{tpu_custom_call.1} parent=1 // pred_fallthru
      _
    // Predicated region
    $region38: #{tpu_custom_call.1} parent=1 // pred_check
      _
    $region39: #{tpu_custom_call.1} parent=1 // pred_check_branch
      %67 = sbr.rel (0) target = $region41
    $region40: #{tpu_custom_call.1} parent=1 // pred_region
      %s69 = ssub.s32 4096, 4096
      %70 = vsyncadd [#allocation9], %s69
      %s71 = sshll.u32 [#allocation8], 4
      %s72 = int_to_ptr.vmem [resolvable:$true] %s71
      %77 = dma.hbm_to_vmem [thread:$0]  %s9, 4096, %s72, [#allocation9], 128, 128, 8
    $region41: #{tpu_custom_call.1} parent=1 // pred_fallthru
      _
    // Predicated region
    $region42: #{tpu_custom_call.1} parent=1 // pred_check
      _
    $region43: #{tpu_custom_call.1} parent=1 // pred_check_branch
      %79 = sbr.rel (0) target = $region45
    $region44: #{tpu_custom_call.1} parent=1 // pred_region
      _
    $region45: #{tpu_custom_call.1} parent=1 // pred_fallthru
      _
    // Predicated region
    $region46: #{tpu_custom_call.1} parent=1 // pred_check
      _
    $region47: #{tpu_custom_call.1} parent=1 // pred_check_branch
      %81 = sbr.rel (0) target = $region49
    $region48: #{tpu_custom_call.1} parent=1 // pred_region
      %82 = dma.done [#allocation3], 512
    $region49: #{tpu_custom_call.1} parent=1 // pred_fallthru
      _
    // Predicated region
    $region50: #{tpu_custom_call.1} parent=1 // pred_check
      _
    $region51: #{tpu_custom_call.1} parent=1 // pred_check_branch
      %84 = sbr.rel (0) target = $region53
    $region52: #{tpu_custom_call.1} parent=1 // pred_region
      %85 = dma.done [#allocation6], 128
    $region53: #{tpu_custom_call.1} parent=1 // pred_fallthru
      _
    // Predicated region
    $region54: #{tpu_custom_call.1} parent=1 // pred_check
      _
    $region55: #{tpu_custom_call.1} parent=1 // pred_check_branch
      %87 = sbr.rel (0) target = $region57
    $region56: #{tpu_custom_call.1} parent=1 // pred_region
      %88 = dma.done [#allocation6], 4096
    $region57: #{tpu_custom_call.1} parent=1 // pred_fallthru
      _
    // Predicated region
    $region58: #{tpu_custom_call.1} parent=1 // pred_check
      _
    $region59: #{tpu_custom_call.1} parent=1 // pred_check_branch
      %90 = sbr.rel (0) target = $region61
    $region60: #{tpu_custom_call.1} parent=1 // pred_region
      %91 = dma.done [#allocation9], 4096
    $region61: #{tpu_custom_call.1} parent=1 // pred_fallthru
      _
    %v92 = vld [vmem:[#allocation2] sm:$0xff]
    %v93 = vld [vmem:[#allocation2 + $0x8] sm:$0xff]
    %v94 = vld [vmem:[#allocation2 + $0x10] sm:$0xff]
    %v95 = vld [vmem:[#allocation2 + $0x18] sm:$0xff]
    %vm100 = vcmask 1042432
    %v101 = vrot.slane %v92, 5
    %v102 = vrot.slane %v93, 5
    %v103 = vsel %vm100, %v101, %v102
    %v104 = vrot.slane %v94, 5
    %v105 = vrot.slane %v95, 5
    %v106 = vsel %vm100, %v104, %v105
    %v113 = vsel %vm100, 0.0, %v101
    %v114 = vsel %vm100, 0.0, %v104
    %v115 = vsel %vm100, %v102, 0.0
    %v116 = vsel %vm100, %v105, 0.0
    %v117 = vld [vmem:[#allocation5] sm:$0x7f]
    %v118 = vlaneseq
    %v119 = vshrl.u32 %v118, 7
    %v120 = vsub.s32 0, %v119
    %v121 = vrot.slane %v117, %v120
    %v122 = vmul.f32 %v121, %v113
    %v123 = vmul.f32 %v121, %v103
    %v124 = vmul.f32 %v121, %v114
    %v125 = vmul.f32 %v121, %v106
    %v126 = vlaneseq
    %v127 = vshrl.u32 %v126, 7
    %v128 = vsub.s32 1, %v127
    %v129 = vrot.slane %v117, %v128
    %v130 = vmul.f32 %v129, %v113
    %v131 = vmul.f32 %v129, %v103
    %v132 = vmul.f32 %v129, %v115
    %v133 = vmul.f32 %v129, %v114
    %v134 = vmul.f32 %v129, %v106
    %v135 = vmul.f32 %v129, %v116
    %vm142 = vcmask 1046528
    %v143 = vrot.slane %v130, 1
    %v144 = vrot.slane %v131, 1
    %v145 = vsel %vm142, %v143, %v144
    %v146 = vrot.slane %v132, 1
    %v147 = vsel %vm142, %v144, %v146
    %v148 = vrot.slane %v133, 1
    %v149 = vrot.slane %v134, 1
    %v150 = vsel %vm142, %v148, %v149
    %v151 = vrot.slane %v135, 1
    %v152 = vsel %vm142, %v149, %v151
    %v157 = vadd.f32 %v122, %v145
    %v158 = vadd.f32 %v123, %v147
    %v159 = vadd.f32 %v124, %v150
    %v160 = vadd.f32 %v125, %v152
    %v161 = vlaneseq
    %v162 = vshrl.u32 %v161, 7
    %v163 = vsub.s32 2, %v162
    %v164 = vrot.slane %v117, %v163
    %v165 = vmul.f32 %v164, %v113
    %v166 = vmul.f32 %v164, %v103
    %v167 = vmul.f32 %v164, %v115
    %v168 = vmul.f32 %v164, %v114
    %v169 = vmul.f32 %v164, %v106
    %v170 = vmul.f32 %v164, %v116
    %vm177 = vcmask 1045504
    %v178 = vrot.slane %v165, 2
    %v179 = vrot.slane %v166, 2
    %v180 = vsel %vm177, %v178, %v179
    %v181 = vrot.slane %v167, 2
    %v182 = vsel %vm177, %v179, %v181
    %v183 = vrot.slane %v168, 2
    %v184 = vrot.slane %v169, 2
    %v185 = vsel %vm177, %v183, %v184
    %v186 = vrot.slane %v170, 2
    %v187 = vsel %vm177, %v184, %v186
    %v192 = vadd.f32 %v157, %v180
    %v193 = vadd.f32 %v158, %v182
    %v194 = vadd.f32 %v159, %v185
    %v195 = vadd.f32 %v160, %v187
    %v196 = vlaneseq
    %v197 = vshrl.u32 %v196, 7
    %v198 = vsub.s32 3, %v197
    %v199 = vrot.slane %v117, %v198
    %v200 = vmul.f32 %v199, %v113
    %v201 = vmul.f32 %v199, %v103
    %v202 = vmul.f32 %v199, %v115
    %v203 = vmul.f32 %v199, %v114
    %v204 = vmul.f32 %v199, %v106
    %v205 = vmul.f32 %v199, %v116
    %vm212 = vcmask 1044480
    %v213 = vrot.slane %v200, 3
    %v214 = vrot.slane %v201, 3
    %v215 = vsel %vm212, %v213, %v214
    %v216 = vrot.slane %v202, 3
    %v217 = vsel %vm212, %v214, %v216
    %v218 = vrot.slane %v203, 3
    %v219 = vrot.slane %v204, 3
    %v220 = vsel %vm212, %v218, %v219
    %v221 = vrot.slane %v205, 3
    %v222 = vsel %vm212, %v219, %v221
    %v227 = vadd.f32 %v192, %v215
    %v228 = vadd.f32 %v193, %v217
    %v229 = vadd.f32 %v194, %v220
    %v230 = vadd.f32 %v195, %v222
    %v231 = vlaneseq
    %v232 = vshrl.u32 %v231, 7
    %v233 = vsub.s32 4, %v232
    %v234 = vrot.slane %v117, %v233
    %v235 = vmul.f32 %v234, %v113
    %v236 = vmul.f32 %v234, %v103
    %v237 = vmul.f32 %v234, %v115
    %v238 = vmul.f32 %v234, %v114
    %v239 = vmul.f32 %v234, %v106
    %v240 = vmul.f32 %v234, %v116
    %vm247 = vcmask 1043456
    %v248 = vrot.slane %v235, 4
    %v249 = vrot.slane %v236, 4
    %v250 = vsel %vm247, %v248, %v249
    %v251 = vrot.slane %v237, 4
    %v252 = vsel %vm247, %v249, %v251
    %v253 = vrot.slane %v238, 4
    %v254 = vrot.slane %v239, 4
    %v255 = vsel %vm247, %v253, %v254
    %v256 = vrot.slane %v240, 4
    %v257 = vsel %vm247, %v254, %v256
    %v262 = vadd.f32 %v227, %v250
    %v263 = vadd.f32 %v228, %v252
    %v264 = vadd.f32 %v229, %v255
    %v265 = vadd.f32 %v230, %v257
    %v266 = vlaneseq
    %v267 = vshrl.u32 %v266, 7
    %v268 = vsub.s32 5, %v267
    %v269 = vrot.slane %v117, %v268
    %v270 = vmul.f32 %v269, %v113
    %v271 = vmul.f32 %v269, %v103
    %v272 = vmul.f32 %v269, %v115
    %v273 = vmul.f32 %v269, %v114
    %v274 = vmul.f32 %v269, %v106
    %v275 = vmul.f32 %v269, %v116
    %v282 = vrot.slane %v270, 5
    %v283 = vrot.slane %v271, 5
    %v284 = vsel %vm100, %v282, %v283
    %v285 = vrot.slane %v272, 5
    %v286 = vsel %vm100, %v283, %v285
    %v287 = vrot.slane %v273, 5
    %v288 = vrot.slane %v274, 5
    %v289 = vsel %vm100, %v287, %v288
    %v290 = vrot.slane %v275, 5
    %v291 = vsel %vm100, %v288, %v290
    %v296 = vadd.f32 %v262, %v284
    %v297 = vadd.f32 %v263, %v286
    %v298 = vadd.f32 %v264, %v289
    %v299 = vadd.f32 %v265, %v291
    %v300 = vlaneseq
    %v301 = vshrl.u32 %v300, 7
    %v302 = vsub.s32 6, %v301
    %v303 = vrot.slane %v117, %v302
    %v304 = vmul.f32 %v303, %v113
    %v305 = vmul.f32 %v303, %v103
    %v306 = vmul.f32 %v303, %v115
    %v307 = vmul.f32 %v303, %v114
    %v308 = vmul.f32 %v303, %v106
    %v309 = vmul.f32 %v303, %v116
    %vm316 = vcmask 1041408
    %v317 = vrot.slane %v304, 6
    %v318 = vrot.slane %v305, 6
    %v319 = vsel %vm316, %v317, %v318
    %v320 = vrot.slane %v306, 6
    %v321 = vsel %vm316, %v318, %v320
    %v322 = vrot.slane %v307, 6
    %v323 = vrot.slane %v308, 6
    %v324 = vsel %vm316, %v322, %v323
    %v325 = vrot.slane %v309, 6
    %v326 = vsel %vm316, %v323, %v325
    %v331 = vadd.f32 %v296, %v319
    %v332 = vadd.f32 %v297, %v321
    %v333 = vadd.f32 %v298, %v324
    %v334 = vadd.f32 %v299, %v326
    %v335 = vld [vmem:[%s2] sm:$0x1]
    %v337 = vlaneseq
    %v338 = vshrl.u32 %v337, 7
    %v339 = vsub.s32 0, %v338
    %v340 = vrot.slane %v335, %v339
    %v342 = vadd.f32 %v331, %v340
    %v343 = vadd.f32 %v332, %v340
    %v344 = vadd.f32 %v333, %v340
    %v345 = vadd.f32 %v334, %v340
    %346 = vadd.xlane.f32.xlu0 %v342
    %v347 = vpop.xlane.xlu0 %346
    %348 = vadd.xlane.f32.xlu0 %v343
    %v349 = vpop.xlane.xlu0 %348
    %350 = vadd.xlane.f32.xlu0 %v344
    %v351 = vpop.xlane.xlu0 %350
    %352 = vadd.xlane.f32.xlu0 %v345
    %v353 = vpop.xlane.xlu0 %352
    %v354 = vrcp.pop 128.0
    %v355 = vmul.f32 %v347, %v354
    %v356 = vmul.f32 %v349, %v354
    %v357 = vmul.f32 %v351, %v354
    %v358 = vmul.f32 %v353, %v354
    %v359 = vsub.f32 %v342, %v355
    %v360 = vsub.f32 %v343, %v356
    %v361 = vsub.f32 %v344, %v357
    %v362 = vsub.f32 %v345, %v358
    %v363 = vmul.f32 %v359, %v359
    %v364 = vmul.f32 %v360, %v360
    %v365 = vmul.f32 %v361, %v361
    %v366 = vmul.f32 %v362, %v362
    %367 = vadd.xlane.f32.xlu0 %v363
    %v368 = vpop.xlane.xlu0 %367
    %369 = vadd.xlane.f32.xlu0 %v364
    %v370 = vpop.xlane.xlu0 %369
    %371 = vadd.xlane.f32.xlu0 %v365
    %v372 = vpop.xlane.xlu0 %371
    %373 = vadd.xlane.f32.xlu0 %v366
    %v374 = vpop.xlane.xlu0 %373
    %v375 = vmul.f32 %v368, %v354
    %v376 = vmul.f32 %v370, %v354
    %v377 = vmul.f32 %v372, %v354
    %v378 = vmul.f32 %v374, %v354
    %v379 = vadd.f32 %v375, 1e-06
    %v380 = vadd.f32 %v376, 1e-06
    %v381 = vadd.f32 %v377, 1e-06
    %v382 = vadd.f32 %v378, 1e-06
    %v383 = vrsqrt.pop %v379
    %v384 = vrsqrt.pop %v380
    %v385 = vrsqrt.pop %v381
    %v386 = vrsqrt.pop %v382
    %v387 = vmul.f32 %v359, %v383
    %v388 = vmul.f32 %v360, %v384
    %v389 = vmul.f32 %v361, %v385
    %v390 = vmul.f32 %v362, %v386
    %v391 = vld [vmem:[%s3] sm:$0x1]
    %v393 = vlaneseq
    %v394 = vshrl.u32 %v393, 7
    %v395 = vsub.s32 0, %v394
    %v396 = vrot.slane %v391, %v395
    %v398 = vmul.f32 %v387, %v396
    %v399 = vmul.f32 %v388, %v396
    %v400 = vmul.f32 %v389, %v396
    %v401 = vmul.f32 %v390, %v396
    %v402 = vld [vmem:[%s4] sm:$0x1]
    %v404 = vlaneseq
    %v405 = vshrl.u32 %v404, 7
    %v406 = vsub.s32 0, %v405
    %v407 = vrot.slane %v402, %v406
    %v409 = vadd.f32 %v398, %v407
    %v410 = vadd.f32 %v399, %v407
    %v411 = vadd.f32 %v400, %v407
    %v412 = vadd.f32 %v401, %v407
    %v413 = vld [vmem:[#allocation7] sm:$0xff]
    %v414 = vld [vmem:[#allocation7 + $0x8] sm:$0xff]
    %v415 = vld [vmem:[#allocation7 + $0x10] sm:$0xff]
    %v416 = vld [vmem:[#allocation7 + $0x18] sm:$0xff]
    %v417 = vld [vmem:[#allocation7 + $0x20] sm:$0xff]
    %v418 = vld [vmem:[#allocation7 + $0x28] sm:$0xff]
    %v419 = vld [vmem:[#allocation7 + $0x30] sm:$0xff]
    %v420 = vld [vmem:[#allocation7 + $0x38] sm:$0xff]
    %v421 = vld [vmem:[#allocation7 + $0x40] sm:$0xff]
    %v422 = vld [vmem:[#allocation7 + $0x48] sm:$0xff]
    %v423 = vld [vmem:[#allocation7 + $0x50] sm:$0xff]
    %v424 = vld [vmem:[#allocation7 + $0x58] sm:$0xff]
    %v425 = vld [vmem:[#allocation7 + $0x60] sm:$0xff]
    %v426 = vld [vmem:[#allocation7 + $0x68] sm:$0xff]
    %v427 = vld [vmem:[#allocation7 + $0x70] sm:$0xff]
    %v428 = vld [vmem:[#allocation7 + $0x78] sm:$0xff]
    %v429 = vld [vmem:[#allocation7 + $0x80] sm:$0xff]
    %v430 = vld [vmem:[#allocation7 + $0x88] sm:$0xff]
    %v431 = vld [vmem:[#allocation7 + $0x90] sm:$0xff]
    %v432 = vld [vmem:[#allocation7 + $0x98] sm:$0xff]
    %v433 = vld [vmem:[#allocation7 + $0xa0] sm:$0xff]
    %v434 = vld [vmem:[#allocation7 + $0xa8] sm:$0xff]
    %v435 = vld [vmem:[#allocation7 + $0xb0] sm:$0xff]
    %v436 = vld [vmem:[#allocation7 + $0xb8] sm:$0xff]
    %v437 = vld [vmem:[#allocation7 + $0xc0] sm:$0xff]
    %v438 = vld [vmem:[#allocation7 + $0xc8] sm:$0xff]
    %v439 = vld [vmem:[#allocation7 + $0xd0] sm:$0xff]
    %v440 = vld [vmem:[#allocation7 + $0xd8] sm:$0xff]
    %v441 = vld [vmem:[#allocation7 + $0xe0] sm:$0xff]
    %v442 = vld [vmem:[#allocation7 + $0xe8] sm:$0xff]
    %v443 = vld [vmem:[#allocation7 + $0xf0] sm:$0xff]
    %v444 = vld [vmem:[#allocation7 + $0xf8] sm:$0xff]
    %v445 = vld [vmem:[%s6] sm:$0x3]
    %v447 = vlaneseq
    %v448 = vshrl.u32 %v447, 7
    %v449 = vsub.s32 0, %v448
    %v450 = vrot.slane %v445, %v449
    %v451 = vlaneseq
    %v452 = vshrl.u32 %v451, 7
    %v453 = vsub.s32 1, %v452
    %v454 = vrot.slane %v445, %v453
    %v457 = vand.u32 %v414, 4294901760
    %458 = vmatprep.subr.mxu0 %v457
    %v459 = vand.u32 %v413, 4294901760
    %460 = vmatpush1.msra.mxu0 %v459
    %v461 = vand.u32 %v416, 4294901760
    %462 = vmatprep.subr.mxu0 %v461
    %v463 = vand.u32 %v415, 4294901760
    %464 = vmatpush1.msra.mxu0 %v463
    %v465 = vand.u32 %v418, 4294901760
    %466 = vmatprep.subr.mxu0 %v465
    %v467 = vand.u32 %v417, 4294901760
    %468 = vmatpush1.msra.mxu0 %v467
    %v469 = vand.u32 %v420, 4294901760
    %470 = vmatprep.subr.mxu0 %v469
    %v471 = vand.u32 %v419, 4294901760
    %472 = vmatpush1.msra.mxu0 %v471
    %v473 = vand.u32 %v422, 4294901760
    %474 = vmatprep.subr.mxu0 %v473
    %v475 = vand.u32 %v421, 4294901760
    %476 = vmatpush1.msra.mxu0 %v475
    %v477 = vand.u32 %v424, 4294901760
    %478 = vmatprep.subr.mxu0 %v477
    %v479 = vand.u32 %v423, 4294901760
    %480 = vmatpush1.msra.mxu0 %v479
    %v481 = vand.u32 %v426, 4294901760
    %482 = vmatprep.subr.mxu0 %v481
    %v483 = vand.u32 %v425, 4294901760
    %484 = vmatpush1.msra.mxu0 %v483
    %v485 = vand.u32 %v428, 4294901760
    %486 = vmatprep.subr.mxu0 %v485
    %v487 = vand.u32 %v427, 4294901760
    %488 = vmatpush1.msra.mxu0 %v487
    %v489 = vand.u32 %v430, 4294901760
    %490 = vmatprep.subr.mxu0 %v489
    %v491 = vand.u32 %v429, 4294901760
    %492 = vmatpush1.msra.mxu0 %v491
    %v493 = vand.u32 %v432, 4294901760
    %494 = vmatprep.subr.mxu0 %v493
    %v495 = vand.u32 %v431, 4294901760
    %496 = vmatpush1.msra.mxu0 %v495
    %v497 = vand.u32 %v434, 4294901760
    %498 = vmatprep.subr.mxu0 %v497
    %v499 = vand.u32 %v433, 4294901760
    %500 = vmatpush1.msra.mxu0 %v499
    %v501 = vand.u32 %v436, 4294901760
    %502 = vmatprep.subr.mxu0 %v501
    %v503 = vand.u32 %v435, 4294901760
    %504 = vmatpush1.msra.mxu0 %v503
    %v505 = vand.u32 %v438, 4294901760
    %506 = vmatprep.subr.mxu0 %v505
    %v507 = vand.u32 %v437, 4294901760
    %508 = vmatpush1.msra.mxu0 %v507
    %v509 = vand.u32 %v440, 4294901760
    %510 = vmatprep.subr.mxu0 %v509
    %v511 = vand.u32 %v439, 4294901760
    %512 = vmatpush1.msra.mxu0 %v511
    %v513 = vand.u32 %v442, 4294901760
    %514 = vmatprep.subr.mxu0 %v513
    %v515 = vand.u32 %v441, 4294901760
    %516 = vmatpush1.msra.mxu0 %v515
    %v517 = vand.u32 %v444, 4294901760
    %518 = vmatprep.subr.mxu0 %v517
    %v519 = vand.u32 %v443, 4294901760
    %520 = vmatpush1.msra.mxu0 %v519
    %521 = vmatprep.subr.mxu0 0.0
    %522 = vmatpush1.msra.mxu0 0.0
    %523 = vmatprep.subr.mxu0 0.0
    %524 = vmatpush1.msra.mxu0 0.0
    %525 = vmatprep.subr.mxu0 0.0
    %526 = vmatpush1.msra.mxu0 0.0
    %527 = vmatprep.subr.mxu0 0.0
    %528 = vmatpush1.msra.mxu0 0.0
    %529 = vmatprep.subr.mxu0 0.0
    %530 = vmatpush1.msra.mxu0 0.0
    %531 = vmatprep.subr.mxu0 0.0
    %532 = vmatpush1.msra.mxu0 0.0
    %533 = vmatprep.subr.mxu0 0.0
    %534 = vmatpush1.msra.mxu0 0.0
    %535 = vmatprep.subr.mxu0 0.0
    %536 = vmatpush1.msra.mxu0 0.0
    %537 = vmatprep.subr.mxu0 0.0
    %538 = vmatpush1.msra.mxu0 0.0
    %539 = vmatprep.subr.mxu0 0.0
    %540 = vmatpush1.msra.mxu0 0.0
    %541 = vmatprep.subr.mxu0 0.0
    %542 = vmatpush1.msra.mxu0 0.0
    %543 = vmatprep.subr.mxu0 0.0
    %544 = vmatpush1.msra.mxu0 0.0
    %545 = vmatprep.subr.mxu0 0.0
    %546 = vmatpush1.msra.mxu0 0.0
    %547 = vmatprep.subr.mxu0 0.0
    %548 = vmatpush1.msra.mxu0 0.0
    %549 = vmatprep.subr.mxu0 0.0
    %550 = vmatpush1.msra.mxu0 0.0
    %551 = vmatprep.subr.mxu0 0.0
    %552 = vmatpush1.msra.mxu0 0.0
    %553 = vmatprep.mubr.f32.mxu0 0.0
    %v554 = vand.u32 %v409, 4294901760
    %v555 = vsub.f32 %v409, %v554
    %v556 = vand.u32 %v555, 4294901760
    %v557 = vsub.f32 %v555, %v556
    %v558 = vand.u32 %v557, 4294901760
    %559 = vmatmul.mubr.f32.gmra.mrb[0].mxu0 %v558
    %v560 = vpop.f32.mrb[0].mxu0
    %v561 = vadd.f32 %v450, %v560
    %v562 = vpop.f32.mrb[0].mxu0
    %v563 = vadd.f32 %v454, %v562
    %564 = vmatprep.mubr.f32.mxu0 0.0
    %v565 = vand.u32 %v410, 4294901760
    %v566 = vsub.f32 %v410, %v565
    %v567 = vand.u32 %v566, 4294901760
    %v568 = vsub.f32 %v566, %v567
    %v569 = vand.u32 %v568, 4294901760
    %570 = vmatmul.mubr.f32.gmra.mrb[0].mxu0 %v569
    %v571 = vpop.f32.mrb[0].mxu0
    %v572 = vadd.f32 %v450, %v571
    %v573 = vpop.f32.mrb[0].mxu0
    %v574 = vadd.f32 %v454, %v573
    %575 = vmatprep.mubr.f32.mxu0 0.0
    %v576 = vand.u32 %v411, 4294901760
    %v577 = vsub.f32 %v411, %v576
    %v578 = vand.u32 %v577, 4294901760
    %v579 = vsub.f32 %v577, %v578
    %v580 = vand.u32 %v579, 4294901760
    %581 = vmatmul.mubr.f32.gmra.mrb[0].mxu0 %v580
    %v582 = vpop.f32.mrb[0].mxu0
    %v583 = vadd.f32 %v450, %v582
    %v584 = vpop.f32.mrb[0].mxu0
    %v585 = vadd.f32 %v454, %v584
    %586 = vmatprep.mubr.f32.mxu0 0.0
    %v587 = vand.u32 %v412, 4294901760
    %v588 = vsub.f32 %v412, %v587
    %v589 = vand.u32 %v588, 4294901760
    %v590 = vsub.f32 %v588, %v589
    %v591 = vand.u32 %v590, 4294901760
    %592 = vmatmul.mubr.f32.gmra.mrb[0].mxu0 %v591
    %v593 = vpop.f32.mrb[0].mxu0
    %v594 = vadd.f32 %v450, %v593
    %v595 = vpop.f32.mrb[0].mxu0
    %v596 = vadd.f32 %v454, %v595
    %597 = vdwg.mxu0
    %v598 = vand.u32 %v414, 4294901760
    %v599 = vsub.f32 %v414, %v598
    %v600 = vand.u32 %v599, 4294901760
    %v601 = vsub.f32 %v599, %v600
    %v602 = vand.u32 %v601, 4294901760
    %603 = vmatprep.subr.mxu0 %v602
    %v604 = vand.u32 %v413, 4294901760
    %v605 = vsub.f32 %v413, %v604
    %v606 = vand.u32 %v605, 4294901760
    %v607 = vsub.f32 %v605, %v606
    %v608 = vand.u32 %v607, 4294901760
    %609 = vmatpush1.msra.mxu0 %v608
    %v610 = vand.u32 %v416, 4294901760
    %v611 = vsub.f32 %v416, %v610
    %v612 = vand.u32 %v611, 4294901760
    %v613 = vsub.f32 %v611, %v612
    %v614 = vand.u32 %v613, 4294901760
    %615 = vmatprep.subr.mxu0 %v614
    %v616 = vand.u32 %v415, 4294901760
    %v617 = vsub.f32 %v415, %v616
    %v618 = vand.u32 %v617, 4294901760
    %v619 = vsub.f32 %v617, %v618
    %v620 = vand.u32 %v619, 4294901760
    %621 = vmatpush1.msra.mxu0 %v620
    %v622 = vand.u32 %v418, 4294901760
    %v623 = vsub.f32 %v418, %v622
    %v624 = vand.u32 %v623, 4294901760
    %v625 = vsub.f32 %v623, %v624
    %v626 = vand.u32 %v625, 4294901760
    %627 = vmatprep.subr.mxu0 %v626
    %v628 = vand.u32 %v417, 4294901760
    %v629 = vsub.f32 %v417, %v628
    %v630 = vand.u32 %v629, 4294901760
    %v631 = vsub.f32 %v629, %v630
    %v632 = vand.u32 %v631, 4294901760
    %633 = vmatpush1.msra.mxu0 %v632
    %v634 = vand.u32 %v420, 4294901760
    %v635 = vsub.f32 %v420, %v634
    %v636 = vand.u32 %v635, 4294901760
    %v637 = vsub.f32 %v635, %v636
    %v638 = vand.u32 %v637, 4294901760
    %639 = vmatprep.subr.mxu0 %v638
    %v640 = vand.u32 %v419, 4294901760
    %v641 = vsub.f32 %v419, %v640
    %v642 = vand.u32 %v641, 4294901760
    %v643 = vsub.f32 %v641, %v642
    %v644 = vand.u32 %v643, 4294901760
    %645 = vmatpush1.msra.mxu0 %v644
    %v646 = vand.u32 %v422, 4294901760
    %v647 = vsub.f32 %v422, %v646
    %v648 = vand.u32 %v647, 4294901760
    %v649 = vsub.f32 %v647, %v648
    %v650 = vand.u32 %v649, 4294901760
    %651 = vmatprep.subr.mxu0 %v650
    %v652 = vand.u32 %v421, 4294901760
    %v653 = vsub.f32 %v421, %v652
    %v654 = vand.u32 %v653, 4294901760
    %v655 = vsub.f32 %v653, %v654
    %v656 = vand.u32 %v655, 4294901760
    %657 = vmatpush1.msra.mxu0 %v656
    %v658 = vand.u32 %v424, 4294901760
    %v659 = vsub.f32 %v424, %v658
    %v660 = vand.u32 %v659, 4294901760
    %v661 = vsub.f32 %v659, %v660
    %v662 = vand.u32 %v661, 4294901760
    %663 = vmatprep.subr.mxu0 %v662
    %v664 = vand.u32 %v423, 4294901760
    %v665 = vsub.f32 %v423, %v664
    %v666 = vand.u32 %v665, 4294901760
    %v667 = vsub.f32 %v665, %v666
    %v668 = vand.u32 %v667, 4294901760
    %669 = vmatpush1.msra.mxu0 %v668
    %v670 = vand.u32 %v426, 4294901760
    %v671 = vsub.f32 %v426, %v670
    %v672 = vand.u32 %v671, 4294901760
    %v673 = vsub.f32 %v671, %v672
    %v674 = vand.u32 %v673, 4294901760
    %675 = vmatprep.subr.mxu0 %v674
    %v676 = vand.u32 %v425, 4294901760
    %v677 = vsub.f32 %v425, %v676
    %v678 = vand.u32 %v677, 4294901760
    %v679 = vsub.f32 %v677, %v678
    %v680 = vand.u32 %v679, 4294901760
    %681 = vmatpush1.msra.mxu0 %v680
    %v682 = vand.u32 %v428, 4294901760
    %v683 = vsub.f32 %v428, %v682
    %v684 = vand.u32 %v683, 4294901760
    %v685 = vsub.f32 %v683, %v684
    %v686 = vand.u32 %v685, 4294901760
    %687 = vmatprep.subr.mxu0 %v686
    %v688 = vand.u32 %v427, 4294901760
    %v689 = vsub.f32 %v427, %v688
    %v690 = vand.u32 %v689, 4294901760
    %v691 = vsub.f32 %v689, %v690
    %v692 = vand.u32 %v691, 4294901760
    %693 = vmatpush1.msra.mxu0 %v692
    %v694 = vand.u32 %v430, 4294901760
    %v695 = vsub.f32 %v430, %v694
    %v696 = vand.u32 %v695, 4294901760
    %v697 = vsub.f32 %v695, %v696
    %v698 = vand.u32 %v697, 4294901760
    %699 = vmatprep.subr.mxu0 %v698
    %v700 = vand.u32 %v429, 4294901760
    %v701 = vsub.f32 %v429, %v700
    %v702 = vand.u32 %v701, 4294901760
    %v703 = vsub.f32 %v701, %v702
    %v704 = vand.u32 %v703, 4294901760
    %705 = vmatpush1.msra.mxu0 %v704
    %v706 = vand.u32 %v432, 4294901760
    %v707 = vsub.f32 %v432, %v706
    %v708 = vand.u32 %v707, 4294901760
    %v709 = vsub.f32 %v707, %v708
    %v710 = vand.u32 %v709, 4294901760
    %711 = vmatprep.subr.mxu0 %v710
    %v712 = vand.u32 %v431, 4294901760
    %v713 = vsub.f32 %v431, %v712
    %v714 = vand.u32 %v713, 4294901760
    %v715 = vsub.f32 %v713, %v714
    %v716 = vand.u32 %v715, 4294901760
    %717 = vmatpush1.msra.mxu0 %v716
    %v718 = vand.u32 %v434, 4294901760
    %v719 = vsub.f32 %v434, %v718
    %v720 = vand.u32 %v719, 4294901760
    %v721 = vsub.f32 %v719, %v720
    %v722 = vand.u32 %v721, 4294901760
    %723 = vmatprep.subr.mxu0 %v722
    %v724 = vand.u32 %v433, 4294901760
    %v725 = vsub.f32 %v433, %v724
    %v726 = vand.u32 %v725, 4294901760
    %v727 = vsub.f32 %v725, %v726
    %v728 = vand.u32 %v727, 4294901760
    %729 = vmatpush1.msra.mxu0 %v728
    %v730 = vand.u32 %v436, 4294901760
    %v731 = vsub.f32 %v436, %v730
    %v732 = vand.u32 %v731, 4294901760
    %v733 = vsub.f32 %v731, %v732
    %v734 = vand.u32 %v733, 4294901760
    %735 = vmatprep.subr.mxu0 %v734
    %v736 = vand.u32 %v435, 4294901760
    %v737 = vsub.f32 %v435, %v736
    %v738 = vand.u32 %v737, 4294901760
    %v739 = vsub.f32 %v737, %v738
    %v740 = vand.u32 %v739, 4294901760
    %741 = vmatpush1.msra.mxu0 %v740
    %v742 = vand.u32 %v438, 4294901760
    %v743 = vsub.f32 %v438, %v742
    %v744 = vand.u32 %v743, 4294901760
    %v745 = vsub.f32 %v743, %v744
    %v746 = vand.u32 %v745, 4294901760
    %747 = vmatprep.subr.mxu0 %v746
    %v748 = vand.u32 %v437, 4294901760
    %v749 = vsub.f32 %v437, %v748
    %v750 = vand.u32 %v749, 4294901760
    %v751 = vsub.f32 %v749, %v750
    %v752 = vand.u32 %v751, 4294901760
    %753 = vmatpush1.msra.mxu0 %v752
    %v754 = vand.u32 %v440, 4294901760
    %v755 = vsub.f32 %v440, %v754
    %v756 = vand.u32 %v755, 4294901760
    %v757 = vsub.f32 %v755, %v756
    %v758 = vand.u32 %v757, 4294901760
    %759 = vmatprep.subr.mxu0 %v758
    %v760 = vand.u32 %v439, 4294901760
    %v761 = vsub.f32 %v439, %v760
    %v762 = vand.u32 %v761, 4294901760
    %v763 = vsub.f32 %v761, %v762
    %v764 = vand.u32 %v763, 4294901760
    %765 = vmatpush1.msra.mxu0 %v764
    %v766 = vand.u32 %v442, 4294901760
    %v767 = vsub.f32 %v442, %v766
    %v768 = vand.u32 %v767, 4294901760
    %v769 = vsub.f32 %v767, %v768
    %v770 = vand.u32 %v769, 4294901760
    %771 = vmatprep.subr.mxu0 %v770
    %v772 = vand.u32 %v441, 4294901760
    %v773 = vsub.f32 %v441, %v772
    %v774 = vand.u32 %v773, 4294901760
    %v775 = vsub.f32 %v773, %v774
    %v776 = vand.u32 %v775, 4294901760
    %777 = vmatpush1.msra.mxu0 %v776
    %v778 = vand.u32 %v444, 4294901760
    %v779 = vsub.f32 %v444, %v778
    %v780 = vand.u32 %v779, 4294901760
    %v781 = vsub.f32 %v779, %v780
    %v782 = vand.u32 %v781, 4294901760
    %783 = vmatprep.subr.mxu0 %v782
    %v784 = vand.u32 %v443, 4294901760
    %v785 = vsub.f32 %v443, %v784
    %v786 = vand.u32 %v785, 4294901760
    %v787 = vsub.f32 %v785, %v786
    %v788 = vand.u32 %v787, 4294901760
    %789 = vmatpush1.msra.mxu0 %v788
    %790 = vmatprep.subr.mxu0 0.0
    %791 = vmatpush1.msra.mxu0 0.0
    %792 = vmatprep.subr.mxu0 0.0
    %793 = vmatpush1.msra.mxu0 0.0
    %794 = vmatprep.subr.mxu0 0.0
    %795 = vmatpush1.msra.mxu0 0.0
    %796 = vmatprep.subr.mxu0 0.0
    %797 = vmatpush1.msra.mxu0 0.0
    %798 = vmatprep.subr.mxu0 0.0
    %799 = vmatpush1.msra.mxu0 0.0
    %800 = vmatprep.subr.mxu0 0.0
    %801 = vmatpush1.msra.mxu0 0.0
    %802 = vmatprep.subr.mxu0 0.0
    %803 = vmatpush1.msra.mxu0 0.0
    %804 = vmatprep.subr.mxu0 0.0
    %805 = vmatpush1.msra.mxu0 0.0
    %806 = vmatprep.subr.mxu0 0.0
    %807 = vmatpush1.msra.mxu0 0.0
    %808 = vmatprep.subr.mxu0 0.0
    %809 = vmatpush1.msra.mxu0 0.0
    %810 = vmatprep.subr.mxu0 0.0
    %811 = vmatpush1.msra.mxu0 0.0
    %812 = vmatprep.subr.mxu0 0.0
    %813 = vmatpush1.msra.mxu0 0.0
    %814 = vmatprep.subr.mxu0 0.0
    %815 = vmatpush1.msra.mxu0 0.0
    %816 = vmatprep.subr.mxu0 0.0
    %817 = vmatpush1.msra.mxu0 0.0
    %818 = vmatprep.subr.mxu0 0.0
    %819 = vmatpush1.msra.mxu0 0.0
    %820 = vmatprep.subr.mxu0 0.0
    %821 = vmatpush1.msra.mxu0 0.0
    %822 = vmatprep.mubr.f32.mxu0 0.0
    %v823 = vand.u32 %v409, 4294901760
    %824 = vmatmul.mubr.f32.gmra.mrb[0].mxu0 %v823
    %v825 = vpop.f32.mrb[0].mxu0
    %v826 = vadd.f32 %v561, %v825
    %v827 = vpop.f32.mrb[0].mxu0
    %v828 = vadd.f32 %v563, %v827
    %829 = vmatprep.mubr.f32.mxu0 0.0
    %v830 = vand.u32 %v410, 4294901760
    %831 = vmatmul.mubr.f32.gmra.mrb[0].mxu0 %v830
    %v832 = vpop.f32.mrb[0].mxu0
    %v833 = vadd.f32 %v572, %v832
    %v834 = vpop.f32.mrb[0].mxu0
    %v835 = vadd.f32 %v574, %v834
    %836 = vmatprep.mubr.f32.mxu0 0.0
    %v837 = vand.u32 %v411, 4294901760
    %838 = vmatmul.mubr.f32.gmra.mrb[0].mxu0 %v837
    %v839 = vpop.f32.mrb[0].mxu0
    %v840 = vadd.f32 %v583, %v839
    %v841 = vpop.f32.mrb[0].mxu0
    %v842 = vadd.f32 %v585, %v841
    %843 = vmatprep.mubr.f32.mxu0 0.0
    %v844 = vand.u32 %v412, 4294901760
    %845 = vmatmul.mubr.f32.gmra.mrb[0].mxu0 %v844
    %v846 = vpop.f32.mrb[0].mxu0
    %v847 = vadd.f32 %v594, %v846
    %v848 = vpop.f32.mrb[0].mxu0
    %v849 = vadd.f32 %v596, %v848
    %850 = vdwg.mxu0
    %v851 = vand.u32 %v414, 4294901760
    %v852 = vsub.f32 %v414, %v851
    %853 = vmatprep.subr.mxu0 %v852
    %v854 = vand.u32 %v413, 4294901760
    %v855 = vsub.f32 %v413, %v854
    %856 = vmatpush1.msra.mxu0 %v855
    %v857 = vand.u32 %v416, 4294901760
    %v858 = vsub.f32 %v416, %v857
    %859 = vmatprep.subr.mxu0 %v858
    %v860 = vand.u32 %v415, 4294901760
    %v861 = vsub.f32 %v415, %v860
    %862 = vmatpush1.msra.mxu0 %v861
    %v863 = vand.u32 %v418, 4294901760
    %v864 = vsub.f32 %v418, %v863
    %865 = vmatprep.subr.mxu0 %v864
    %v866 = vand.u32 %v417, 4294901760
    %v867 = vsub.f32 %v417, %v866
    %868 = vmatpush1.msra.mxu0 %v867
    %v869 = vand.u32 %v420, 4294901760
    %v870 = vsub.f32 %v420, %v869
    %871 = vmatprep.subr.mxu0 %v870
    %v872 = vand.u32 %v419, 4294901760
    %v873 = vsub.f32 %v419, %v872
    %874 = vmatpush1.msra.mxu0 %v873
    %v875 = vand.u32 %v422, 4294901760
    %v876 = vsub.f32 %v422, %v875
    %877 = vmatprep.subr.mxu0 %v876
    %v878 = vand.u32 %v421, 4294901760
    %v879 = vsub.f32 %v421, %v878
    %880 = vmatpush1.msra.mxu0 %v879
    %v881 = vand.u32 %v424, 4294901760
    %v882 = vsub.f32 %v424, %v881
    %883 = vmatprep.subr.mxu0 %v882
    %v884 = vand.u32 %v423, 4294901760
    %v885 = vsub.f32 %v423, %v884
    %886 = vmatpush1.msra.mxu0 %v885
    %v887 = vand.u32 %v426, 4294901760
    %v888 = vsub.f32 %v426, %v887
    %889 = vmatprep.subr.mxu0 %v888
    %v890 = vand.u32 %v425, 4294901760
    %v891 = vsub.f32 %v425, %v890
    %892 = vmatpush1.msra.mxu0 %v891
    %v893 = vand.u32 %v428, 4294901760
    %v894 = vsub.f32 %v428, %v893
    %895 = vmatprep.subr.mxu0 %v894
    %v896 = vand.u32 %v427, 4294901760
    %v897 = vsub.f32 %v427, %v896
    %898 = vmatpush1.msra.mxu0 %v897
    %v899 = vand.u32 %v430, 4294901760
    %v900 = vsub.f32 %v430, %v899
    %901 = vmatprep.subr.mxu0 %v900
    %v902 = vand.u32 %v429, 4294901760
    %v903 = vsub.f32 %v429, %v902
    %904 = vmatpush1.msra.mxu0 %v903
    %v905 = vand.u32 %v432, 4294901760
    %v906 = vsub.f32 %v432, %v905
    %907 = vmatprep.subr.mxu0 %v906
    %v908 = vand.u32 %v431, 4294901760
    %v909 = vsub.f32 %v431, %v908
    %910 = vmatpush1.msra.mxu0 %v909
    %v911 = vand.u32 %v434, 4294901760
    %v912 = vsub.f32 %v434, %v911
    %913 = vmatprep.subr.mxu0 %v912
    %v914 = vand.u32 %v433, 4294901760
    %v915 = vsub.f32 %v433, %v914
    %916 = vmatpush1.msra.mxu0 %v915
    %v917 = vand.u32 %v436, 4294901760
    %v918 = vsub.f32 %v436, %v917
    %919 = vmatprep.subr.mxu0 %v918
    %v920 = vand.u32 %v435, 4294901760
    %v921 = vsub.f32 %v435, %v920
    %922 = vmatpush1.msra.mxu0 %v921
    %v923 = vand.u32 %v438, 4294901760
    %v924 = vsub.f32 %v438, %v923
    %925 = vmatprep.subr.mxu0 %v924
    %v926 = vand.u32 %v437, 4294901760
    %v927 = vsub.f32 %v437, %v926
    %928 = vmatpush1.msra.mxu0 %v927
    %v929 = vand.u32 %v440, 4294901760
    %v930 = vsub.f32 %v440, %v929
    %931 = vmatprep.subr.mxu0 %v930
    %v932 = vand.u32 %v439, 4294901760
    %v933 = vsub.f32 %v439, %v932
    %934 = vmatpush1.msra.mxu0 %v933
    %v935 = vand.u32 %v442, 4294901760
    %v936 = vsub.f32 %v442, %v935
    %937 = vmatprep.subr.mxu0 %v936
    %v938 = vand.u32 %v441, 4294901760
    %v939 = vsub.f32 %v441, %v938
    %940 = vmatpush1.msra.mxu0 %v939
    %v941 = vand.u32 %v444, 4294901760
    %v942 = vsub.f32 %v444, %v941
    %943 = vmatprep.subr.mxu0 %v942
    %v944 = vand.u32 %v443, 4294901760
    %v945 = vsub.f32 %v443, %v944
    %946 = vmatpush1.msra.mxu0 %v945
    %947 = vmatprep.subr.mxu0 0.0
    %948 = vmatpush1.msra.mxu0 0.0
    %949 = vmatprep.subr.mxu0 0.0
    %950 = vmatpush1.msra.mxu0 0.0
    %951 = vmatprep.subr.mxu0 0.0
    %952 = vmatpush1.msra.mxu0 0.0
    %953 = vmatprep.subr.mxu0 0.0
    %954 = vmatpush1.msra.mxu0 0.0
    %955 = vmatprep.subr.mxu0 0.0
    %956 = vmatpush1.msra.mxu0 0.0
    %957 = vmatprep.subr.mxu0 0.0
    %958 = vmatpush1.msra.mxu0 0.0
    %959 = vmatprep.subr.mxu0 0.0
    %960 = vmatpush1.msra.mxu0 0.0
    %961 = vmatprep.subr.mxu0 0.0
    %962 = vmatpush1.msra.mxu0 0.0
    %963 = vmatprep.subr.mxu0 0.0
    %964 = vmatpush1.msra.mxu0 0.0
    %965 = vmatprep.subr.mxu0 0.0
    %966 = vmatpush1.msra.mxu0 0.0
    %967 = vmatprep.subr.mxu0 0.0
    %968 = vmatpush1.msra.mxu0 0.0
    %969 = vmatprep.subr.mxu0 0.0
    %970 = vmatpush1.msra.mxu0 0.0
    %971 = vmatprep.subr.mxu0 0.0
    %972 = vmatpush1.msra.mxu0 0.0
    %973 = vmatprep.subr.mxu0 0.0
    %974 = vmatpush1.msra.mxu0 0.0
    %975 = vmatprep.subr.mxu0 0.0
    %976 = vmatpush1.msra.mxu0 0.0
    %977 = vmatprep.subr.mxu0 0.0
    %978 = vmatpush1.msra.mxu0 0.0
    %979 = vmatprep.mubr.f32.mxu0 0.0
    %v980 = vand.u32 %v409, 4294901760
    %v981 = vsub.f32 %v409, %v980
    %982 = vmatmul.mubr.f32.gmra.mrb[0].mxu0 %v981
    %v983 = vpop.f32.mrb[0].mxu0
    %v984 = vadd.f32 %v826, %v983
    %v985 = vpop.f32.mrb[0].mxu0
    %v986 = vadd.f32 %v828, %v985
    %987 = vmatprep.mubr.f32.mxu0 0.0
    %v988 = vand.u32 %v410, 4294901760
    %v989 = vsub.f32 %v410, %v988
    %990 = vmatmul.mubr.f32.gmra.mrb[0].mxu0 %v989
    %v991 = vpop.f32.mrb[0].mxu0
    %v992 = vadd.f32 %v833, %v991
    %v993 = vpop.f32.mrb[0].mxu0
    %v994 = vadd.f32 %v835, %v993
    %995 = vmatprep.mubr.f32.mxu0 0.0
    %v996 = vand.u32 %v411, 4294901760
    %v997 = vsub.f32 %v411, %v996
    %998 = vmatmul.mubr.f32.gmra.mrb[0].mxu0 %v997
    %v999 = vpop.f32.mrb[0].mxu0
    %v1000 = vadd.f32 %v840, %v999
    %v1001 = vpop.f32.mrb[0].mxu0
    %v1002 = vadd.f32 %v842, %v1001
    %1003 = vmatprep.mubr.f32.mxu0 0.0
    %v1004 = vand.u32 %v412, 4294901760
    %v1005 = vsub.f32 %v412, %v1004
    %1006 = vmatmul.mubr.f32.gmra.mrb[0].mxu0 %v1005
    %v1007 = vpop.f32.mrb[0].mxu0
    %v1008 = vadd.f32 %v847, %v1007
    %v1009 = vpop.f32.mrb[0].mxu0
    %v1010 = vadd.f32 %v849, %v1009
    %1011 = vdwg.mxu0
    %v1012 = vand.u32 %v414, 4294901760
    %1013 = vmatprep.subr.mxu0 %v1012
    %v1014 = vand.u32 %v413, 4294901760
    %1015 = vmatpush1.msra.mxu0 %v1014
    %v1016 = vand.u32 %v416, 4294901760
    %1017 = vmatprep.subr.mxu0 %v1016
    %v1018 = vand.u32 %v415, 4294901760
    %1019 = vmatpush1.msra.mxu0 %v1018
    %v1020 = vand.u32 %v418, 4294901760
    %1021 = vmatprep.subr.mxu0 %v1020
    %v1022 = vand.u32 %v417, 4294901760
    %1023 = vmatpush1.msra.mxu0 %v1022
    %v1024 = vand.u32 %v420, 4294901760
    %1025 = vmatprep.subr.mxu0 %v1024
    %v1026 = vand.u32 %v419, 4294901760
    %1027 = vmatpush1.msra.mxu0 %v1026
    %v1028 = vand.u32 %v422, 4294901760
    %1029 = vmatprep.subr.mxu0 %v1028
    %v1030 = vand.u32 %v421, 4294901760
    %1031 = vmatpush1.msra.mxu0 %v1030
    %v1032 = vand.u32 %v424, 4294901760
    %1033 = vmatprep.subr.mxu0 %v1032
    %v1034 = vand.u32 %v423, 4294901760
    %1035 = vmatpush1.msra.mxu0 %v1034
    %v1036 = vand.u32 %v426, 4294901760
    %1037 = vmatprep.subr.mxu0 %v1036
    %v1038 = vand.u32 %v425, 4294901760
    %1039 = vmatpush1.msra.mxu0 %v1038
    %v1040 = vand.u32 %v428, 4294901760
    %1041 = vmatprep.subr.mxu0 %v1040
    %v1042 = vand.u32 %v427, 4294901760
    %1043 = vmatpush1.msra.mxu0 %v1042
    %v1044 = vand.u32 %v430, 4294901760
    %1045 = vmatprep.subr.mxu0 %v1044
    %v1046 = vand.u32 %v429, 4294901760
    %1047 = vmatpush1.msra.mxu0 %v1046
    %v1048 = vand.u32 %v432, 4294901760
    %1049 = vmatprep.subr.mxu0 %v1048
    %v1050 = vand.u32 %v431, 4294901760
    %1051 = vmatpush1.msra.mxu0 %v1050
    %v1052 = vand.u32 %v434, 4294901760
    %1053 = vmatprep.subr.mxu0 %v1052
    %v1054 = vand.u32 %v433, 4294901760
    %1055 = vmatpush1.msra.mxu0 %v1054
    %v1056 = vand.u32 %v436, 4294901760
    %1057 = vmatprep.subr.mxu0 %v1056
    %v1058 = vand.u32 %v435, 4294901760
    %1059 = vmatpush1.msra.mxu0 %v1058
    %v1060 = vand.u32 %v438, 4294901760
    %1061 = vmatprep.subr.mxu0 %v1060
    %v1062 = vand.u32 %v437, 4294901760
    %1063 = vmatpush1.msra.mxu0 %v1062
    %v1064 = vand.u32 %v440, 4294901760
    %1065 = vmatprep.subr.mxu0 %v1064
    %v1066 = vand.u32 %v439, 4294901760
    %1067 = vmatpush1.msra.mxu0 %v1066
    %v1068 = vand.u32 %v442, 4294901760
    %1069 = vmatprep.subr.mxu0 %v1068
    %v1070 = vand.u32 %v441, 4294901760
    %1071 = vmatpush1.msra.mxu0 %v1070
    %v1072 = vand.u32 %v444, 4294901760
    %1073 = vmatprep.subr.mxu0 %v1072
    %v1074 = vand.u32 %v443, 4294901760
    %1075 = vmatpush1.msra.mxu0 %v1074
    %1076 = vmatprep.subr.mxu0 0.0
    %1077 = vmatpush1.msra.mxu0 0.0
    %1078 = vmatprep.subr.mxu0 0.0
    %1079 = vmatpush1.msra.mxu0 0.0
    %1080 = vmatprep.subr.mxu0 0.0
    %1081 = vmatpush1.msra.mxu0 0.0
    %1082 = vmatprep.subr.mxu0 0.0
    %1083 = vmatpush1.msra.mxu0 0.0
    %1084 = vmatprep.subr.mxu0 0.0
    %1085 = vmatpush1.msra.mxu0 0.0
    %1086 = vmatprep.subr.mxu0 0.0
    %1087 = vmatpush1.msra.mxu0 0.0
    %1088 = vmatprep.subr.mxu0 0.0
    %1089 = vmatpush1.msra.mxu0 0.0
    %1090 = vmatprep.subr.mxu0 0.0
    %1091 = vmatpush1.msra.mxu0 0.0
    %1092 = vmatprep.subr.mxu0 0.0
    %1093 = vmatpush1.msra.mxu0 0.0
    %1094 = vmatprep.subr.mxu0 0.0
    %1095 = vmatpush1.msra.mxu0 0.0
    %1096 = vmatprep.subr.mxu0 0.0
    %1097 = vmatpush1.msra.mxu0 0.0
    %1098 = vmatprep.subr.mxu0 0.0
    %1099 = vmatpush1.msra.mxu0 0.0
    %1100 = vmatprep.subr.mxu0 0.0
    %1101 = vmatpush1.msra.mxu0 0.0
    %1102 = vmatprep.subr.mxu0 0.0
    %1103 = vmatpush1.msra.mxu0 0.0
    %1104 = vmatprep.subr.mxu0 0.0
    %1105 = vmatpush1.msra.mxu0 0.0
    %1106 = vmatprep.subr.mxu0 0.0
    %1107 = vmatpush1.msra.mxu0 0.0
    %1108 = vmatprep.mubr.f32.mxu0 0.0
    %v1109 = vand.u32 %v409, 4294901760
    %v1110 = vsub.f32 %v409, %v1109
    %v1111 = vand.u32 %v1110, 4294901760
    %1112 = vmatmul.mubr.f32.gmra.mrb[0].mxu0 %v1111
    %v1113 = vpop.f32.mrb[0].mxu0
    %v1114 = vadd.f32 %v984, %v1113
    %v1115 = vpop.f32.mrb[0].mxu0
    %v1116 = vadd.f32 %v986, %v1115
    %1117 = vmatprep.mubr.f32.mxu0 0.0
    %v1118 = vand.u32 %v410, 4294901760
    %v1119 = vsub.f32 %v410, %v1118
    %v1120 = vand.u32 %v1119, 4294901760
    %1121 = vmatmul.mubr.f32.gmra.mrb[0].mxu0 %v1120
    %v1122 = vpop.f32.mrb[0].mxu0
    %v1123 = vadd.f32 %v992, %v1122
    %v1124 = vpop.f32.mrb[0].mxu0
    %v1125 = vadd.f32 %v994, %v1124
    %1126 = vmatprep.mubr.f32.mxu0 0.0
    %v1127 = vand.u32 %v411, 4294901760
    %v1128 = vsub.f32 %v411, %v1127
    %v1129 = vand.u32 %v1128, 4294901760
    %1130 = vmatmul.mubr.f32.gmra.mrb[0].mxu0 %v1129
    %v1131 = vpop.f32.mrb[0].mxu0
    %v1132 = vadd.f32 %v1000, %v1131
    %v1133 = vpop.f32.mrb[0].mxu0
    %v1134 = vadd.f32 %v1002, %v1133
    %1135 = vmatprep.mubr.f32.mxu0 0.0
    %v1136 = vand.u32 %v412, 4294901760
    %v1137 = vsub.f32 %v412, %v1136
    %v1138 = vand.u32 %v1137, 4294901760
    %1139 = vmatmul.mubr.f32.gmra.mrb[0].mxu0 %v1138
    %v1140 = vpop.f32.mrb[0].mxu0
    %v1141 = vadd.f32 %v1008, %v1140
    %v1142 = vpop.f32.mrb[0].mxu0
    %v1143 = vadd.f32 %v1010, %v1142
    %1144 = vdwg.mxu0
    %v1145 = vand.u32 %v414, 4294901760
    %v1146 = vsub.f32 %v414, %v1145
    %v1147 = vand.u32 %v1146, 4294901760
    %1148 = vmatprep.subr.mxu0 %v1147
    %v1149 = vand.u32 %v413, 4294901760
    %v1150 = vsub.f32 %v413, %v1149
    %v1151 = vand.u32 %v1150, 4294901760
    %1152 = vmatpush1.msra.mxu0 %v1151
    %v1153 = vand.u32 %v416, 4294901760
    %v1154 = vsub.f32 %v416, %v1153
    %v1155 = vand.u32 %v1154, 4294901760
    %1156 = vmatprep.subr.mxu0 %v1155
    %v1157 = vand.u32 %v415, 4294901760
    %v1158 = vsub.f32 %v415, %v1157
    %v1159 = vand.u32 %v1158, 4294901760
    %1160 = vmatpush1.msra.mxu0 %v1159
    %v1161 = vand.u32 %v418, 4294901760
    %v1162 = vsub.f32 %v418, %v1161
    %v1163 = vand.u32 %v1162, 4294901760
    %1164 = vmatprep.subr.mxu0 %v1163
    %v1165 = vand.u32 %v417, 4294901760
    %v1166 = vsub.f32 %v417, %v1165
    %v1167 = vand.u32 %v1166, 4294901760
    %1168 = vmatpush1.msra.mxu0 %v1167
    %v1169 = vand.u32 %v420, 4294901760
    %v1170 = vsub.f32 %v420, %v1169
    %v1171 = vand.u32 %v1170, 4294901760
    %1172 = vmatprep.subr.mxu0 %v1171
    %v1173 = vand.u32 %v419, 4294901760
    %v1174 = vsub.f32 %v419, %v1173
    %v1175 = vand.u32 %v1174, 4294901760
    %1176 = vmatpush1.msra.mxu0 %v1175
    %v1177 = vand.u32 %v422, 4294901760
    %v1178 = vsub.f32 %v422, %v1177
    %v1179 = vand.u32 %v1178, 4294901760
    %1180 = vmatprep.subr.mxu0 %v1179
    %v1181 = vand.u32 %v421, 4294901760
    %v1182 = vsub.f32 %v421, %v1181
    %v1183 = vand.u32 %v1182, 4294901760
    %1184 = vmatpush1.msra.mxu0 %v1183
    %v1185 = vand.u32 %v424, 4294901760
    %v1186 = vsub.f32 %v424, %v1185
    %v1187 = vand.u32 %v1186, 4294901760
    %1188 = vmatprep.subr.mxu0 %v1187
    %v1189 = vand.u32 %v423, 4294901760
    %v1190 = vsub.f32 %v423, %v1189
    %v1191 = vand.u32 %v1190, 4294901760
    %1192 = vmatpush1.msra.mxu0 %v1191
    %v1193 = vand.u32 %v426, 4294901760
    %v1194 = vsub.f32 %v426, %v1193
    %v1195 = vand.u32 %v1194, 4294901760
    %1196 = vmatprep.subr.mxu0 %v1195
    %v1197 = vand.u32 %v425, 4294901760
    %v1198 = vsub.f32 %v425, %v1197
    %v1199 = vand.u32 %v1198, 4294901760
    %1200 = vmatpush1.msra.mxu0 %v1199
    %v1201 = vand.u32 %v428, 4294901760
    %v1202 = vsub.f32 %v428, %v1201
    %v1203 = vand.u32 %v1202, 4294901760
    %1204 = vmatprep.subr.mxu0 %v1203
    %v1205 = vand.u32 %v427, 4294901760
    %v1206 = vsub.f32 %v427, %v1205
    %v1207 = vand.u32 %v1206, 4294901760
    %1208 = vmatpush1.msra.mxu0 %v1207
    %v1209 = vand.u32 %v430, 4294901760
    %v1210 = vsub.f32 %v430, %v1209
    %v1211 = vand.u32 %v1210, 4294901760
    %1212 = vmatprep.subr.mxu0 %v1211
    %v1213 = vand.u32 %v429, 4294901760
    %v1214 = vsub.f32 %v429, %v1213
    %v1215 = vand.u32 %v1214, 4294901760
    %1216 = vmatpush1.msra.mxu0 %v1215
    %v1217 = vand.u32 %v432, 4294901760
    %v1218 = vsub.f32 %v432, %v1217
    %v1219 = vand.u32 %v1218, 4294901760
    %1220 = vmatprep.subr.mxu0 %v1219
    %v1221 = vand.u32 %v431, 4294901760
    %v1222 = vsub.f32 %v431, %v1221
    %v1223 = vand.u32 %v1222, 4294901760
    %1224 = vmatpush1.msra.mxu0 %v1223
    %v1225 = vand.u32 %v434, 4294901760
    %v1226 = vsub.f32 %v434, %v1225
    %v1227 = vand.u32 %v1226, 4294901760
    %1228 = vmatprep.subr.mxu0 %v1227
    %v1229 = vand.u32 %v433, 4294901760
    %v1230 = vsub.f32 %v433, %v1229
    %v1231 = vand.u32 %v1230, 4294901760
    %1232 = vmatpush1.msra.mxu0 %v1231
    %v1233 = vand.u32 %v436, 4294901760
    %v1234 = vsub.f32 %v436, %v1233
    %v1235 = vand.u32 %v1234, 4294901760
    %1236 = vmatprep.subr.mxu0 %v1235
    %v1237 = vand.u32 %v435, 4294901760
    %v1238 = vsub.f32 %v435, %v1237
    %v1239 = vand.u32 %v1238, 4294901760
    %1240 = vmatpush1.msra.mxu0 %v1239
    %v1241 = vand.u32 %v438, 4294901760
    %v1242 = vsub.f32 %v438, %v1241
    %v1243 = vand.u32 %v1242, 4294901760
    %1244 = vmatprep.subr.mxu0 %v1243
    %v1245 = vand.u32 %v437, 4294901760
    %v1246 = vsub.f32 %v437, %v1245
    %v1247 = vand.u32 %v1246, 4294901760
    %1248 = vmatpush1.msra.mxu0 %v1247
    %v1249 = vand.u32 %v440, 4294901760
    %v1250 = vsub.f32 %v440, %v1249
    %v1251 = vand.u32 %v1250, 4294901760
    %1252 = vmatprep.subr.mxu0 %v1251
    %v1253 = vand.u32 %v439, 4294901760
    %v1254 = vsub.f32 %v439, %v1253
    %v1255 = vand.u32 %v1254, 4294901760
    %1256 = vmatpush1.msra.mxu0 %v1255
    %v1257 = vand.u32 %v442, 4294901760
    %v1258 = vsub.f32 %v442, %v1257
    %v1259 = vand.u32 %v1258, 4294901760
    %1260 = vmatprep.subr.mxu0 %v1259
    %v1261 = vand.u32 %v441, 4294901760
    %v1262 = vsub.f32 %v441, %v1261
    %v1263 = vand.u32 %v1262, 4294901760
    %1264 = vmatpush1.msra.mxu0 %v1263
    %v1265 = vand.u32 %v444, 4294901760
    %v1266 = vsub.f32 %v444, %v1265
    %v1267 = vand.u32 %v1266, 4294901760
    %1268 = vmatprep.subr.mxu0 %v1267
    %v1269 = vand.u32 %v443, 4294901760
    %v1270 = vsub.f32 %v443, %v1269
    %v1271 = vand.u32 %v1270, 4294901760
    %1272 = vmatpush1.msra.mxu0 %v1271
    %1273 = vmatprep.subr.mxu0 0.0
    %1274 = vmatpush1.msra.mxu0 0.0
    %1275 = vmatprep.subr.mxu0 0.0
    %1276 = vmatpush1.msra.mxu0 0.0
    %1277 = vmatprep.subr.mxu0 0.0
    %1278 = vmatpush1.msra.mxu0 0.0
    %1279 = vmatprep.subr.mxu0 0.0
    %1280 = vmatpush1.msra.mxu0 0.0
    %1281 = vmatprep.subr.mxu0 0.0
    %1282 = vmatpush1.msra.mxu0 0.0
    %1283 = vmatprep.subr.mxu0 0.0
    %1284 = vmatpush1.msra.mxu0 0.0
    %1285 = vmatprep.subr.mxu0 0.0
    %1286 = vmatpush1.msra.mxu0 0.0
    %1287 = vmatprep.subr.mxu0 0.0
    %1288 = vmatpush1.msra.mxu0 0.0
    %1289 = vmatprep.subr.mxu0 0.0
    %1290 = vmatpush1.msra.mxu0 0.0
    %1291 = vmatprep.subr.mxu0 0.0
    %1292 = vmatpush1.msra.mxu0 0.0
    %1293 = vmatprep.subr.mxu0 0.0
    %1294 = vmatpush1.msra.mxu0 0.0
    %1295 = vmatprep.subr.mxu0 0.0
    %1296 = vmatpush1.msra.mxu0 0.0
    %1297 = vmatprep.subr.mxu0 0.0
    %1298 = vmatpush1.msra.mxu0 0.0
    %1299 = vmatprep.subr.mxu0 0.0
    %1300 = vmatpush1.msra.mxu0 0.0
    %1301 = vmatprep.subr.mxu0 0.0
    %1302 = vmatpush1.msra.mxu0 0.0
    %1303 = vmatprep.subr.mxu0 0.0
    %1304 = vmatpush1.msra.mxu0 0.0
    %1305 = vmatprep.mubr.f32.mxu0 0.0
    %v1306 = vand.u32 %v409, 4294901760
    %1307 = vmatmul.mubr.f32.gmra.mrb[0].mxu0 %v1306
    %v1308 = vpop.f32.mrb[0].mxu0
    %v1309 = vadd.f32 %v1114, %v1308
    %v1310 = vpop.f32.mrb[0].mxu0
    %v1311 = vadd.f32 %v1116, %v1310
    %1312 = vmatprep.mubr.f32.mxu0 0.0
    %v1313 = vand.u32 %v410, 4294901760
    %1314 = vmatmul.mubr.f32.gmra.mrb[0].mxu0 %v1313
    %v1315 = vpop.f32.mrb[0].mxu0
    %v1316 = vadd.f32 %v1123, %v1315
    %v1317 = vpop.f32.mrb[0].mxu0
    %v1318 = vadd.f32 %v1125, %v1317
    %1319 = vmatprep.mubr.f32.mxu0 0.0
    %v1320 = vand.u32 %v411, 4294901760
    %1321 = vmatmul.mubr.f32.gmra.mrb[0].mxu0 %v1320
    %v1322 = vpop.f32.mrb[0].mxu0
    %v1323 = vadd.f32 %v1132, %v1322
    %v1324 = vpop.f32.mrb[0].mxu0
    %v1325 = vadd.f32 %v1134, %v1324
    %1326 = vmatprep.mubr.f32.mxu0 0.0
    %v1327 = vand.u32 %v412, 4294901760
    %1328 = vmatmul.mubr.f32.gmra.mrb[0].mxu0 %v1327
    %v1329 = vpop.f32.mrb[0].mxu0
    %v1330 = vadd.f32 %v1141, %v1329
    %v1331 = vpop.f32.mrb[0].mxu0
    %v1332 = vadd.f32 %v1143, %v1331
    %1333 = vdwg.mxu0
    %v1334 = vand.u32 %v414, 4294901760
    %1335 = vmatprep.subr.mxu0 %v1334
    %v1336 = vand.u32 %v413, 4294901760
    %1337 = vmatpush1.msra.mxu0 %v1336
    %v1338 = vand.u32 %v416, 4294901760
    %1339 = vmatprep.subr.mxu0 %v1338
    %v1340 = vand.u32 %v415, 4294901760
    %1341 = vmatpush1.msra.mxu0 %v1340
    %v1342 = vand.u32 %v418, 4294901760
    %1343 = vmatprep.subr.mxu0 %v1342
    %v1344 = vand.u32 %v417, 4294901760
    %1345 = vmatpush1.msra.mxu0 %v1344
    %v1346 = vand.u32 %v420, 4294901760
    %1347 = vmatprep.subr.mxu0 %v1346
    %v1348 = vand.u32 %v419, 4294901760
    %1349 = vmatpush1.msra.mxu0 %v1348
    %v1350 = vand.u32 %v422, 4294901760
    %1351 = vmatprep.subr.mxu0 %v1350
    %v1352 = vand.u32 %v421, 4294901760
    %1353 = vmatpush1.msra.mxu0 %v1352
    %v1354 = vand.u32 %v424, 4294901760
    %1355 = vmatprep.subr.mxu0 %v1354
    %v1356 = vand.u32 %v423, 4294901760
    %1357 = vmatpush1.msra.mxu0 %v1356
    %v1358 = vand.u32 %v426, 4294901760
    %1359 = vmatprep.subr.mxu0 %v1358
    %v1360 = vand.u32 %v425, 4294901760
    %1361 = vmatpush1.msra.mxu0 %v1360
    %v1362 = vand.u32 %v428, 4294901760
    %1363 = vmatprep.subr.mxu0 %v1362
    %v1364 = vand.u32 %v427, 4294901760
    %1365 = vmatpush1.msra.mxu0 %v1364
    %v1366 = vand.u32 %v430, 4294901760
    %1367 = vmatprep.subr.mxu0 %v1366
    %v1368 = vand.u32 %v429, 4294901760
    %1369 = vmatpush1.msra.mxu0 %v1368
    %v1370 = vand.u32 %v432, 4294901760
    %1371 = vmatprep.subr.mxu0 %v1370
    %v1372 = vand.u32 %v431, 4294901760
    %1373 = vmatpush1.msra.mxu0 %v1372
    %v1374 = vand.u32 %v434, 4294901760
    %1375 = vmatprep.subr.mxu0 %v1374
    %v1376 = vand.u32 %v433, 4294901760
    %1377 = vmatpush1.msra.mxu0 %v1376
    %v1378 = vand.u32 %v436, 4294901760
    %1379 = vmatprep.subr.mxu0 %v1378
    %v1380 = vand.u32 %v435, 4294901760
    %1381 = vmatpush1.msra.mxu0 %v1380
    %v1382 = vand.u32 %v438, 4294901760
    %1383 = vmatprep.subr.mxu0 %v1382
    %v1384 = vand.u32 %v437, 4294901760
    %1385 = vmatpush1.msra.mxu0 %v1384
    %v1386 = vand.u32 %v440, 4294901760
    %1387 = vmatprep.subr.mxu0 %v1386
    %v1388 = vand.u32 %v439, 4294901760
    %1389 = vmatpush1.msra.mxu0 %v1388
    %v1390 = vand.u32 %v442, 4294901760
    %1391 = vmatprep.subr.mxu0 %v1390
    %v1392 = vand.u32 %v441, 4294901760
    %1393 = vmatpush1.msra.mxu0 %v1392
    %v1394 = vand.u32 %v444, 4294901760
    %1395 = vmatprep.subr.mxu0 %v1394
    %v1396 = vand.u32 %v443, 4294901760
    %1397 = vmatpush1.msra.mxu0 %v1396
    %1398 = vmatprep.subr.mxu0 0.0
    %1399 = vmatpush1.msra.mxu0 0.0
    %1400 = vmatprep.subr.mxu0 0.0
    %1401 = vmatpush1.msra.mxu0 0.0
    %1402 = vmatprep.subr.mxu0 0.0
    %1403 = vmatpush1.msra.mxu0 0.0
    %1404 = vmatprep.subr.mxu0 0.0
    %1405 = vmatpush1.msra.mxu0 0.0
    %1406 = vmatprep.subr.mxu0 0.0
    %1407 = vmatpush1.msra.mxu0 0.0
    %1408 = vmatprep.subr.mxu0 0.0
    %1409 = vmatpush1.msra.mxu0 0.0
    %1410 = vmatprep.subr.mxu0 0.0
    %1411 = vmatpush1.msra.mxu0 0.0
    %1412 = vmatprep.subr.mxu0 0.0
    %1413 = vmatpush1.msra.mxu0 0.0
    %1414 = vmatprep.subr.mxu0 0.0
    %1415 = vmatpush1.msra.mxu0 0.0
    %1416 = vmatprep.subr.mxu0 0.0
    %1417 = vmatpush1.msra.mxu0 0.0
    %1418 = vmatprep.subr.mxu0 0.0
    %1419 = vmatpush1.msra.mxu0 0.0
    %1420 = vmatprep.subr.mxu0 0.0
    %1421 = vmatpush1.msra.mxu0 0.0
    %1422 = vmatprep.subr.mxu0 0.0
    %1423 = vmatpush1.msra.mxu0 0.0
    %1424 = vmatprep.subr.mxu0 0.0
    %1425 = vmatpush1.msra.mxu0 0.0
    %1426 = vmatprep.subr.mxu0 0.0
    %1427 = vmatpush1.msra.mxu0 0.0
    %1428 = vmatprep.subr.mxu0 0.0
    %1429 = vmatpush1.msra.mxu0 0.0
    %1430 = vmatprep.mubr.f32.mxu0 0.0
    %v1431 = vand.u32 %v409, 4294901760
    %1432 = vmatmul.mubr.f32.gmra.mrb[0].mxu0 %v1431
    %v1433 = vpop.f32.mrb[0].mxu0
    %v1434 = vadd.f32 %v1309, %v1433
    %v1435 = vpop.f32.mrb[0].mxu0
    %v1436 = vadd.f32 %v1311, %v1435
    %1437 = vmatprep.mubr.f32.mxu0 0.0
    %v1438 = vand.u32 %v410, 4294901760
    %1439 = vmatmul.mubr.f32.gmra.mrb[0].mxu0 %v1438
    %v1440 = vpop.f32.mrb[0].mxu0
    %v1441 = vadd.f32 %v1316, %v1440
    %v1442 = vpop.f32.mrb[0].mxu0
    %v1443 = vadd.f32 %v1318, %v1442
    %1444 = vmatprep.mubr.f32.mxu0 0.0
    %v1445 = vand.u32 %v411, 4294901760
    %1446 = vmatmul.mubr.f32.gmra.mrb[0].mxu0 %v1445
    %v1447 = vpop.f32.mrb[0].mxu0
    %v1448 = vadd.f32 %v1323, %v1447
    %v1449 = vpop.f32.mrb[0].mxu0
    %v1450 = vadd.f32 %v1325, %v1449
    %1451 = vmatprep.mubr.f32.mxu0 0.0
    %v1452 = vand.u32 %v412, 4294901760
    %1453 = vmatmul.mubr.f32.gmra.mrb[0].mxu0 %v1452
    %v1454 = vpop.f32.mrb[0].mxu0
    %v1455 = vadd.f32 %v1330, %v1454
    %v1456 = vpop.f32.mrb[0].mxu0
    %v1457 = vadd.f32 %v1332, %v1456
    %1458 = vdwg.mxu0
    %v1459 = vmul.f32 %v1434, 0.5
    %v1460 = vmul.f32 %v1436, 0.5
    %v1461 = vmul.f32 %v1441, 0.5
    %v1462 = vmul.f32 %v1443, 0.5
    %v1463 = vmul.f32 %v1448, 0.5
    %v1464 = vmul.f32 %v1450, 0.5
    %v1465 = vmul.f32 %v1455, 0.5
    %v1466 = vmul.f32 %v1457, 0.5
    %v1467 = vmul.f32 %v1434, 0.70710677
    %v1468 = vmul.f32 %v1436, 0.70710677
    %v1469 = vmul.f32 %v1441, 0.70710677
    %v1470 = vmul.f32 %v1443, 0.70710677
    %v1471 = vmul.f32 %v1448, 0.70710677
    %v1472 = vmul.f32 %v1450, 0.70710677
    %v1473 = vmul.f32 %v1455, 0.70710677
    %v1474 = vmul.f32 %v1457, 0.70710677
    %v1475 = verf.f32.pop %v1467
    %v1476 = verf.f32.pop %v1468
    %v1477 = verf.f32.pop %v1469
    %v1478 = verf.f32.pop %v1470
    %v1479 = verf.f32.pop %v1471
    %v1480 = verf.f32.pop %v1472
    %v1481 = verf.f32.pop %v1473
    %v1482 = verf.f32.pop %v1474
    %v1483 = vadd.f32 %v1475, 1.0
    %v1484 = vadd.f32 %v1476, 1.0
    %v1485 = vadd.f32 %v1477, 1.0
    %v1486 = vadd.f32 %v1478, 1.0
    %v1487 = vadd.f32 %v1479, 1.0
    %v1488 = vadd.f32 %v1480, 1.0
    %v1489 = vadd.f32 %v1481, 1.0
    %v1490 = vadd.f32 %v1482, 1.0
    %v1491 = vmul.f32 %v1459, %v1483
    %v1492 = vmul.f32 %v1460, %v1484
    %v1493 = vmul.f32 %v1461, %v1485
    %v1494 = vmul.f32 %v1462, %v1486
    %v1495 = vmul.f32 %v1463, %v1487
    %v1496 = vmul.f32 %v1464, %v1488
    %v1497 = vmul.f32 %v1465, %v1489
    %v1498 = vmul.f32 %v1466, %v1490
    %v1499 = vmul.f32 %v1491, %v1491
    %v1500 = vmul.f32 %v1492, %v1492
    %v1501 = vmul.f32 %v1493, %v1493
    %v1502 = vmul.f32 %v1494, %v1494
    %v1503 = vmul.f32 %v1495, %v1495
    %v1504 = vmul.f32 %v1496, %v1496
    %v1505 = vmul.f32 %v1497, %v1497
    %v1506 = vmul.f32 %v1498, %v1498
    %v1507 = vadd.f32 %v1499, %v1501
    %v1508 = vrot.slane %v1507, 4
    %v1509 = vadd.f32 %v1507, %v1508
    %v1510 = vrot.slane %v1509, 2
    %v1511 = vadd.f32 %v1509, %v1510
    %v1512 = vrot.slane %v1511, 1
    %v1513 = vadd.f32 %v1511, %v1512
    %v1514 = vadd.f32 %v1500, %v1502
    %v1515 = vrot.slane %v1514, 4
    %v1516 = vadd.f32 %v1514, %v1515
    %v1517 = vrot.slane %v1516, 2
    %v1518 = vadd.f32 %v1516, %v1517
    %v1519 = vrot.slane %v1518, 1
    %v1520 = vadd.f32 %v1518, %v1519
    %v1521 = vadd.f32 %v1503, %v1505
    %v1522 = vrot.slane %v1521, 4
    %v1523 = vadd.f32 %v1521, %v1522
    %v1524 = vrot.slane %v1523, 2
    %v1525 = vadd.f32 %v1523, %v1524
    %v1526 = vrot.slane %v1525, 1
    %v1527 = vadd.f32 %v1525, %v1526
    %v1528 = vadd.f32 %v1504, %v1506
    %v1529 = vrot.slane %v1528, 4
    %v1530 = vadd.f32 %v1528, %v1529
    %v1531 = vrot.slane %v1530, 2
    %v1532 = vadd.f32 %v1530, %v1531
    %v1533 = vrot.slane %v1532, 1
    %v1534 = vadd.f32 %v1532, %v1533
    %v1535 = vrsqrt.pop %v1513
    %v1536 = vmul.f32 %v1513, %v1535
    %vm1537 = vcmp.eq.f32.partialorder %v1513, inf
    %v1538 = vsel %vm1537, %v1513, %v1536
    %vm1539 = vcmp.eq.f32.partialorder %v1513, 0.0
    %v1540 = vand.u32 %v1513, 2147483648
    %v1541 = vsel %vm1539, %v1540, %v1538
    %v1542 = vrsqrt.pop %v1520
    %v1543 = vmul.f32 %v1520, %v1542
    %vm1544 = vcmp.eq.f32.partialorder %v1520, inf
    %v1545 = vsel %vm1544, %v1520, %v1543
    %vm1546 = vcmp.eq.f32.partialorder %v1520, 0.0
    %v1547 = vand.u32 %v1520, 2147483648
    %v1548 = vsel %vm1546, %v1547, %v1545
    %v1549 = vrsqrt.pop %v1527
    %v1550 = vmul.f32 %v1527, %v1549
    %vm1551 = vcmp.eq.f32.partialorder %v1527, inf
    %v1552 = vsel %vm1551, %v1527, %v1550
    %vm1553 = vcmp.eq.f32.partialorder %v1527, 0.0
    %v1554 = vand.u32 %v1527, 2147483648
    %v1555 = vsel %vm1553, %v1554, %v1552
    %v1556 = vrsqrt.pop %v1534
    %v1557 = vmul.f32 %v1534, %v1556
    %vm1558 = vcmp.eq.f32.partialorder %v1534, inf
    %v1559 = vsel %vm1558, %v1534, %v1557
    %vm1560 = vcmp.eq.f32.partialorder %v1534, 0.0
    %v1561 = vand.u32 %v1534, 2147483648
    %v1562 = vsel %vm1560, %v1561, %v1559
    %v1563 = vadd.f32 %v1541, %v1548
    %1564 = vadd.xlane.f32.xlu0 %v1563
    %v1565 = vpop.xlane.xlu0 %1564
    %v1566 = vadd.f32 %v1555, %v1562
    %1567 = vadd.xlane.f32.xlu0 %v1566
    %v1568 = vpop.xlane.xlu0 %1567
    %v1569 = vrcp.pop 256.0
    %v1570 = vmul.f32 %v1565, %v1569
    %v1571 = vmul.f32 %v1568, %v1569
    %v1572 = vadd.f32 %v1570, 1e-06
    %v1573 = vadd.f32 %v1571, 1e-06
    %v1574 = vrcp.pop %v1572
    %v1575 = vmul.f32 %v1541, %v1574
    %v1576 = vmul.f32 %v1548, %v1574
    %v1577 = vrcp.pop %v1573
    %v1578 = vmul.f32 %v1555, %v1577
    %v1579 = vmul.f32 %v1562, %v1577
    %v1580 = vld [vmem:[%s7] sm:$0x3]
    %v1581 = vmul.f32 %v1491, %v1575
    %v1582 = vmul.f32 %v1492, %v1576
    %v1583 = vmul.f32 %v1493, %v1575
    %v1584 = vmul.f32 %v1494, %v1576
    %v1585 = vmul.f32 %v1495, %v1578
    %v1586 = vmul.f32 %v1496, %v1579
    %v1587 = vmul.f32 %v1497, %v1578
    %v1588 = vmul.f32 %v1498, %v1579
    %v1590 = vlaneseq
    %v1591 = vshrl.u32 %v1590, 7
    %v1592 = vsub.s32 0, %v1591
    %v1593 = vrot.slane %v1580, %v1592
    %v1594 = vlaneseq
    %v1595 = vshrl.u32 %v1594, 7
    %v1596 = vsub.s32 1, %v1595
    %v1597 = vrot.slane %v1580, %v1596
    %v1600 = vmul.f32 %v1593, %v1581
    %v1601 = vmul.f32 %v1597, %v1582
    %v1602 = vmul.f32 %v1593, %v1583
    %v1603 = vmul.f32 %v1597, %v1584
    %v1604 = vmul.f32 %v1593, %v1585
    %v1605 = vmul.f32 %v1597, %v1586
    %v1606 = vmul.f32 %v1593, %v1587
    %v1607 = vmul.f32 %v1597, %v1588
    %v1608 = vld [vmem:[%s8] sm:$0x3]
    %v1610 = vlaneseq
    %v1611 = vshrl.u32 %v1610, 7
    %v1612 = vsub.s32 0, %v1611
    %v1613 = vrot.slane %v1608, %v1612
    %v1614 = vlaneseq
    %v1615 = vshrl.u32 %v1614, 7
    %v1616 = vsub.s32 1, %v1615
    %v1617 = vrot.slane %v1608, %v1616
    %v1620 = vadd.f32 %v1600, %v1613
    %v1621 = vadd.f32 %v1601, %v1617
    %v1622 = vadd.f32 %v1602, %v1613
    %v1623 = vadd.f32 %v1603, %v1617
    %v1624 = vadd.f32 %v1604, %v1613
    %v1625 = vadd.f32 %v1605, %v1617
    %v1626 = vadd.f32 %v1606, %v1613
    %v1627 = vadd.f32 %v1607, %v1617
    %v1628 = vadd.f32 %v1620, %v1491
    %v1629 = vadd.f32 %v1621, %v1492
    %v1630 = vadd.f32 %v1622, %v1493
    %v1631 = vadd.f32 %v1623, %v1494
    %v1632 = vadd.f32 %v1624, %v1495
    %v1633 = vadd.f32 %v1625, %v1496
    %v1634 = vadd.f32 %v1626, %v1497
    %v1635 = vadd.f32 %v1627, %v1498
    %v1636 = vld [vmem:[#allocation8] sm:$0xff]
    %v1637 = vld [vmem:[#allocation8 + $0x8] sm:$0xff]
    %v1638 = vld [vmem:[#allocation8 + $0x10] sm:$0xff]
    %v1639 = vld [vmem:[#allocation8 + $0x18] sm:$0xff]
    %v1640 = vld [vmem:[#allocation8 + $0x20] sm:$0xff]
    %v1641 = vld [vmem:[#allocation8 + $0x28] sm:$0xff]
    %v1642 = vld [vmem:[#allocation8 + $0x30] sm:$0xff]
    %v1643 = vld [vmem:[#allocation8 + $0x38] sm:$0xff]
    %v1644 = vld [vmem:[#allocation8 + $0x40] sm:$0xff]
    %v1645 = vld [vmem:[#allocation8 + $0x48] sm:$0xff]
    %v1646 = vld [vmem:[#allocation8 + $0x50] sm:$0xff]
    %v1647 = vld [vmem:[#allocation8 + $0x58] sm:$0xff]
    %v1648 = vld [vmem:[#allocation8 + $0x60] sm:$0xff]
    %v1649 = vld [vmem:[#allocation8 + $0x68] sm:$0xff]
    %v1650 = vld [vmem:[#allocation8 + $0x70] sm:$0xff]
    %v1651 = vld [vmem:[#allocation8 + $0x78] sm:$0xff]
    %v1652 = vld [vmem:[#allocation8 + $0x80] sm:$0xff]
    %v1653 = vld [vmem:[#allocation8 + $0x88] sm:$0xff]
    %v1654 = vld [vmem:[#allocation8 + $0x90] sm:$0xff]
    %v1655 = vld [vmem:[#allocation8 + $0x98] sm:$0xff]
    %v1656 = vld [vmem:[#allocation8 + $0xa0] sm:$0xff]
    %v1657 = vld [vmem:[#allocation8 + $0xa8] sm:$0xff]
    %v1658 = vld [vmem:[#allocation8 + $0xb0] sm:$0xff]
    %v1659 = vld [vmem:[#allocation8 + $0xb8] sm:$0xff]
    %v1660 = vld [vmem:[#allocation8 + $0xc0] sm:$0xff]
    %v1661 = vld [vmem:[#allocation8 + $0xc8] sm:$0xff]
    %v1662 = vld [vmem:[#allocation8 + $0xd0] sm:$0xff]
    %v1663 = vld [vmem:[#allocation8 + $0xd8] sm:$0xff]
    %v1664 = vld [vmem:[#allocation8 + $0xe0] sm:$0xff]
    %v1665 = vld [vmem:[#allocation8 + $0xe8] sm:$0xff]
    %v1666 = vld [vmem:[#allocation8 + $0xf0] sm:$0xff]
    %v1667 = vld [vmem:[#allocation8 + $0xf8] sm:$0xff]
    %v1668 = vld [vmem:[%s10] sm:$0x1]
    %v1670 = vlaneseq
    %v1671 = vshrl.u32 %v1670, 7
    %v1672 = vsub.s32 0, %v1671
    %v1673 = vrot.slane %v1668, %v1672
    %1675 = vmatprep.subr.mxu0 0.0
    %v1676 = vand.u32 %v1636, 4294901760
    %1677 = vmatpush1.msra.mxu0 %v1676
    %1678 = vmatprep.subr.mxu0 0.0
    %v1679 = vand.u32 %v1637, 4294901760
    %1680 = vmatpush1.msra.mxu0 %v1679
    %1681 = vmatprep.subr.mxu0 0.0
    %v1682 = vand.u32 %v1638, 4294901760
    %1683 = vmatpush1.msra.mxu0 %v1682
    %1684 = vmatprep.subr.mxu0 0.0
    %v1685 = vand.u32 %v1639, 4294901760
    %1686 = vmatpush1.msra.mxu0 %v1685
    %1687 = vmatprep.subr.mxu0 0.0
    %v1688 = vand.u32 %v1640, 4294901760
    %1689 = vmatpush1.msra.mxu0 %v1688
    %1690 = vmatprep.subr.mxu0 0.0
    %v1691 = vand.u32 %v1641, 4294901760
    %1692 = vmatpush1.msra.mxu0 %v1691
    %1693 = vmatprep.subr.mxu0 0.0
    %v1694 = vand.u32 %v1642, 4294901760
    %1695 = vmatpush1.msra.mxu0 %v1694
    %1696 = vmatprep.subr.mxu0 0.0
    %v1697 = vand.u32 %v1643, 4294901760
    %1698 = vmatpush1.msra.mxu0 %v1697
    %1699 = vmatprep.subr.mxu0 0.0
    %v1700 = vand.u32 %v1644, 4294901760
    %1701 = vmatpush1.msra.mxu0 %v1700
    %1702 = vmatprep.subr.mxu0 0.0
    %v1703 = vand.u32 %v1645, 4294901760
    %1704 = vmatpush1.msra.mxu0 %v1703
    %1705 = vmatprep.subr.mxu0 0.0
    %v1706 = vand.u32 %v1646, 4294901760
    %1707 = vmatpush1.msra.mxu0 %v1706
    %1708 = vmatprep.subr.mxu0 0.0
    %v1709 = vand.u32 %v1647, 4294901760
    %1710 = vmatpush1.msra.mxu0 %v1709
    %1711 = vmatprep.subr.mxu0 0.0
    %v1712 = vand.u32 %v1648, 4294901760
    %1713 = vmatpush1.msra.mxu0 %v1712
    %1714 = vmatprep.subr.mxu0 0.0
    %v1715 = vand.u32 %v1649, 4294901760
    %1716 = vmatpush1.msra.mxu0 %v1715
    %1717 = vmatprep.subr.mxu0 0.0
    %v1718 = vand.u32 %v1650, 4294901760
    %1719 = vmatpush1.msra.mxu0 %v1718
    %1720 = vmatprep.subr.mxu0 0.0
    %v1721 = vand.u32 %v1651, 4294901760
    %1722 = vmatpush1.msra.mxu0 %v1721
    %1723 = vmatprep.subr.mxu0 0.0
    %v1724 = vand.u32 %v1652, 4294901760
    %1725 = vmatpush1.msra.mxu0 %v1724
    %1726 = vmatprep.subr.mxu0 0.0
    %v1727 = vand.u32 %v1653, 4294901760
    %1728 = vmatpush1.msra.mxu0 %v1727
    %1729 = vmatprep.subr.mxu0 0.0
    %v1730 = vand.u32 %v1654, 4294901760
    %1731 = vmatpush1.msra.mxu0 %v1730
    %1732 = vmatprep.subr.mxu0 0.0
    %v1733 = vand.u32 %v1655, 4294901760
    %1734 = vmatpush1.msra.mxu0 %v1733
    %1735 = vmatprep.subr.mxu0 0.0
    %v1736 = vand.u32 %v1656, 4294901760
    %1737 = vmatpush1.msra.mxu0 %v1736
    %1738 = vmatprep.subr.mxu0 0.0
    %v1739 = vand.u32 %v1657, 4294901760
    %1740 = vmatpush1.msra.mxu0 %v1739
    %1741 = vmatprep.subr.mxu0 0.0
    %v1742 = vand.u32 %v1658, 4294901760
    %1743 = vmatpush1.msra.mxu0 %v1742
    %1744 = vmatprep.subr.mxu0 0.0
    %v1745 = vand.u32 %v1659, 4294901760
    %1746 = vmatpush1.msra.mxu0 %v1745
    %1747 = vmatprep.subr.mxu0 0.0
    %v1748 = vand.u32 %v1660, 4294901760
    %1749 = vmatpush1.msra.mxu0 %v1748
    %1750 = vmatprep.subr.mxu0 0.0
    %v1751 = vand.u32 %v1661, 4294901760
    %1752 = vmatpush1.msra.mxu0 %v1751
    %1753 = vmatprep.subr.mxu0 0.0
    %v1754 = vand.u32 %v1662, 4294901760
    %1755 = vmatpush1.msra.mxu0 %v1754
    %1756 = vmatprep.subr.mxu0 0.0
    %v1757 = vand.u32 %v1663, 4294901760
    %1758 = vmatpush1.msra.mxu0 %v1757
    %1759 = vmatprep.subr.mxu0 0.0
    %v1760 = vand.u32 %v1664, 4294901760
    %1761 = vmatpush1.msra.mxu0 %v1760
    %1762 = vmatprep.subr.mxu0 0.0
    %v1763 = vand.u32 %v1665, 4294901760
    %1764 = vmatpush1.msra.mxu0 %v1763
    %1765 = vmatprep.subr.mxu0 0.0
    %v1766 = vand.u32 %v1666, 4294901760
    %1767 = vmatpush1.msra.mxu0 %v1766
    %1768 = vmatprep.subr.mxu0 0.0
    %v1769 = vand.u32 %v1667, 4294901760
    %1770 = vmatpush1.msra.mxu0 %v1769
    %v1771 = vand.u32 %v1629, 4294901760
    %v1772 = vsub.f32 %v1629, %v1771
    %v1773 = vand.u32 %v1772, 4294901760
    %v1774 = vsub.f32 %v1772, %v1773
    %v1775 = vand.u32 %v1774, 4294901760
    %1776 = vmatprep.mubr.f32.mxu0 %v1775
    %v1777 = vand.u32 %v1628, 4294901760
    %v1778 = vsub.f32 %v1628, %v1777
    %v1779 = vand.u32 %v1778, 4294901760
    %v1780 = vsub.f32 %v1778, %v1779
    %v1781 = vand.u32 %v1780, 4294901760
    %1782 = vmatmul.mubr.f32.gmra.mrb[0].mxu0 %v1781
    %v1783 = vpop.f32.mrb[0].mxu0
    %v1784 = vadd.f32 %v1673, %v1783
    %v1785 = vpop.f32.mrb[0].mxu0
    %v1786 = vand.u32 %v1631, 4294901760
    %v1787 = vsub.f32 %v1631, %v1786
    %v1788 = vand.u32 %v1787, 4294901760
    %v1789 = vsub.f32 %v1787, %v1788
    %v1790 = vand.u32 %v1789, 4294901760
    %1791 = vmatprep.mubr.f32.mxu0 %v1790
    %v1792 = vand.u32 %v1630, 4294901760
    %v1793 = vsub.f32 %v1630, %v1792
    %v1794 = vand.u32 %v1793, 4294901760
    %v1795 = vsub.f32 %v1793, %v1794
    %v1796 = vand.u32 %v1795, 4294901760
    %1797 = vmatmul.mubr.f32.gmra.mrb[0].mxu0 %v1796
    %v1798 = vpop.f32.mrb[0].mxu0
    %v1799 = vadd.f32 %v1673, %v1798
    %v1800 = vpop.f32.mrb[0].mxu0
    %v1801 = vand.u32 %v1633, 4294901760
    %v1802 = vsub.f32 %v1633, %v1801
    %v1803 = vand.u32 %v1802, 4294901760
    %v1804 = vsub.f32 %v1802, %v1803
    %v1805 = vand.u32 %v1804, 4294901760
    %1806 = vmatprep.mubr.f32.mxu0 %v1805
    %v1807 = vand.u32 %v1632, 4294901760
    %v1808 = vsub.f32 %v1632, %v1807
    %v1809 = vand.u32 %v1808, 4294901760
    %v1810 = vsub.f32 %v1808, %v1809
    %v1811 = vand.u32 %v1810, 4294901760
    %1812 = vmatmul.mubr.f32.gmra.mrb[0].mxu0 %v1811
    %v1813 = vpop.f32.mrb[0].mxu0
    %v1814 = vadd.f32 %v1673, %v1813
    %v1815 = vpop.f32.mrb[0].mxu0
    %v1816 = vand.u32 %v1635, 4294901760
    %v1817 = vsub.f32 %v1635, %v1816
    %v1818 = vand.u32 %v1817, 4294901760
    %v1819 = vsub.f32 %v1817, %v1818
    %v1820 = vand.u32 %v1819, 4294901760
    %1821 = vmatprep.mubr.f32.mxu0 %v1820
    %v1822 = vand.u32 %v1634, 4294901760
    %v1823 = vsub.f32 %v1634, %v1822
    %v1824 = vand.u32 %v1823, 4294901760
    %v1825 = vsub.f32 %v1823, %v1824
    %v1826 = vand.u32 %v1825, 4294901760
    %1827 = vmatmul.mubr.f32.gmra.mrb[0].mxu0 %v1826
    %v1828 = vpop.f32.mrb[0].mxu0
    %v1829 = vadd.f32 %v1673, %v1828
    %v1830 = vpop.f32.mrb[0].mxu0
    %1831 = vdwg.mxu0
    %1832 = vmatprep.subr.mxu0 0.0
    %v1833 = vand.u32 %v1636, 4294901760
    %v1834 = vsub.f32 %v1636, %v1833
    %v1835 = vand.u32 %v1834, 4294901760
    %v1836 = vsub.f32 %v1834, %v1835
    %v1837 = vand.u32 %v1836, 4294901760
    %1838 = vmatpush1.msra.mxu0 %v1837
    %1839 = vmatprep.subr.mxu0 0.0
    %v1840 = vand.u32 %v1637, 4294901760
    %v1841 = vsub.f32 %v1637, %v1840
    %v1842 = vand.u32 %v1841, 4294901760
    %v1843 = vsub.f32 %v1841, %v1842
    %v1844 = vand.u32 %v1843, 4294901760
    %1845 = vmatpush1.msra.mxu0 %v1844
    %1846 = vmatprep.subr.mxu0 0.0
    %v1847 = vand.u32 %v1638, 4294901760
    %v1848 = vsub.f32 %v1638, %v1847
    %v1849 = vand.u32 %v1848, 4294901760
    %v1850 = vsub.f32 %v1848, %v1849
    %v1851 = vand.u32 %v1850, 4294901760
    %1852 = vmatpush1.msra.mxu0 %v1851
    %1853 = vmatprep.subr.mxu0 0.0
    %v1854 = vand.u32 %v1639, 4294901760
    %v1855 = vsub.f32 %v1639, %v1854
    %v1856 = vand.u32 %v1855, 4294901760
    %v1857 = vsub.f32 %v1855, %v1856
    %v1858 = vand.u32 %v1857, 4294901760
    %1859 = vmatpush1.msra.mxu0 %v1858
    %1860 = vmatprep.subr.mxu0 0.0
    %v1861 = vand.u32 %v1640, 4294901760
    %v1862 = vsub.f32 %v1640, %v1861
    %v1863 = vand.u32 %v1862, 4294901760
    %v1864 = vsub.f32 %v1862, %v1863
    %v1865 = vand.u32 %v1864, 4294901760
    %1866 = vmatpush1.msra.mxu0 %v1865
    %1867 = vmatprep.subr.mxu0 0.0
    %v1868 = vand.u32 %v1641, 4294901760
    %v1869 = vsub.f32 %v1641, %v1868
    %v1870 = vand.u32 %v1869, 4294901760
    %v1871 = vsub.f32 %v1869, %v1870
    %v1872 = vand.u32 %v1871, 4294901760
    %1873 = vmatpush1.msra.mxu0 %v1872
    %1874 = vmatprep.subr.mxu0 0.0
    %v1875 = vand.u32 %v1642, 4294901760
    %v1876 = vsub.f32 %v1642, %v1875
    %v1877 = vand.u32 %v1876, 4294901760
    %v1878 = vsub.f32 %v1876, %v1877
    %v1879 = vand.u32 %v1878, 4294901760
    %1880 = vmatpush1.msra.mxu0 %v1879
    %1881 = vmatprep.subr.mxu0 0.0
    %v1882 = vand.u32 %v1643, 4294901760
    %v1883 = vsub.f32 %v1643, %v1882
    %v1884 = vand.u32 %v1883, 4294901760
    %v1885 = vsub.f32 %v1883, %v1884
    %v1886 = vand.u32 %v1885, 4294901760
    %1887 = vmatpush1.msra.mxu0 %v1886
    %1888 = vmatprep.subr.mxu0 0.0
    %v1889 = vand.u32 %v1644, 4294901760
    %v1890 = vsub.f32 %v1644, %v1889
    %v1891 = vand.u32 %v1890, 4294901760
    %v1892 = vsub.f32 %v1890, %v1891
    %v1893 = vand.u32 %v1892, 4294901760
    %1894 = vmatpush1.msra.mxu0 %v1893
    %1895 = vmatprep.subr.mxu0 0.0
    %v1896 = vand.u32 %v1645, 4294901760
    %v1897 = vsub.f32 %v1645, %v1896
    %v1898 = vand.u32 %v1897, 4294901760
    %v1899 = vsub.f32 %v1897, %v1898
    %v1900 = vand.u32 %v1899, 4294901760
    %1901 = vmatpush1.msra.mxu0 %v1900
    %1902 = vmatprep.subr.mxu0 0.0
    %v1903 = vand.u32 %v1646, 4294901760
    %v1904 = vsub.f32 %v1646, %v1903
    %v1905 = vand.u32 %v1904, 4294901760
    %v1906 = vsub.f32 %v1904, %v1905
    %v1907 = vand.u32 %v1906, 4294901760
    %1908 = vmatpush1.msra.mxu0 %v1907
    %1909 = vmatprep.subr.mxu0 0.0
    %v1910 = vand.u32 %v1647, 4294901760
    %v1911 = vsub.f32 %v1647, %v1910
    %v1912 = vand.u32 %v1911, 4294901760
    %v1913 = vsub.f32 %v1911, %v1912
    %v1914 = vand.u32 %v1913, 4294901760
    %1915 = vmatpush1.msra.mxu0 %v1914
    %1916 = vmatprep.subr.mxu0 0.0
    %v1917 = vand.u32 %v1648, 4294901760
    %v1918 = vsub.f32 %v1648, %v1917
    %v1919 = vand.u32 %v1918, 4294901760
    %v1920 = vsub.f32 %v1918, %v1919
    %v1921 = vand.u32 %v1920, 4294901760
    %1922 = vmatpush1.msra.mxu0 %v1921
    %1923 = vmatprep.subr.mxu0 0.0
    %v1924 = vand.u32 %v1649, 4294901760
    %v1925 = vsub.f32 %v1649, %v1924
    %v1926 = vand.u32 %v1925, 4294901760
    %v1927 = vsub.f32 %v1925, %v1926
    %v1928 = vand.u32 %v1927, 4294901760
    %1929 = vmatpush1.msra.mxu0 %v1928
    %1930 = vmatprep.subr.mxu0 0.0
    %v1931 = vand.u32 %v1650, 4294901760
    %v1932 = vsub.f32 %v1650, %v1931
    %v1933 = vand.u32 %v1932, 4294901760
    %v1934 = vsub.f32 %v1932, %v1933
    %v1935 = vand.u32 %v1934, 4294901760
    %1936 = vmatpush1.msra.mxu0 %v1935
    %1937 = vmatprep.subr.mxu0 0.0
    %v1938 = vand.u32 %v1651, 4294901760
    %v1939 = vsub.f32 %v1651, %v1938
    %v1940 = vand.u32 %v1939, 4294901760
    %v1941 = vsub.f32 %v1939, %v1940
    %v1942 = vand.u32 %v1941, 4294901760
    %1943 = vmatpush1.msra.mxu0 %v1942
    %1944 = vmatprep.subr.mxu0 0.0
    %v1945 = vand.u32 %v1652, 4294901760
    %v1946 = vsub.f32 %v1652, %v1945
    %v1947 = vand.u32 %v1946, 4294901760
    %v1948 = vsub.f32 %v1946, %v1947
    %v1949 = vand.u32 %v1948, 4294901760
    %1950 = vmatpush1.msra.mxu0 %v1949
    %1951 = vmatprep.subr.mxu0 0.0
    %v1952 = vand.u32 %v1653, 4294901760
    %v1953 = vsub.f32 %v1653, %v1952
    %v1954 = vand.u32 %v1953, 4294901760
    %v1955 = vsub.f32 %v1953, %v1954
    %v1956 = vand.u32 %v1955, 4294901760
    %1957 = vmatpush1.msra.mxu0 %v1956
    %1958 = vmatprep.subr.mxu0 0.0
    %v1959 = vand.u32 %v1654, 4294901760
    %v1960 = vsub.f32 %v1654, %v1959
    %v1961 = vand.u32 %v1960, 4294901760
    %v1962 = vsub.f32 %v1960, %v1961
    %v1963 = vand.u32 %v1962, 4294901760
    %1964 = vmatpush1.msra.mxu0 %v1963
    %1965 = vmatprep.subr.mxu0 0.0
    %v1966 = vand.u32 %v1655, 4294901760
    %v1967 = vsub.f32 %v1655, %v1966
    %v1968 = vand.u32 %v1967, 4294901760
    %v1969 = vsub.f32 %v1967, %v1968
    %v1970 = vand.u32 %v1969, 4294901760
    %1971 = vmatpush1.msra.mxu0 %v1970
    %1972 = vmatprep.subr.mxu0 0.0
    %v1973 = vand.u32 %v1656, 4294901760
    %v1974 = vsub.f32 %v1656, %v1973
    %v1975 = vand.u32 %v1974, 4294901760
    %v1976 = vsub.f32 %v1974, %v1975
    %v1977 = vand.u32 %v1976, 4294901760
    %1978 = vmatpush1.msra.mxu0 %v1977
    %1979 = vmatprep.subr.mxu0 0.0
    %v1980 = vand.u32 %v1657, 4294901760
    %v1981 = vsub.f32 %v1657, %v1980
    %v1982 = vand.u32 %v1981, 4294901760
    %v1983 = vsub.f32 %v1981, %v1982
    %v1984 = vand.u32 %v1983, 4294901760
    %1985 = vmatpush1.msra.mxu0 %v1984
    %1986 = vmatprep.subr.mxu0 0.0
    %v1987 = vand.u32 %v1658, 4294901760
    %v1988 = vsub.f32 %v1658, %v1987
    %v1989 = vand.u32 %v1988, 4294901760
    %v1990 = vsub.f32 %v1988, %v1989
    %v1991 = vand.u32 %v1990, 4294901760
    %1992 = vmatpush1.msra.mxu0 %v1991
    %1993 = vmatprep.subr.mxu0 0.0
    %v1994 = vand.u32 %v1659, 4294901760
    %v1995 = vsub.f32 %v1659, %v1994
    %v1996 = vand.u32 %v1995, 4294901760
    %v1997 = vsub.f32 %v1995, %v1996
    %v1998 = vand.u32 %v1997, 4294901760
    %1999 = vmatpush1.msra.mxu0 %v1998
    %2000 = vmatprep.subr.mxu0 0.0
    %v2001 = vand.u32 %v1660, 4294901760
    %v2002 = vsub.f32 %v1660, %v2001
    %v2003 = vand.u32 %v2002, 4294901760
    %v2004 = vsub.f32 %v2002, %v2003
    %v2005 = vand.u32 %v2004, 4294901760
    %2006 = vmatpush1.msra.mxu0 %v2005
    %2007 = vmatprep.subr.mxu0 0.0
    %v2008 = vand.u32 %v1661, 4294901760
    %v2009 = vsub.f32 %v1661, %v2008
    %v2010 = vand.u32 %v2009, 4294901760
    %v2011 = vsub.f32 %v2009, %v2010
    %v2012 = vand.u32 %v2011, 4294901760
    %2013 = vmatpush1.msra.mxu0 %v2012
    %2014 = vmatprep.subr.mxu0 0.0
    %v2015 = vand.u32 %v1662, 4294901760
    %v2016 = vsub.f32 %v1662, %v2015
    %v2017 = vand.u32 %v2016, 4294901760
    %v2018 = vsub.f32 %v2016, %v2017
    %v2019 = vand.u32 %v2018, 4294901760
    %2020 = vmatpush1.msra.mxu0 %v2019
    %2021 = vmatprep.subr.mxu0 0.0
    %v2022 = vand.u32 %v1663, 4294901760
    %v2023 = vsub.f32 %v1663, %v2022
    %v2024 = vand.u32 %v2023, 4294901760
    %v2025 = vsub.f32 %v2023, %v2024
    %v2026 = vand.u32 %v2025, 4294901760
    %2027 = vmatpush1.msra.mxu0 %v2026
    %2028 = vmatprep.subr.mxu0 0.0
    %v2029 = vand.u32 %v1664, 4294901760
    %v2030 = vsub.f32 %v1664, %v2029
    %v2031 = vand.u32 %v2030, 4294901760
    %v2032 = vsub.f32 %v2030, %v2031
    %v2033 = vand.u32 %v2032, 4294901760
    %2034 = vmatpush1.msra.mxu0 %v2033
    %2035 = vmatprep.subr.mxu0 0.0
    %v2036 = vand.u32 %v1665, 4294901760
    %v2037 = vsub.f32 %v1665, %v2036
    %v2038 = vand.u32 %v2037, 4294901760
    %v2039 = vsub.f32 %v2037, %v2038
    %v2040 = vand.u32 %v2039, 4294901760
    %2041 = vmatpush1.msra.mxu0 %v2040
    %2042 = vmatprep.subr.mxu0 0.0
    %v2043 = vand.u32 %v1666, 4294901760
    %v2044 = vsub.f32 %v1666, %v2043
    %v2045 = vand.u32 %v2044, 4294901760
    %v2046 = vsub.f32 %v2044, %v2045
    %v2047 = vand.u32 %v2046, 4294901760
    %2048 = vmatpush1.msra.mxu0 %v2047
    %2049 = vmatprep.subr.mxu0 0.0
    %v2050 = vand.u32 %v1667, 4294901760
    %v2051 = vsub.f32 %v1667, %v2050
    %v2052 = vand.u32 %v2051, 4294901760
    %v2053 = vsub.f32 %v2051, %v2052
    %v2054 = vand.u32 %v2053, 4294901760
    %2055 = vmatpush1.msra.mxu0 %v2054
    %v2056 = vand.u32 %v1629, 4294901760
    %2057 = vmatprep.mubr.f32.mxu0 %v2056
    %v2058 = vand.u32 %v1628, 4294901760
    %2059 = vmatmul.mubr.f32.gmra.mrb[0].mxu0 %v2058
    %v2060 = vpop.f32.mrb[0].mxu0
    %v2061 = vadd.f32 %v1784, %v2060
    %v2062 = vpop.f32.mrb[0].mxu0
    %v2063 = vand.u32 %v1631, 4294901760
    %2064 = vmatprep.mubr.f32.mxu0 %v2063
    %v2065 = vand.u32 %v1630, 4294901760
    %2066 = vmatmul.mubr.f32.gmra.mrb[0].mxu0 %v2065
    %v2067 = vpop.f32.mrb[0].mxu0
    %v2068 = vadd.f32 %v1799, %v2067
    %v2069 = vpop.f32.mrb[0].mxu0
    %v2070 = vand.u32 %v1633, 4294901760
    %2071 = vmatprep.mubr.f32.mxu0 %v2070
    %v2072 = vand.u32 %v1632, 4294901760
    %2073 = vmatmul.mubr.f32.gmra.mrb[0].mxu0 %v2072
    %v2074 = vpop.f32.mrb[0].mxu0
    %v2075 = vadd.f32 %v1814, %v2074
    %v2076 = vpop.f32.mrb[0].mxu0
    %v2077 = vand.u32 %v1635, 4294901760
    %2078 = vmatprep.mubr.f32.mxu0 %v2077
    %v2079 = vand.u32 %v1634, 4294901760
    %2080 = vmatmul.mubr.f32.gmra.mrb[0].mxu0 %v2079
    %v2081 = vpop.f32.mrb[0].mxu0
    %v2082 = vadd.f32 %v1829, %v2081
    %v2083 = vpop.f32.mrb[0].mxu0
    %2084 = vdwg.mxu0
    %2085 = vmatprep.subr.mxu0 0.0
    %v2086 = vand.u32 %v1636, 4294901760
    %v2087 = vsub.f32 %v1636, %v2086
    %2088 = vmatpush1.msra.mxu0 %v2087
    %2089 = vmatprep.subr.mxu0 0.0
    %v2090 = vand.u32 %v1637, 4294901760
    %v2091 = vsub.f32 %v1637, %v2090
    %2092 = vmatpush1.msra.mxu0 %v2091
    %2093 = vmatprep.subr.mxu0 0.0
    %v2094 = vand.u32 %v1638, 4294901760
    %v2095 = vsub.f32 %v1638, %v2094
    %2096 = vmatpush1.msra.mxu0 %v2095
    %2097 = vmatprep.subr.mxu0 0.0
    %v2098 = vand.u32 %v1639, 4294901760
    %v2099 = vsub.f32 %v1639, %v2098
    %2100 = vmatpush1.msra.mxu0 %v2099
    %2101 = vmatprep.subr.mxu0 0.0
    %v2102 = vand.u32 %v1640, 4294901760
    %v2103 = vsub.f32 %v1640, %v2102
    %2104 = vmatpush1.msra.mxu0 %v2103
    %2105 = vmatprep.subr.mxu0 0.0
    %v2106 = vand.u32 %v1641, 4294901760
    %v2107 = vsub.f32 %v1641, %v2106
    %2108 = vmatpush1.msra.mxu0 %v2107
    %2109 = vmatprep.subr.mxu0 0.0
    %v2110 = vand.u32 %v1642, 4294901760
    %v2111 = vsub.f32 %v1642, %v2110
    %2112 = vmatpush1.msra.mxu0 %v2111
    %2113 = vmatprep.subr.mxu0 0.0
    %v2114 = vand.u32 %v1643, 4294901760
    %v2115 = vsub.f32 %v1643, %v2114
    %2116 = vmatpush1.msra.mxu0 %v2115
    %2117 = vmatprep.subr.mxu0 0.0
    %v2118 = vand.u32 %v1644, 4294901760
    %v2119 = vsub.f32 %v1644, %v2118
    %2120 = vmatpush1.msra.mxu0 %v2119
    %2121 = vmatprep.subr.mxu0 0.0
    %v2122 = vand.u32 %v1645, 4294901760
    %v2123 = vsub.f32 %v1645, %v2122
    %2124 = vmatpush1.msra.mxu0 %v2123
    %2125 = vmatprep.subr.mxu0 0.0
    %v2126 = vand.u32 %v1646, 4294901760
    %v2127 = vsub.f32 %v1646, %v2126
    %2128 = vmatpush1.msra.mxu0 %v2127
    %2129 = vmatprep.subr.mxu0 0.0
    %v2130 = vand.u32 %v1647, 4294901760
    %v2131 = vsub.f32 %v1647, %v2130
    %2132 = vmatpush1.msra.mxu0 %v2131
    %2133 = vmatprep.subr.mxu0 0.0
    %v2134 = vand.u32 %v1648, 4294901760
    %v2135 = vsub.f32 %v1648, %v2134
    %2136 = vmatpush1.msra.mxu0 %v2135
    %2137 = vmatprep.subr.mxu0 0.0
    %v2138 = vand.u32 %v1649, 4294901760
    %v2139 = vsub.f32 %v1649, %v2138
    %2140 = vmatpush1.msra.mxu0 %v2139
    %2141 = vmatprep.subr.mxu0 0.0
    %v2142 = vand.u32 %v1650, 4294901760
    %v2143 = vsub.f32 %v1650, %v2142
    %2144 = vmatpush1.msra.mxu0 %v2143
    %2145 = vmatprep.subr.mxu0 0.0
    %v2146 = vand.u32 %v1651, 4294901760
    %v2147 = vsub.f32 %v1651, %v2146
    %2148 = vmatpush1.msra.mxu0 %v2147
    %2149 = vmatprep.subr.mxu0 0.0
    %v2150 = vand.u32 %v1652, 4294901760
    %v2151 = vsub.f32 %v1652, %v2150
    %2152 = vmatpush1.msra.mxu0 %v2151
    %2153 = vmatprep.subr.mxu0 0.0
    %v2154 = vand.u32 %v1653, 4294901760
    %v2155 = vsub.f32 %v1653, %v2154
    %2156 = vmatpush1.msra.mxu0 %v2155
    %2157 = vmatprep.subr.mxu0 0.0
    %v2158 = vand.u32 %v1654, 4294901760
    %v2159 = vsub.f32 %v1654, %v2158
    %2160 = vmatpush1.msra.mxu0 %v2159
    %2161 = vmatprep.subr.mxu0 0.0
    %v2162 = vand.u32 %v1655, 4294901760
    %v2163 = vsub.f32 %v1655, %v2162
    %2164 = vmatpush1.msra.mxu0 %v2163
    %2165 = vmatprep.subr.mxu0 0.0
    %v2166 = vand.u32 %v1656, 4294901760
    %v2167 = vsub.f32 %v1656, %v2166
    %2168 = vmatpush1.msra.mxu0 %v2167
    %2169 = vmatprep.subr.mxu0 0.0
    %v2170 = vand.u32 %v1657, 4294901760
    %v2171 = vsub.f32 %v1657, %v2170
    %2172 = vmatpush1.msra.mxu0 %v2171
    %2173 = vmatprep.subr.mxu0 0.0
    %v2174 = vand.u32 %v1658, 4294901760
    %v2175 = vsub.f32 %v1658, %v2174
    %2176 = vmatpush1.msra.mxu0 %v2175
    %2177 = vmatprep.subr.mxu0 0.0
    %v2178 = vand.u32 %v1659, 4294901760
    %v2179 = vsub.f32 %v1659, %v2178
    %2180 = vmatpush1.msra.mxu0 %v2179
    %2181 = vmatprep.subr.mxu0 0.0
    %v2182 = vand.u32 %v1660, 4294901760
    %v2183 = vsub.f32 %v1660, %v2182
    %2184 = vmatpush1.msra.mxu0 %v2183
    %2185 = vmatprep.subr.mxu0 0.0
    %v2186 = vand.u32 %v1661, 4294901760
    %v2187 = vsub.f32 %v1661, %v2186
    %2188 = vmatpush1.msra.mxu0 %v2187
    %2189 = vmatprep.subr.mxu0 0.0
    %v2190 = vand.u32 %v1662, 4294901760
    %v2191 = vsub.f32 %v1662, %v2190
    %2192 = vmatpush1.msra.mxu0 %v2191
    %2193 = vmatprep.subr.mxu0 0.0
    %v2194 = vand.u32 %v1663, 4294901760
    %v2195 = vsub.f32 %v1663, %v2194
    %2196 = vmatpush1.msra.mxu0 %v2195
    %2197 = vmatprep.subr.mxu0 0.0
    %v2198 = vand.u32 %v1664, 4294901760
    %v2199 = vsub.f32 %v1664, %v2198
    %2200 = vmatpush1.msra.mxu0 %v2199
    %2201 = vmatprep.subr.mxu0 0.0
    %v2202 = vand.u32 %v1665, 4294901760
    %v2203 = vsub.f32 %v1665, %v2202
    %2204 = vmatpush1.msra.mxu0 %v2203
    %2205 = vmatprep.subr.mxu0 0.0
    %v2206 = vand.u32 %v1666, 4294901760
    %v2207 = vsub.f32 %v1666, %v2206
    %2208 = vmatpush1.msra.mxu0 %v2207
    %2209 = vmatprep.subr.mxu0 0.0
    %v2210 = vand.u32 %v1667, 4294901760
    %v2211 = vsub.f32 %v1667, %v2210
    %2212 = vmatpush1.msra.mxu0 %v2211
    %v2213 = vand.u32 %v1629, 4294901760
    %v2214 = vsub.f32 %v1629, %v2213
    %2215 = vmatprep.mubr.f32.mxu0 %v2214
    %v2216 = vand.u32 %v1628, 4294901760
    %v2217 = vsub.f32 %v1628, %v2216
    %2218 = vmatmul.mubr.f32.gmra.mrb[0].mxu0 %v2217
    %v2219 = vpop.f32.mrb[0].mxu0
    %v2220 = vadd.f32 %v2061, %v2219
    %v2221 = vpop.f32.mrb[0].mxu0
    %v2222 = vand.u32 %v1631, 4294901760
    %v2223 = vsub.f32 %v1631, %v2222
    %2224 = vmatprep.mubr.f32.mxu0 %v2223
    %v2225 = vand.u32 %v1630, 4294901760
    %v2226 = vsub.f32 %v1630, %v2225
    %2227 = vmatmul.mubr.f32.gmra.mrb[0].mxu0 %v2226
    %v2228 = vpop.f32.mrb[0].mxu0
    %v2229 = vadd.f32 %v2068, %v2228
    %v2230 = vpop.f32.mrb[0].mxu0
    %v2231 = vand.u32 %v1633, 4294901760
    %v2232 = vsub.f32 %v1633, %v2231
    %2233 = vmatprep.mubr.f32.mxu0 %v2232
    %v2234 = vand.u32 %v1632, 4294901760
    %v2235 = vsub.f32 %v1632, %v2234
    %2236 = vmatmul.mubr.f32.gmra.mrb[0].mxu0 %v2235
    %v2237 = vpop.f32.mrb[0].mxu0
    %v2238 = vadd.f32 %v2075, %v2237
    %v2239 = vpop.f32.mrb[0].mxu0
    %v2240 = vand.u32 %v1635, 4294901760
    %v2241 = vsub.f32 %v1635, %v2240
    %2242 = vmatprep.mubr.f32.mxu0 %v2241
    %v2243 = vand.u32 %v1634, 4294901760
    %v2244 = vsub.f32 %v1634, %v2243
    %2245 = vmatmul.mubr.f32.gmra.mrb[0].mxu0 %v2244
    %v2246 = vpop.f32.mrb[0].mxu0
    %v2247 = vadd.f32 %v2082, %v2246
    %v2248 = vpop.f32.mrb[0].mxu0
    %2249 = vdwg.mxu0
    %2250 = vmatprep.subr.mxu0 0.0
    %v2251 = vand.u32 %v1636, 4294901760
    %2252 = vmatpush1.msra.mxu0 %v2251
    %2253 = vmatprep.subr.mxu0 0.0
    %v2254 = vand.u32 %v1637, 4294901760
    %2255 = vmatpush1.msra.mxu0 %v2254
    %2256 = vmatprep.subr.mxu0 0.0
    %v2257 = vand.u32 %v1638, 4294901760
    %2258 = vmatpush1.msra.mxu0 %v2257
    %2259 = vmatprep.subr.mxu0 0.0
    %v2260 = vand.u32 %v1639, 4294901760
    %2261 = vmatpush1.msra.mxu0 %v2260
    %2262 = vmatprep.subr.mxu0 0.0
    %v2263 = vand.u32 %v1640, 4294901760
    %2264 = vmatpush1.msra.mxu0 %v2263
    %2265 = vmatprep.subr.mxu0 0.0
    %v2266 = vand.u32 %v1641, 4294901760
    %2267 = vmatpush1.msra.mxu0 %v2266
    %2268 = vmatprep.subr.mxu0 0.0
    %v2269 = vand.u32 %v1642, 4294901760
    %2270 = vmatpush1.msra.mxu0 %v2269
    %2271 = vmatprep.subr.mxu0 0.0
    %v2272 = vand.u32 %v1643, 4294901760
    %2273 = vmatpush1.msra.mxu0 %v2272
    %2274 = vmatprep.subr.mxu0 0.0
    %v2275 = vand.u32 %v1644, 4294901760
    %2276 = vmatpush1.msra.mxu0 %v2275
    %2277 = vmatprep.subr.mxu0 0.0
    %v2278 = vand.u32 %v1645, 4294901760
    %2279 = vmatpush1.msra.mxu0 %v2278
    %2280 = vmatprep.subr.mxu0 0.0
    %v2281 = vand.u32 %v1646, 4294901760
    %2282 = vmatpush1.msra.mxu0 %v2281
    %2283 = vmatprep.subr.mxu0 0.0
    %v2284 = vand.u32 %v1647, 4294901760
    %2285 = vmatpush1.msra.mxu0 %v2284
    %2286 = vmatprep.subr.mxu0 0.0
    %v2287 = vand.u32 %v1648, 4294901760
    %2288 = vmatpush1.msra.mxu0 %v2287
    %2289 = vmatprep.subr.mxu0 0.0
    %v2290 = vand.u32 %v1649, 4294901760
    %2291 = vmatpush1.msra.mxu0 %v2290
    %2292 = vmatprep.subr.mxu0 0.0
    %v2293 = vand.u32 %v1650, 4294901760
    %2294 = vmatpush1.msra.mxu0 %v2293
    %2295 = vmatprep.subr.mxu0 0.0
    %v2296 = vand.u32 %v1651, 4294901760
    %2297 = vmatpush1.msra.mxu0 %v2296
    %2298 = vmatprep.subr.mxu0 0.0
    %v2299 = vand.u32 %v1652, 4294901760
    %2300 = vmatpush1.msra.mxu0 %v2299
    %2301 = vmatprep.subr.mxu0 0.0
    %v2302 = vand.u32 %v1653, 4294901760
    %2303 = vmatpush1.msra.mxu0 %v2302
    %2304 = vmatprep.subr.mxu0 0.0
    %v2305 = vand.u32 %v1654, 4294901760
    %2306 = vmatpush1.msra.mxu0 %v2305
    %2307 = vmatprep.subr.mxu0 0.0
    %v2308 = vand.u32 %v1655, 4294901760
    %2309 = vmatpush1.msra.mxu0 %v2308
    %2310 = vmatprep.subr.mxu0 0.0
    %v2311 = vand.u32 %v1656, 4294901760
    %2312 = vmatpush1.msra.mxu0 %v2311
    %2313 = vmatprep.subr.mxu0 0.0
    %v2314 = vand.u32 %v1657, 4294901760
    %2315 = vmatpush1.msra.mxu0 %v2314
    %2316 = vmatprep.subr.mxu0 0.0
    %v2317 = vand.u32 %v1658, 4294901760
    %2318 = vmatpush1.msra.mxu0 %v2317
    %2319 = vmatprep.subr.mxu0 0.0
    %v2320 = vand.u32 %v1659, 4294901760
    %2321 = vmatpush1.msra.mxu0 %v2320
    %2322 = vmatprep.subr.mxu0 0.0
    %v2323 = vand.u32 %v1660, 4294901760
    %2324 = vmatpush1.msra.mxu0 %v2323
    %2325 = vmatprep.subr.mxu0 0.0
    %v2326 = vand.u32 %v1661, 4294901760
    %2327 = vmatpush1.msra.mxu0 %v2326
    %2328 = vmatprep.subr.mxu0 0.0
    %v2329 = vand.u32 %v1662, 4294901760
    %2330 = vmatpush1.msra.mxu0 %v2329
    %2331 = vmatprep.subr.mxu0 0.0
    %v2332 = vand.u32 %v1663, 4294901760
    %2333 = vmatpush1.msra.mxu0 %v2332
    %2334 = vmatprep.subr.mxu0 0.0
    %v2335 = vand.u32 %v1664, 4294901760
    %2336 = vmatpush1.msra.mxu0 %v2335
    %2337 = vmatprep.subr.mxu0 0.0
    %v2338 = vand.u32 %v1665, 4294901760
    %2339 = vmatpush1.msra.mxu0 %v2338
    %2340 = vmatprep.subr.mxu0 0.0
    %v2341 = vand.u32 %v1666, 4294901760
    %2342 = vmatpush1.msra.mxu0 %v2341
    %2343 = vmatprep.subr.mxu0 0.0
    %v2344 = vand.u32 %v1667, 4294901760
    %2345 = vmatpush1.msra.mxu0 %v2344
    %v2346 = vand.u32 %v1629, 4294901760
    %v2347 = vsub.f32 %v1629, %v2346
    %v2348 = vand.u32 %v2347, 4294901760
    %2349 = vmatprep.mubr.f32.mxu0 %v2348
    %v2350 = vand.u32 %v1628, 4294901760
    %v2351 = vsub.f32 %v1628, %v2350
    %v2352 = vand.u32 %v2351, 4294901760
    %2353 = vmatmul.mubr.f32.gmra.mrb[0].mxu0 %v2352
    %v2354 = vpop.f32.mrb[0].mxu0
    %v2355 = vadd.f32 %v2220, %v2354
    %v2356 = vpop.f32.mrb[0].mxu0
    %v2357 = vand.u32 %v1631, 4294901760
    %v2358 = vsub.f32 %v1631, %v2357
    %v2359 = vand.u32 %v2358, 4294901760
    %2360 = vmatprep.mubr.f32.mxu0 %v2359
    %v2361 = vand.u32 %v1630, 4294901760
    %v2362 = vsub.f32 %v1630, %v2361
    %v2363 = vand.u32 %v2362, 4294901760
    %2364 = vmatmul.mubr.f32.gmra.mrb[0].mxu0 %v2363
    %v2365 = vpop.f32.mrb[0].mxu0
    %v2366 = vadd.f32 %v2229, %v2365
    %v2367 = vpop.f32.mrb[0].mxu0
    %v2368 = vand.u32 %v1633, 4294901760
    %v2369 = vsub.f32 %v1633, %v2368
    %v2370 = vand.u32 %v2369, 4294901760
    %2371 = vmatprep.mubr.f32.mxu0 %v2370
    %v2372 = vand.u32 %v1632, 4294901760
    %v2373 = vsub.f32 %v1632, %v2372
    %v2374 = vand.u32 %v2373, 4294901760
    %2375 = vmatmul.mubr.f32.gmra.mrb[0].mxu0 %v2374
    %v2376 = vpop.f32.mrb[0].mxu0
    %v2377 = vadd.f32 %v2238, %v2376
    %v2378 = vpop.f32.mrb[0].mxu0
    %v2379 = vand.u32 %v1635, 4294901760
    %v2380 = vsub.f32 %v1635, %v2379
    %v2381 = vand.u32 %v2380, 4294901760
    %2382 = vmatprep.mubr.f32.mxu0 %v2381
    %v2383 = vand.u32 %v1634, 4294901760
    %v2384 = vsub.f32 %v1634, %v2383
    %v2385 = vand.u32 %v2384, 4294901760
    %2386 = vmatmul.mubr.f32.gmra.mrb[0].mxu0 %v2385
    %v2387 = vpop.f32.mrb[0].mxu0
    %v2388 = vadd.f32 %v2247, %v2387
    %v2389 = vpop.f32.mrb[0].mxu0
    %2390 = vdwg.mxu0
    %2391 = vmatprep.subr.mxu0 0.0
    %v2392 = vand.u32 %v1636, 4294901760
    %v2393 = vsub.f32 %v1636, %v2392
    %v2394 = vand.u32 %v2393, 4294901760
    %2395 = vmatpush1.msra.mxu0 %v2394
    %2396 = vmatprep.subr.mxu0 0.0
    %v2397 = vand.u32 %v1637, 4294901760
    %v2398 = vsub.f32 %v1637, %v2397
    %v2399 = vand.u32 %v2398, 4294901760
    %2400 = vmatpush1.msra.mxu0 %v2399
    %2401 = vmatprep.subr.mxu0 0.0
    %v2402 = vand.u32 %v1638, 4294901760
    %v2403 = vsub.f32 %v1638, %v2402
    %v2404 = vand.u32 %v2403, 4294901760
    %2405 = vmatpush1.msra.mxu0 %v2404
    %2406 = vmatprep.subr.mxu0 0.0
    %v2407 = vand.u32 %v1639, 4294901760
    %v2408 = vsub.f32 %v1639, %v2407
    %v2409 = vand.u32 %v2408, 4294901760
    %2410 = vmatpush1.msra.mxu0 %v2409
    %2411 = vmatprep.subr.mxu0 0.0
    %v2412 = vand.u32 %v1640, 4294901760
    %v2413 = vsub.f32 %v1640, %v2412
    %v2414 = vand.u32 %v2413, 4294901760
    %2415 = vmatpush1.msra.mxu0 %v2414
    %2416 = vmatprep.subr.mxu0 0.0
    %v2417 = vand.u32 %v1641, 4294901760
    %v2418 = vsub.f32 %v1641, %v2417
    %v2419 = vand.u32 %v2418, 4294901760
    %2420 = vmatpush1.msra.mxu0 %v2419
    %2421 = vmatprep.subr.mxu0 0.0
    %v2422 = vand.u32 %v1642, 4294901760
    %v2423 = vsub.f32 %v1642, %v2422
    %v2424 = vand.u32 %v2423, 4294901760
    %2425 = vmatpush1.msra.mxu0 %v2424
    %2426 = vmatprep.subr.mxu0 0.0
    %v2427 = vand.u32 %v1643, 4294901760
    %v2428 = vsub.f32 %v1643, %v2427
    %v2429 = vand.u32 %v2428, 4294901760
    %2430 = vmatpush1.msra.mxu0 %v2429
    %2431 = vmatprep.subr.mxu0 0.0
    %v2432 = vand.u32 %v1644, 4294901760
    %v2433 = vsub.f32 %v1644, %v2432
    %v2434 = vand.u32 %v2433, 4294901760
    %2435 = vmatpush1.msra.mxu0 %v2434
    %2436 = vmatprep.subr.mxu0 0.0
    %v2437 = vand.u32 %v1645, 4294901760
    %v2438 = vsub.f32 %v1645, %v2437
    %v2439 = vand.u32 %v2438, 4294901760
    %2440 = vmatpush1.msra.mxu0 %v2439
    %2441 = vmatprep.subr.mxu0 0.0
    %v2442 = vand.u32 %v1646, 4294901760
    %v2443 = vsub.f32 %v1646, %v2442
    %v2444 = vand.u32 %v2443, 4294901760
    %2445 = vmatpush1.msra.mxu0 %v2444
    %2446 = vmatprep.subr.mxu0 0.0
    %v2447 = vand.u32 %v1647, 4294901760
    %v2448 = vsub.f32 %v1647, %v2447
    %v2449 = vand.u32 %v2448, 4294901760
    %2450 = vmatpush1.msra.mxu0 %v2449
    %2451 = vmatprep.subr.mxu0 0.0
    %v2452 = vand.u32 %v1648, 4294901760
    %v2453 = vsub.f32 %v1648, %v2452
    %v2454 = vand.u32 %v2453, 4294901760
    %2455 = vmatpush1.msra.mxu0 %v2454
    %2456 = vmatprep.subr.mxu0 0.0
    %v2457 = vand.u32 %v1649, 4294901760
    %v2458 = vsub.f32 %v1649, %v2457
    %v2459 = vand.u32 %v2458, 4294901760
    %2460 = vmatpush1.msra.mxu0 %v2459
    %2461 = vmatprep.subr.mxu0 0.0
    %v2462 = vand.u32 %v1650, 4294901760
    %v2463 = vsub.f32 %v1650, %v2462
    %v2464 = vand.u32 %v2463, 4294901760
    %2465 = vmatpush1.msra.mxu0 %v2464
    %2466 = vmatprep.subr.mxu0 0.0
    %v2467 = vand.u32 %v1651, 4294901760
    %v2468 = vsub.f32 %v1651, %v2467
    %v2469 = vand.u32 %v2468, 4294901760
    %2470 = vmatpush1.msra.mxu0 %v2469
    %2471 = vmatprep.subr.mxu0 0.0
    %v2472 = vand.u32 %v1652, 4294901760
    %v2473 = vsub.f32 %v1652, %v2472
    %v2474 = vand.u32 %v2473, 4294901760
    %2475 = vmatpush1.msra.mxu0 %v2474
    %2476 = vmatprep.subr.mxu0 0.0
    %v2477 = vand.u32 %v1653, 4294901760
    %v2478 = vsub.f32 %v1653, %v2477
    %v2479 = vand.u32 %v2478, 4294901760
    %2480 = vmatpush1.msra.mxu0 %v2479
    %2481 = vmatprep.subr.mxu0 0.0
    %v2482 = vand.u32 %v1654, 4294901760
    %v2483 = vsub.f32 %v1654, %v2482
    %v2484 = vand.u32 %v2483, 4294901760
    %2485 = vmatpush1.msra.mxu0 %v2484
    %2486 = vmatprep.subr.mxu0 0.0
    %v2487 = vand.u32 %v1655, 4294901760
    %v2488 = vsub.f32 %v1655, %v2487
    %v2489 = vand.u32 %v2488, 4294901760
    %2490 = vmatpush1.msra.mxu0 %v2489
    %2491 = vmatprep.subr.mxu0 0.0
    %v2492 = vand.u32 %v1656, 4294901760
    %v2493 = vsub.f32 %v1656, %v2492
    %v2494 = vand.u32 %v2493, 4294901760
    %2495 = vmatpush1.msra.mxu0 %v2494
    %2496 = vmatprep.subr.mxu0 0.0
    %v2497 = vand.u32 %v1657, 4294901760
    %v2498 = vsub.f32 %v1657, %v2497
    %v2499 = vand.u32 %v2498, 4294901760
    %2500 = vmatpush1.msra.mxu0 %v2499
    %2501 = vmatprep.subr.mxu0 0.0
    %v2502 = vand.u32 %v1658, 4294901760
    %v2503 = vsub.f32 %v1658, %v2502
    %v2504 = vand.u32 %v2503, 4294901760
    %2505 = vmatpush1.msra.mxu0 %v2504
    %2506 = vmatprep.subr.mxu0 0.0
    %v2507 = vand.u32 %v1659, 4294901760
    %v2508 = vsub.f32 %v1659, %v2507
    %v2509 = vand.u32 %v2508, 4294901760
    %2510 = vmatpush1.msra.mxu0 %v2509
    %2511 = vmatprep.subr.mxu0 0.0
    %v2512 = vand.u32 %v1660, 4294901760
    %v2513 = vsub.f32 %v1660, %v2512
    %v2514 = vand.u32 %v2513, 4294901760
    %2515 = vmatpush1.msra.mxu0 %v2514
    %2516 = vmatprep.subr.mxu0 0.0
    %v2517 = vand.u32 %v1661, 4294901760
    %v2518 = vsub.f32 %v1661, %v2517
    %v2519 = vand.u32 %v2518, 4294901760
    %2520 = vmatpush1.msra.mxu0 %v2519
    %2521 = vmatprep.subr.mxu0 0.0
    %v2522 = vand.u32 %v1662, 4294901760
    %v2523 = vsub.f32 %v1662, %v2522
    %v2524 = vand.u32 %v2523, 4294901760
    %2525 = vmatpush1.msra.mxu0 %v2524
    %2526 = vmatprep.subr.mxu0 0.0
    %v2527 = vand.u32 %v1663, 4294901760
    %v2528 = vsub.f32 %v1663, %v2527
    %v2529 = vand.u32 %v2528, 4294901760
    %2530 = vmatpush1.msra.mxu0 %v2529
    %2531 = vmatprep.subr.mxu0 0.0
    %v2532 = vand.u32 %v1664, 4294901760
    %v2533 = vsub.f32 %v1664, %v2532
    %v2534 = vand.u32 %v2533, 4294901760
    %2535 = vmatpush1.msra.mxu0 %v2534
    %2536 = vmatprep.subr.mxu0 0.0
    %v2537 = vand.u32 %v1665, 4294901760
    %v2538 = vsub.f32 %v1665, %v2537
    %v2539 = vand.u32 %v2538, 4294901760
    %2540 = vmatpush1.msra.mxu0 %v2539
    %2541 = vmatprep.subr.mxu0 0.0
    %v2542 = vand.u32 %v1666, 4294901760
    %v2543 = vsub.f32 %v1666, %v2542
    %v2544 = vand.u32 %v2543, 4294901760
    %2545 = vmatpush1.msra.mxu0 %v2544
    %2546 = vmatprep.subr.mxu0 0.0
    %v2547 = vand.u32 %v1667, 4294901760
    %v2548 = vsub.f32 %v1667, %v2547
    %v2549 = vand.u32 %v2548, 4294901760
    %2550 = vmatpush1.msra.mxu0 %v2549
    %v2551 = vand.u32 %v1629, 4294901760
    %2552 = vmatprep.mubr.f32.mxu0 %v2551
    %v2553 = vand.u32 %v1628, 4294901760
    %2554 = vmatmul.mubr.f32.gmra.mrb[0].mxu0 %v2553
    %v2555 = vpop.f32.mrb[0].mxu0
    %v2556 = vadd.f32 %v2355, %v2555
    %v2557 = vpop.f32.mrb[0].mxu0
    %v2558 = vand.u32 %v1631, 4294901760
    %2559 = vmatprep.mubr.f32.mxu0 %v2558
    %v2560 = vand.u32 %v1630, 4294901760
    %2561 = vmatmul.mubr.f32.gmra.mrb[0].mxu0 %v2560
    %v2562 = vpop.f32.mrb[0].mxu0
    %v2563 = vadd.f32 %v2366, %v2562
    %v2564 = vpop.f32.mrb[0].mxu0
    %v2565 = vand.u32 %v1633, 4294901760
    %2566 = vmatprep.mubr.f32.mxu0 %v2565
    %v2567 = vand.u32 %v1632, 4294901760
    %2568 = vmatmul.mubr.f32.gmra.mrb[0].mxu0 %v2567
    %v2569 = vpop.f32.mrb[0].mxu0
    %v2570 = vadd.f32 %v2377, %v2569
    %v2571 = vpop.f32.mrb[0].mxu0
    %v2572 = vand.u32 %v1635, 4294901760
    %2573 = vmatprep.mubr.f32.mxu0 %v2572
    %v2574 = vand.u32 %v1634, 4294901760
    %2575 = vmatmul.mubr.f32.gmra.mrb[0].mxu0 %v2574
    %v2576 = vpop.f32.mrb[0].mxu0
    %v2577 = vadd.f32 %v2388, %v2576
    %v2578 = vpop.f32.mrb[0].mxu0
    %2579 = vdwg.mxu0
    %2580 = vmatprep.subr.mxu0 0.0
    %v2581 = vand.u32 %v1636, 4294901760
    %2582 = vmatpush1.msra.mxu0 %v2581
    %2583 = vmatprep.subr.mxu0 0.0
    %v2584 = vand.u32 %v1637, 4294901760
    %2585 = vmatpush1.msra.mxu0 %v2584
    %2586 = vmatprep.subr.mxu0 0.0
    %v2587 = vand.u32 %v1638, 4294901760
    %2588 = vmatpush1.msra.mxu0 %v2587
    %2589 = vmatprep.subr.mxu0 0.0
    %v2590 = vand.u32 %v1639, 4294901760
    %2591 = vmatpush1.msra.mxu0 %v2590
    %2592 = vmatprep.subr.mxu0 0.0
    %v2593 = vand.u32 %v1640, 4294901760
    %2594 = vmatpush1.msra.mxu0 %v2593
    %2595 = vmatprep.subr.mxu0 0.0
    %v2596 = vand.u32 %v1641, 4294901760
    %2597 = vmatpush1.msra.mxu0 %v2596
    %2598 = vmatprep.subr.mxu0 0.0
    %v2599 = vand.u32 %v1642, 4294901760
    %2600 = vmatpush1.msra.mxu0 %v2599
    %2601 = vmatprep.subr.mxu0 0.0
    %v2602 = vand.u32 %v1643, 4294901760
    %2603 = vmatpush1.msra.mxu0 %v2602
    %2604 = vmatprep.subr.mxu0 0.0
    %v2605 = vand.u32 %v1644, 4294901760
    %2606 = vmatpush1.msra.mxu0 %v2605
    %2607 = vmatprep.subr.mxu0 0.0
    %v2608 = vand.u32 %v1645, 4294901760
    %2609 = vmatpush1.msra.mxu0 %v2608
    %2610 = vmatprep.subr.mxu0 0.0
    %v2611 = vand.u32 %v1646, 4294901760
    %2612 = vmatpush1.msra.mxu0 %v2611
    %2613 = vmatprep.subr.mxu0 0.0
    %v2614 = vand.u32 %v1647, 4294901760
    %2615 = vmatpush1.msra.mxu0 %v2614
    %2616 = vmatprep.subr.mxu0 0.0
    %v2617 = vand.u32 %v1648, 4294901760
    %2618 = vmatpush1.msra.mxu0 %v2617
    %2619 = vmatprep.subr.mxu0 0.0
    %v2620 = vand.u32 %v1649, 4294901760
    %2621 = vmatpush1.msra.mxu0 %v2620
    %2622 = vmatprep.subr.mxu0 0.0
    %v2623 = vand.u32 %v1650, 4294901760
    %2624 = vmatpush1.msra.mxu0 %v2623
    %2625 = vmatprep.subr.mxu0 0.0
    %v2626 = vand.u32 %v1651, 4294901760
    %2627 = vmatpush1.msra.mxu0 %v2626
    %2628 = vmatprep.subr.mxu0 0.0
    %v2629 = vand.u32 %v1652, 4294901760
    %2630 = vmatpush1.msra.mxu0 %v2629
    %2631 = vmatprep.subr.mxu0 0.0
    %v2632 = vand.u32 %v1653, 4294901760
    %2633 = vmatpush1.msra.mxu0 %v2632
    %2634 = vmatprep.subr.mxu0 0.0
    %v2635 = vand.u32 %v1654, 4294901760
    %2636 = vmatpush1.msra.mxu0 %v2635
    %2637 = vmatprep.subr.mxu0 0.0
    %v2638 = vand.u32 %v1655, 4294901760
    %2639 = vmatpush1.msra.mxu0 %v2638
    %2640 = vmatprep.subr.mxu0 0.0
    %v2641 = vand.u32 %v1656, 4294901760
    %2642 = vmatpush1.msra.mxu0 %v2641
    %2643 = vmatprep.subr.mxu0 0.0
    %v2644 = vand.u32 %v1657, 4294901760
    %2645 = vmatpush1.msra.mxu0 %v2644
    %2646 = vmatprep.subr.mxu0 0.0
    %v2647 = vand.u32 %v1658, 4294901760
    %2648 = vmatpush1.msra.mxu0 %v2647
    %2649 = vmatprep.subr.mxu0 0.0
    %v2650 = vand.u32 %v1659, 4294901760
    %2651 = vmatpush1.msra.mxu0 %v2650
    %2652 = vmatprep.subr.mxu0 0.0
    %v2653 = vand.u32 %v1660, 4294901760
    %2654 = vmatpush1.msra.mxu0 %v2653
    %2655 = vmatprep.subr.mxu0 0.0
    %v2656 = vand.u32 %v1661, 4294901760
    %2657 = vmatpush1.msra.mxu0 %v2656
    %2658 = vmatprep.subr.mxu0 0.0
    %v2659 = vand.u32 %v1662, 4294901760
    %2660 = vmatpush1.msra.mxu0 %v2659
    %2661 = vmatprep.subr.mxu0 0.0
    %v2662 = vand.u32 %v1663, 4294901760
    %2663 = vmatpush1.msra.mxu0 %v2662
    %2664 = vmatprep.subr.mxu0 0.0
    %v2665 = vand.u32 %v1664, 4294901760
    %2666 = vmatpush1.msra.mxu0 %v2665
    %2667 = vmatprep.subr.mxu0 0.0
    %v2668 = vand.u32 %v1665, 4294901760
    %2669 = vmatpush1.msra.mxu0 %v2668
    %2670 = vmatprep.subr.mxu0 0.0
    %v2671 = vand.u32 %v1666, 4294901760
    %2672 = vmatpush1.msra.mxu0 %v2671
    %2673 = vmatprep.subr.mxu0 0.0
    %v2674 = vand.u32 %v1667, 4294901760
    %2675 = vmatpush1.msra.mxu0 %v2674
    %v2676 = vand.u32 %v1629, 4294901760
    %2677 = vmatprep.mubr.f32.mxu0 %v2676
    %v2678 = vand.u32 %v1628, 4294901760
    %2679 = vmatmul.mubr.f32.gmra.mrb[0].mxu0 %v2678
    %v2680 = vpop.f32.mrb[0].mxu0
    %v2681 = vadd.f32 %v2556, %v2680
    %v2682 = vpop.f32.mrb[0].mxu0
    %v2683 = vand.u32 %v1631, 4294901760
    %2684 = vmatprep.mubr.f32.mxu0 %v2683
    %v2685 = vand.u32 %v1630, 4294901760
    %2686 = vmatmul.mubr.f32.gmra.mrb[0].mxu0 %v2685
    %v2687 = vpop.f32.mrb[0].mxu0
    %v2688 = vadd.f32 %v2563, %v2687
    %v2689 = vpop.f32.mrb[0].mxu0
    %v2690 = vand.u32 %v1633, 4294901760
    %2691 = vmatprep.mubr.f32.mxu0 %v2690
    %v2692 = vand.u32 %v1632, 4294901760
    %2693 = vmatmul.mubr.f32.gmra.mrb[0].mxu0 %v2692
    %v2694 = vpop.f32.mrb[0].mxu0
    %v2695 = vadd.f32 %v2570, %v2694
    %v2696 = vpop.f32.mrb[0].mxu0
    %v2697 = vand.u32 %v1635, 4294901760
    %2698 = vmatprep.mubr.f32.mxu0 %v2697
    %v2699 = vand.u32 %v1634, 4294901760
    %2700 = vmatmul.mubr.f32.gmra.mrb[0].mxu0 %v2699
    %v2701 = vpop.f32.mrb[0].mxu0
    %v2702 = vadd.f32 %v2577, %v2701
    %v2703 = vpop.f32.mrb[0].mxu0
    %2704 = vdwg.mxu0
    %v2705 = vadd.f32 %v2681, %v92
    %v2706 = vadd.f32 %v2688, %v93
    %v2707 = vadd.f32 %v2695, %v94
    %v2708 = vadd.f32 %v2702, %v95
    %2709 = vst [vmem:[#allocation10] sm:$0xff] %v2705
    %2710 = vst [vmem:[#allocation10 + $0x8] sm:$0xff] %v2706
    %2711 = vst [vmem:[#allocation10 + $0x10] sm:$0xff] %v2707
    %2712 = vst [vmem:[#allocation10 + $0x18] sm:$0xff] %v2708
    // Predicated region
    $region62: #{tpu_custom_call.1} parent=1 // pred_check
      _
    $region63: #{tpu_custom_call.1} parent=1 // pred_check_branch
      %2714 = sbr.rel (0) target = $region65
    $region64: #{tpu_custom_call.1} parent=1 // pred_region
      %s2716 = ssub.s32 512, 512
      %2717 = vsyncadd [#allocation4], %s2716
      %s2718 = sshll.u32 [#allocation10], 4
      %s2719 = int_to_ptr.vmem [resolvable:$true] %s2718
      %2724 = dma.vmem_to_hbm [thread:$0]  %s2719, 512, %s11, [#allocation4], 128, 128, 8
    $region65: #{tpu_custom_call.1} parent=1 // pred_fallthru
      _
    // Predicated region
    $region66: #{tpu_custom_call.1} parent=1 // pred_check
      _
    $region67: #{tpu_custom_call.1} parent=1 // pred_check_branch
      %2726 = sbr.rel (0) target = $region69
    $region68: #{tpu_custom_call.1} parent=1 // pred_region
      %2727 = dma.done [#allocation4], 512
    $region69: #{tpu_custom_call.1} parent=1 // pred_fallthru
      _
    %2728 = vsyncpa [#allocation3], 1
    %2729 = vsyncpa [#allocation6], 1
    %2730 = vsyncpa [#allocation9], 1
    %2731 = vsyncpa [#allocation4], 1

</llo_original>
